<compile_context>
chip_gen: v5e
topology: v5e:2x2
jax: 0.10.0
libtpu: 0.0.40
codegen_flags: <defaults>
</compile_context>

<pallas_src>
import functools
import math

import numpy as np

import jax
import jax.numpy as jnp
from jax import lax
from jax.experimental import pallas as pl
from jax.experimental.pallas import tpu as pltpu


# ---------------------------------------------------------------------------
# Fused TextConditioner kernel (one invocation per batch row)
# ---------------------------------------------------------------------------
def _text_conditioner_kernel(
    scal_ref,                                          # SMEM (3,): [film_scale, 1/temp, blend]
    x_ref, g_ref, seq_ref, kvalid_ref, kbias_ref, qvalid_ref,
    cos_ref, sin_ref,                                  # RoPE tables (T, E//2)
    wg_ref, bg_ref, wb_ref, bb_ref,                    # FiLM gamma / beta linears
    wm_ref, bm_ref,                                    # mel_to_attn
    wq_ref, bq_ref, wk_ref, bk_ref, wv_ref, bv_ref,    # MHA in-proj (split)
    wo_ref, bo_ref,                                    # MHA out-proj
    ln1g_ref, ln1b_ref,
    w1_ref, b1_ref, w2_ref, b2_ref,                    # FFN
    ln2g_ref, ln2b_ref,
    wa_ref, ba_ref,                                    # attn_to_mel
    o_ref,
    *, num_heads, eps=1e-5):
    f32 = jnp.float32
    film_scale = scal_ref[0]
    inv_temp = scal_ref[1]
    blend = scal_ref[2]

    def nt(a, b):
        # a @ b.T : contraction over the last axis of both operands (MXU-friendly,
        # lets every weight stay in its PyTorch (out, in) layout).
        return lax.dot_general(a, b, (((1,), (1,)), ((), ())),
                               preferred_element_type=f32)

    def layer_norm(h, g, b):
        mu = jnp.mean(h, axis=-1, keepdims=True)
        cc = h - mu
        var = jnp.mean(cc * cc, axis=-1, keepdims=True)
        return cc * lax.rsqrt(var + eps) * g + b

    x_ct = x_ref[0]                                    # (C, T)  original mel (NCT layout)
    T = x_ct.shape[1]

    # ---- NCT -> NTC layout flip on the MXU (identity @ x^T) --------------------
    row_i = lax.broadcasted_iota(jnp.int32, (T, T), 0)
    col_i = lax.broadcasted_iota(jnp.int32, (T, T), 1)
    eye_t = (row_i == col_i).astype(f32)
    x_tc = nt(eye_t, x_ct)                             # (T, C)

    # ---- FiLM global conditioning -----------------------------------------------
    g_row = g_ref[0]                                   # (1, G)
    gamma = nt(g_row, wg_ref[...]) + bg_ref[...]       # (1, C)
    beta = nt(g_row, wb_ref[...]) + bb_ref[...]        # (1, C)
    gamma = 300.0 * jnp.tanh(gamma / 300.0)
    beta = 300.0 * jnp.tanh(beta / 300.0)
    x_f = film_scale * (gamma * x_tc + beta)           # (T, C)

    # ---- mel_to_attn projection + RoPE + query padding mask ---------------------
    xa = nt(x_f, wm_ref[...]) + bm_ref[...]            # (T, E)
    E = xa.shape[-1]
    half = E // 2
    cos = cos_ref[...]                                 # (T, E//2)
    sin = sin_ref[...]
    h1 = xa[:, :half]
    h2 = xa[:, half:]
    xa = jnp.concatenate([h1 * cos - h2 * sin, h1 * sin + h2 * cos], axis=-1)
    qvalid = qvalid_ref[0]                             # (T, 1)  1.0 = valid frame
    xa = xa * qvalid

    # ---- multi-head cross-attention (eval: no dropout) --------------------------
    seq = seq_ref[0] * kvalid_ref[0]                   # (S, E)  masked_fill of padded tokens
    kbias = kbias_ref[0]                               # (1, S)  0 / -1e30 additive mask
    q = nt(xa * inv_temp, wq_ref[...]) + bq_ref[...]   # (T, E)
    k = nt(seq, wk_ref[...]) + bk_ref[...]             # (S, E)
    v = nt(seq, wv_ref[...]) + bv_ref[...]             # (S, E)

    head_dim = E // num_heads
    sm_scale = 1.0 / math.sqrt(head_dim)
    heads = []
    for hd in range(num_heads):                        # static unroll; num_heads is small
        sl = slice(hd * head_dim, (hd + 1) * head_dim)
        s = nt(q[:, sl], k[:, sl]) * sm_scale + kbias  # (T, S)
        m = jnp.max(s, axis=-1, keepdims=True)
        p = jnp.exp(s - m)
        w = p / jnp.sum(p, axis=-1, keepdims=True)
        heads.append(jnp.dot(w, v[:, sl], preferred_element_type=f32))  # (T, D)
    attn = jnp.concatenate(heads, axis=-1)             # (T, E)
    attn = nt(attn, wo_ref[...]) + bo_ref[...]
    attn = attn * qvalid                               # masked_fill(x_mask, 0)

    # ---- residual + LN -> FFN -> residual + LN ----------------------------------
    h_ln = layer_norm(xa + attn, ln1g_ref[...], ln1b_ref[...])
    hid = jnp.maximum(nt(h_ln, w1_ref[...]) + b1_ref[...], 0.0)         # (T, 4E)
    ffn = nt(hid, w2_ref[...]) + b2_ref[...]                            # (T, E)
    y = layer_norm(h_ln + ffn, ln2g_ref[...], ln2b_ref[...])            # (T, E)

    # ---- attn_to_mel back to channel-major via W_a @ y^T ------------------------
    mel_ct = nt(wa_ref[...], y) + ba_ref[...]          # (C, T)

    # ---- global RMS normalisation, blend, per-frame norm restoration ------------
    m2 = mel_ct * mel_ct
    tot = jnp.sum(jnp.sum(m2, axis=1, keepdims=True), axis=0, keepdims=True)   # (1, 1)
    g_norm = jnp.sqrt(tot * (1.0 / T))
    x_cond = mel_ct / jnp.maximum(g_norm, 1e-5)

    blended = (1.0 - blend) * x_ct + blend * x_cond
    old_n = jnp.sqrt(jnp.sum(x_ct * x_ct, axis=0, keepdims=True))       # (1, T)
    new_n = jnp.sqrt(jnp.sum(blended * blended, axis=0, keepdims=True))
    o_ref[0] = (blended * (old_n / jnp.maximum(new_n, 1e-8))).astype(o_ref.dtype)


# ---------------------------------------------------------------------------
# BlockSpec helpers
# ---------------------------------------------------------------------------
def _batch_block(shape):
    nd = len(shape)
    return pl.BlockSpec((1,) + tuple(shape[1:]), lambda b: (b,) + (0,) * (nd - 1))


def _full_block(shape):
    nd = len(shape)
    return pl.BlockSpec(tuple(shape), lambda b: (0,) * nd)


# ---------------------------------------------------------------------------
# Wrapper: TextConditioner.forward (eval) with text-encoder outputs as inputs
# ---------------------------------------------------------------------------
def text_conditioner_forward(params, x_mel, global_emb, seq_emb, text_key_mask,
                             q_pad_mask=None, *, num_heads, temperature):
    f32 = jnp.float32
    B, C, T = x_mel.shape
    S, E = seq_emb.shape[1], seq_emb.shape[2]
    assert E % num_heads == 0 and E % 2 == 0

    x_mel = x_mel.astype(f32)
    global_emb = global_emb.astype(f32)
    seq_emb = seq_emb.astype(f32)

    # Host-side prep touches only tiny tensors (masks / RoPE tables / scalars); the
    # (B, C, T) activation goes straight into the kernel untouched.
    km = text_key_mask.astype(f32)                               # (B, S)  1.0 = pad
    kvalid = (1.0 - km)[..., None]                               # (B, S, 1)
    kbias = (km * f32(-1e30))[:, None, :]                        # (B, 1, S)
    if q_pad_mask is None:
        qvalid = jnp.ones((B, T, 1), f32)
    else:
        qvalid = (1.0 - q_pad_mask.astype(f32))[..., None]       # (B, T, 1)
    g3 = global_emb.reshape(B, 1, -1)                            # (B, 1, G)

    # RoPE tables (same formula as TextConditioner._rope)
    half = E // 2
    inv_freq = 1.0 / (10000.0 ** (jnp.arange(half, dtype=f32) / half))
    ang = jnp.arange(T, dtype=f32)[:, None] * inv_freq[None, :]
    cos, sin = jnp.cos(ang), jnp.sin(ang)                        # (T, E//2)

    blend = jax.nn.sigmoid(jnp.asarray(params["text_impact_factor"], f32))
    scalars = jnp.stack([jnp.asarray(params["film"]["scale"], f32),
                         jnp.asarray(1.0 / temperature, f32),
                         blend])                                 # SMEM scalars

    fl = params["film"]
    ca = params["cross"]
    row = lambda a: jnp.asarray(a, f32).reshape(1, -1)

    # TODO(synk): when total_channels == cross_attention_dim the PyTorch module skips
    #             mel_to_attn / attn_to_mel; pass identity weights in that case.
    per_batch = [x_mel, g3, seq_emb, kvalid, kbias, qvalid]
    shared = [cos, sin,
              jnp.asarray(fl["wg"], f32), row(fl["bg"]),
              jnp.asarray(fl["wb"], f32), row(fl["bb"]),
              jnp.asarray(params["mel_to_attn"]["w"], f32), row(params["mel_to_attn"]["b"]),
              jnp.asarray(ca["wq"], f32), row(ca["bq"]),
              jnp.asarray(ca["wk"], f32), row(ca["bk"]),
              jnp.asarray(ca["wv"], f32), row(ca["bv"]),
              jnp.asarray(ca["wo"], f32), row(ca["bo"]),
              row(ca["ln1_g"]), row(ca["ln1_b"]),
              jnp.asarray(ca["w1"], f32), row(ca["b1"]),
              jnp.asarray(ca["w2"], f32), row(ca["b2"]),
              row(ca["ln2_g"]), row(ca["ln2_b"]),
              jnp.asarray(params["attn_to_mel"]["w"], f32),
              jnp.asarray(params["attn_to_mel"]["b"], f32).reshape(-1, 1)]

    in_specs = [pl.BlockSpec(memory_space=pltpu.MemorySpace.SMEM)]
    in_specs += [_batch_block(a.shape) for a in per_batch]
    in_specs += [_full_block(a.shape) for a in shared]

    out = pl.pallas_call(
        functools.partial(_text_conditioner_kernel, num_heads=num_heads),
        out_shape=jax.ShapeDtypeStruct((B, C, T), f32),
        grid=(B,),
        in_specs=in_specs,
        out_specs=pl.BlockSpec((1, C, T), lambda b: (b, 0, 0)),
        compiler_params=pltpu.CompilerParams(dimension_semantics=("parallel",)),
    )(scalars, *per_batch, *shared)

    # Cheap diagnostics mirroring a subset of the PyTorch text_metrics (host prints).
    text_metrics = {
        "blend_factor": blend,
        "mel_features_before": jnp.mean(jnp.abs(x_mel)),
        "mel_features_after": jnp.mean(jnp.abs(out)),
        "feature_difference": jnp.mean(jnp.abs(out - x_mel)),
    }
    # TODO(synk): attention-focus / FiLM-range metrics would require exporting the
    #             attention map from the kernel; omitted to keep diagnostics off the
    #             hot path.
    return out, text_metrics, global_emb


# ---------------------------------------------------------------------------
# Parameter init (PyTorch (out, in) layouts)
# ---------------------------------------------------------------------------
def init_text_conditioner_params(key, *, total_channels, cross_attention_dim,
                                 film_global_dim, text_impact_factor=0.3,
                                 film_init_scale=0.05):
    C, E, G = total_channels, cross_attention_dim, film_global_dim
    ks = iter(jax.random.split(key, 16))

    def lin(k, out_dim, in_dim):
        lim = 1.0 / math.sqrt(in_dim)
        return jax.random.uniform(k, (out_dim, in_dim), jnp.float32, -lim, lim)

    def vec(k, dim, scale=0.02):
        return scale * jax.random.normal(k, (dim,), jnp.float32)

    return {
        "film": {"wg": lin(next(ks), C, G), "bg": vec(next(ks), C),
                 "wb": lin(next(ks), C, G), "bb": vec(next(ks), C),
                 "scale": jnp.asarray(film_init_scale, jnp.float32)},
        "mel_to_attn": {"w": lin(next(ks), E, C), "b": jnp.zeros((E,), jnp.float32)},
        "cross": {
            "wq": lin(next(ks), E, E), "bq": jnp.zeros((E,), jnp.float32),
            "wk": lin(next(ks), E, E), "bk": jnp.zeros((E,), jnp.float32),
            "wv": lin(next(ks), E, E), "bv": jnp.zeros((E,), jnp.float32),
            "wo": lin(next(ks), E, E), "bo": jnp.zeros((E,), jnp.float32),
            "ln1_g": jnp.ones((E,), jnp.float32), "ln1_b": jnp.zeros((E,), jnp.float32),
            "w1": lin(next(ks), 4 * E, E), "b1": vec(next(ks), 4 * E),
            "w2": lin(next(ks), E, 4 * E), "b2": vec(next(ks), E),
            "ln2_g": jnp.ones((E,), jnp.float32), "ln2_b": jnp.zeros((E,), jnp.float32),
        },
        "attn_to_mel": {"w": lin(next(ks), C, E), "b": jnp.zeros((C,), jnp.float32)},
        "text_impact_factor": jnp.asarray(text_impact_factor, jnp.float32),
    }


# ---------------------------------------------------------------------------
# Pure-JAX reference (mirrors the PyTorch eval forward) for a sanity check
# ---------------------------------------------------------------------------
def _ref_forward(params, x_mel, global_emb, seq_emb, text_key_mask, q_pad_mask,
                 *, num_heads, temperature):
    f32 = jnp.float32
    B, C, T = x_mel.shape
    E = params["mel_to_attn"]["w"].shape[0]
    D = E // num_heads
    eps = 1e-5

    def ln(h, g, b):
        mu = jnp.mean(h, axis=-1, keepdims=True)
        cc = h - mu
        var = jnp.mean(cc * cc, axis=-1, keepdims=True)
        return cc * lax.rsqrt(var + eps) * g + b

    x_orig = x_mel
    seq = jnp.where(text_key_mask[..., None], 0.0, seq_emb)
    x_t = jnp.swapaxes(x_mel, 1, 2)                              # (B, T, C)

    fl = params["film"]
    gamma = global_emb @ fl["wg"].T + fl["bg"]
    beta = global_emb @ fl["wb"].T + fl["bb"]
    gamma = (300.0 * jnp.tanh(gamma / 300.0))[:, None, :]
    beta = (300.0 * jnp.tanh(beta / 300.0))[:, None, :]
    x_t = fl["scale"] * (gamma * x_t + beta)

    xa = x_t @ params["mel_to_attn"]["w"].T + params["mel_to_attn"]["b"]

    half = E // 2
    inv_freq = 1.0 / (10000.0 ** (jnp.arange(half, dtype=f32) / half))
    ang = jnp.arange(T, dtype=f32)[:, None] * inv_freq[None, :]
    cos, sin = jnp.cos(ang)[None], jnp.sin(ang)[None]
    h1, h2 = xa[..., :half], xa[..., half:]
    xa = jnp.concatenate([h1 * cos - h2 * sin, h1 * sin + h2 * cos], axis=-1)
    if q_pad_mask is not None:
        xa = jnp.where(q_pad_mask[..., None], 0.0, xa)

    ca = params["cross"]
    q = (xa * (1.0 / temperature)) @ ca["wq"].T + ca["bq"]
    k = seq @ ca["wk"].T + ca["bk"]
    v = seq @ ca["wv"].T + ca["bv"]
    S = seq.shape[1]
    split = lambda z, L: z.reshape(B, L, num_heads, D).transpose(0, 2, 1, 3)
    qh, kh, vh = split(q, T), split(k, S), split(v, S)
    logits = jnp.einsum("bhtd,bhsd->bhts", qh, kh) / math.sqrt(D)
    logits = logits + jnp.where(text_key_mask, f32(-1e30), f32(0.0))[:, None, None, :]
    w = jax.nn.softmax(logits, axis=-1)
    attn = jnp.einsum("bhts,bhsd->bhtd", w, vh).transpose(0, 2, 1, 3).reshape(B, T, E)
    attn = attn @ ca["wo"].T + ca["bo"]
    if q_pad_mask is not None:
        attn = jnp.where(q_pad_mask[..., None], 0.0, attn)

    h = ln(xa + attn, ca["ln1_g"], ca["ln1_b"])
    ffn = jnp.maximum(h @ ca["w1"].T + ca["b1"], 0.0) @ ca["w2"].T + ca["b2"]
    y = ln(h + ffn, ca["ln2_g"], ca["ln2_b"])

    mel_t = y @ params["attn_to_mel"]["w"].T + params["attn_to_mel"]["b"]
    mel_ct = jnp.swapaxes(mel_t, 1, 2)                           # (B, C, T)
    norm = jnp.sqrt(jnp.mean(jnp.sum(mel_ct ** 2, axis=-2, keepdims=True),
                             axis=-1, keepdims=True))
    x_cond = mel_ct / jnp.maximum(norm, 1e-5)
    bf = jax.nn.sigmoid(params["text_impact_factor"])
    xm = (1.0 - bf) * x_orig + bf * x_cond
    new_n = jnp.sqrt(jnp.sum(xm ** 2, axis=1, keepdims=True))
    old_n = jnp.sqrt(jnp.sum(x_orig ** 2, axis=1, keepdims=True))
    return xm * (old_n / jnp.maximum(new_n, 1e-8))


# ---------------------------------------------------------------------------
if __name__ == "__main__":
    B, C, T = 2, 32, 16          # batch, total_channels (mel feature channels), mel frames
    E, H = 64, 4                 # cross_attention_dim, num_heads
    G, S = 16, 8                 # film_global_dim, text sequence length
    TEMPERATURE = 0.6

    key = jax.random.PRNGKey(0)
    kp, kx, kg, kseq = jax.random.split(key, 4)
    params = init_text_conditioner_params(kp, total_channels=C, cross_attention_dim=E,
                                          film_global_dim=G)
    x_mel = jax.random.normal(kx, (B, C, T), jnp.float32)
    global_emb = jax.random.normal(kg, (B, G), jnp.float32)
    seq_emb = jax.random.normal(kseq, (B, S, E), jnp.float32)
    text_key_mask = jnp.zeros((B, S), bool).at[1, S - 2:].set(True)   # batch 1: 2 pad tokens
    q_pad_mask = jnp.zeros((B, T), bool).at[0, T - 3:].set(True)      # batch 0: 3 pad frames

    fwd = jax.jit(functools.partial(text_conditioner_forward,
                                    num_heads=H, temperature=TEMPERATURE))
    out, metrics, g_out = fwd(params, x_mel, global_emb, seq_emb,
                              text_key_mask, q_pad_mask)
    jax.block_until_ready(out)

    # numerical sanity check vs a pure-JAX reference (loose tol: MXU default f32 prec.)
    ref = _ref_forward(params, x_mel, global_emb, seq_emb, text_key_mask, q_pad_mask,
                       num_heads=H, temperature=TEMPERATURE)
    np.testing.assert_allclose(np.asarray(out), np.asarray(ref), rtol=5e-2, atol=5e-2)

    assert out.shape == (B, C, T)
    print("KERNEL_OK")
</pallas_src>

<mosaic_0001>
module attributes {stable_mosaic.version = 11 : i64} {
  func.func @_text_conditioner_kernel(%arg0: i32, %arg1: memref<3xf32, #tpu.memory_space<smem>>, %arg2: memref<1x32x16xf32, #tpu.memory_space<vmem>>, %arg3: memref<1x1x16xf32, #tpu.memory_space<vmem>>, %arg4: memref<1x8x64xf32, #tpu.memory_space<vmem>>, %arg5: memref<1x8x1xf32, #tpu.memory_space<vmem>>, %arg6: memref<1x1x8xf32, #tpu.memory_space<vmem>>, %arg7: memref<1x16x1xf32, #tpu.memory_space<vmem>>, %arg8: memref<16x32xf32, #tpu.memory_space<vmem>>, %arg9: memref<16x32xf32, #tpu.memory_space<vmem>>, %arg10: memref<32x16xf32, #tpu.memory_space<vmem>>, %arg11: memref<1x32xf32, #tpu.memory_space<vmem>>, %arg12: memref<32x16xf32, #tpu.memory_space<vmem>>, %arg13: memref<1x32xf32, #tpu.memory_space<vmem>>, %arg14: memref<64x32xf32, #tpu.memory_space<vmem>>, %arg15: memref<1x64xf32, #tpu.memory_space<vmem>>, %arg16: memref<64x64xf32, #tpu.memory_space<vmem>>, %arg17: memref<1x64xf32, #tpu.memory_space<vmem>>, %arg18: memref<64x64xf32, #tpu.memory_space<vmem>>, %arg19: memref<1x64xf32, #tpu.memory_space<vmem>>, %arg20: memref<64x64xf32, #tpu.memory_space<vmem>>, %arg21: memref<1x64xf32, #tpu.memory_space<vmem>>, %arg22: memref<64x64xf32, #tpu.memory_space<vmem>>, %arg23: memref<1x64xf32, #tpu.memory_space<vmem>>, %arg24: memref<1x64xf32, #tpu.memory_space<vmem>>, %arg25: memref<1x64xf32, #tpu.memory_space<vmem>>, %arg26: memref<256x64xf32, #tpu.memory_space<vmem>>, %arg27: memref<1x256xf32, #tpu.memory_space<vmem>>, %arg28: memref<64x256xf32, #tpu.memory_space<vmem>>, %arg29: memref<1x64xf32, #tpu.memory_space<vmem>>, %arg30: memref<1x64xf32, #tpu.memory_space<vmem>>, %arg31: memref<1x64xf32, #tpu.memory_space<vmem>>, %arg32: memref<32x64xf32, #tpu.memory_space<vmem>>, %arg33: memref<32x1xf32, #tpu.memory_space<vmem>>, %arg34: memref<1x32x16xf32, #tpu.memory_space<vmem>>) attributes {dimension_semantics = [#tpu.dimension_semantics<parallel>], iteration_bounds = array<i64: 2>, scalar_prefetch = 0 : i64, scratch_operands = 0 : i64, tpu.core_type = #tpu.core_type<tc>, window_params = [{transform_indices = @transform_0, window_bounds = array<i64: 3>}, {transform_indices = @transform_1, window_bounds = array<i64: 1, 32, 16>}, {transform_indices = @transform_2, window_bounds = array<i64: 1, 1, 16>}, {transform_indices = @transform_3, window_bounds = array<i64: 1, 8, 64>}, {transform_indices = @transform_4, window_bounds = array<i64: 1, 8, 1>}, {transform_indices = @transform_5, window_bounds = array<i64: 1, 1, 8>}, {transform_indices = @transform_6, window_bounds = array<i64: 1, 16, 1>}, {pipeline_mode = #tpu.pipeline_mode<synchronous>, transform_indices = @transform_7, window_bounds = array<i64: 16, 32>}, {pipeline_mode = #tpu.pipeline_mode<synchronous>, transform_indices = @transform_8, window_bounds = array<i64: 16, 32>}, {pipeline_mode = #tpu.pipeline_mode<synchronous>, transform_indices = @transform_9, window_bounds = array<i64: 32, 16>}, {pipeline_mode = #tpu.pipeline_mode<synchronous>, transform_indices = @transform_10, window_bounds = array<i64: 1, 32>}, {pipeline_mode = #tpu.pipeline_mode<synchronous>, transform_indices = @transform_11, window_bounds = array<i64: 32, 16>}, {pipeline_mode = #tpu.pipeline_mode<synchronous>, transform_indices = @transform_12, window_bounds = array<i64: 1, 32>}, {pipeline_mode = #tpu.pipeline_mode<synchronous>, transform_indices = @transform_13, window_bounds = array<i64: 64, 32>}, {pipeline_mode = #tpu.pipeline_mode<synchronous>, transform_indices = @transform_14, window_bounds = array<i64: 1, 64>}, {pipeline_mode = #tpu.pipeline_mode<synchronous>, transform_indices = @transform_15, window_bounds = array<i64: 64, 64>}, {pipeline_mode = #tpu.pipeline_mode<synchronous>, transform_indices = @transform_16, window_bounds = array<i64: 1, 64>}, {pipeline_mode = #tpu.pipeline_mode<synchronous>, transform_indices = @transform_17, window_bounds = array<i64: 64, 64>}, {pipeline_mode = #tpu.pipeline_mode<synchronous>, transform_indices = @transform_18, window_bounds = array<i64: 1, 64>}, {pipeline_mode = #tpu.pipeline_mode<synchronous>, transform_indices = @transform_19, window_bounds = array<i64: 64, 64>}, {pipeline_mode = #tpu.pipeline_mode<synchronous>, transform_indices = @transform_20, window_bounds = array<i64: 1, 64>}, {pipeline_mode = #tpu.pipeline_mode<synchronous>, transform_indices = @transform_21, window_bounds = array<i64: 64, 64>}, {pipeline_mode = #tpu.pipeline_mode<synchronous>, transform_indices = @transform_22, window_bounds = array<i64: 1, 64>}, {pipeline_mode = #tpu.pipeline_mode<synchronous>, transform_indices = @transform_23, window_bounds = array<i64: 1, 64>}, {pipeline_mode = #tpu.pipeline_mode<synchronous>, transform_indices = @transform_24, window_bounds = array<i64: 1, 64>}, {pipeline_mode = #tpu.pipeline_mode<synchronous>, transform_indices = @transform_25, window_bounds = array<i64: 256, 64>}, {pipeline_mode = #tpu.pipeline_mode<synchronous>, transform_indices = @transform_26, window_bounds = array<i64: 1, 256>}, {pipeline_mode = #tpu.pipeline_mode<synchronous>, transform_indices = @transform_27, window_bounds = array<i64: 64, 256>}, {pipeline_mode = #tpu.pipeline_mode<synchronous>, transform_indices = @transform_28, window_bounds = array<i64: 1, 64>}, {pipeline_mode = #tpu.pipeline_mode<synchronous>, transform_indices = @transform_29, window_bounds = array<i64: 1, 64>}, {pipeline_mode = #tpu.pipeline_mode<synchronous>, transform_indices = @transform_30, window_bounds = array<i64: 1, 64>}, {pipeline_mode = #tpu.pipeline_mode<synchronous>, transform_indices = @transform_31, window_bounds = array<i64: 32, 64>}, {pipeline_mode = #tpu.pipeline_mode<synchronous>, transform_indices = @transform_32, window_bounds = array<i64: 32, 1>}, {transform_indices = @transform_33, window_bounds = array<i64: 1, 32, 16>}]} {
    %c0 = arith.constant 0 : index
    %0 = memref.load %arg1[%c0] : memref<3xf32, #tpu.memory_space<smem>>
    %c1 = arith.constant 1 : index
    %1 = memref.load %arg1[%c1] : memref<3xf32, #tpu.memory_space<smem>>
    %c2 = arith.constant 2 : index
    %2 = memref.load %arg1[%c2] : memref<3xf32, #tpu.memory_space<smem>>
    %c0_0 = arith.constant 0 : index
    %c0_1 = arith.constant 0 : index
    %c0_2 = arith.constant 0 : index
    %3 = vector.load %arg2[%c0_0, %c0_1, %c0_2] : memref<1x32x16xf32, #tpu.memory_space<vmem>>, vector<1x32x16xf32>
    %4 = vector.shape_cast %3 : vector<1x32x16xf32> to vector<32x16xf32>
    %5 = tpu.iota {dimensions = array<i32: 0>} : vector<16x16xi32>
    %6 = tpu.iota {dimensions = array<i32: 1>} : vector<16x16xi32>
    %7 = arith.cmpi eq, %5, %6 : vector<16x16xi32>
    %8 = arith.extui %7 : vector<16x16xi1> to vector<16x16xi32>
    %9 = arith.sitofp %8 : vector<16x16xi32> to vector<16x16xf32>
    %cst = arith.constant dense<0.000000e+00> : vector<16x32xf32>
    %10 = tpu.matmul %9, %4, %cst {dimension_numbers = #tpu.dot_dimension_numbers<[1], [1], [0], [0], [0, 0, 1, 0], [], []>} : vector<16x16xf32>, vector<32x16xf32>, vector<16x32xf32> -> vector<16x32xf32>
    %c0_3 = arith.constant 0 : index
    %c0_4 = arith.constant 0 : index
    %c0_5 = arith.constant 0 : index
    %11 = vector.load %arg3[%c0_3, %c0_4, %c0_5] : memref<1x1x16xf32, #tpu.memory_space<vmem>>, vector<1x1x16xf32>
    %12 = vector.shape_cast %11 : vector<1x1x16xf32> to vector<1x16xf32>
    %c0_6 = arith.constant 0 : index
    %c0_7 = arith.constant 0 : index
    %13 = vector.load %arg10[%c0_6, %c0_7] : memref<32x16xf32, #tpu.memory_space<vmem>>, vector<32x16xf32>
    %cst_8 = arith.constant dense<0.000000e+00> : vector<1x32xf32>
    %14 = tpu.matmul %12, %13, %cst_8 {dimension_numbers = #tpu.dot_dimension_numbers<[1], [1], [0], [0], [0, 0, 1, 0], [], []>} : vector<1x16xf32>, vector<32x16xf32>, vector<1x32xf32> -> vector<1x32xf32>
    %c0_9 = arith.constant 0 : index
    %c0_10 = arith.constant 0 : index
    %15 = vector.load %arg11[%c0_9, %c0_10] : memref<1x32xf32, #tpu.memory_space<vmem>>, vector<1x32xf32>
    %16 = arith.addf %14, %15 : vector<1x32xf32>
    %c0_11 = arith.constant 0 : index
    %c0_12 = arith.constant 0 : index
    %17 = vector.load %arg12[%c0_11, %c0_12] : memref<32x16xf32, #tpu.memory_space<vmem>>, vector<32x16xf32>
    %cst_13 = arith.constant dense<0.000000e+00> : vector<1x32xf32>
    %18 = tpu.matmul %12, %17, %cst_13 {dimension_numbers = #tpu.dot_dimension_numbers<[1], [1], [0], [0], [0, 0, 1, 0], [], []>} : vector<1x16xf32>, vector<32x16xf32>, vector<1x32xf32> -> vector<1x32xf32>
    %c0_14 = arith.constant 0 : index
    %c0_15 = arith.constant 0 : index
    %19 = vector.load %arg13[%c0_14, %c0_15] : memref<1x32xf32, #tpu.memory_space<vmem>>, vector<1x32xf32>
    %20 = arith.addf %18, %19 : vector<1x32xf32>
    %cst_16 = arith.constant 3.000000e+02 : f32
    %21 = vector.broadcast %cst_16 : f32 to vector<1x32xf32>
    %22 = arith.divf %16, %21 : vector<1x32xf32>
    %23 = math.tanh %22 : vector<1x32xf32>
    %cst_17 = arith.constant 3.000000e+02 : f32
    %24 = vector.broadcast %cst_17 : f32 to vector<1x32xf32>
    %25 = arith.mulf %24, %23 : vector<1x32xf32>
    %cst_18 = arith.constant 3.000000e+02 : f32
    %26 = vector.broadcast %cst_18 : f32 to vector<1x32xf32>
    %27 = arith.divf %20, %26 : vector<1x32xf32>
    %28 = math.tanh %27 : vector<1x32xf32>
    %cst_19 = arith.constant 3.000000e+02 : f32
    %29 = vector.broadcast %cst_19 : f32 to vector<1x32xf32>
    %30 = arith.mulf %29, %28 : vector<1x32xf32>
    %31 = vector.broadcast %25 : vector<1x32xf32> to vector<16x32xf32>
    %32 = arith.mulf %31, %10 : vector<16x32xf32>
    %33 = vector.broadcast %30 : vector<1x32xf32> to vector<16x32xf32>
    %34 = arith.addf %32, %33 : vector<16x32xf32>
    %35 = vector.broadcast %0 : f32 to vector<16x32xf32>
    %36 = arith.mulf %35, %34 : vector<16x32xf32>
    %c0_20 = arith.constant 0 : index
    %c0_21 = arith.constant 0 : index
    %37 = vector.load %arg14[%c0_20, %c0_21] : memref<64x32xf32, #tpu.memory_space<vmem>>, vector<64x32xf32>
    %cst_22 = arith.constant dense<0.000000e+00> : vector<16x64xf32>
    %38 = tpu.matmul %36, %37, %cst_22 {dimension_numbers = #tpu.dot_dimension_numbers<[1], [1], [0], [0], [0, 0, 1, 0], [], []>} : vector<16x32xf32>, vector<64x32xf32>, vector<16x64xf32> -> vector<16x64xf32>
    %c0_23 = arith.constant 0 : index
    %c0_24 = arith.constant 0 : index
    %39 = vector.load %arg15[%c0_23, %c0_24] : memref<1x64xf32, #tpu.memory_space<vmem>>, vector<1x64xf32>
    %40 = vector.broadcast %39 : vector<1x64xf32> to vector<16x64xf32>
    %41 = arith.addf %38, %40 : vector<16x64xf32>
    %c0_25 = arith.constant 0 : index
    %c0_26 = arith.constant 0 : index
    %42 = vector.load %arg8[%c0_25, %c0_26] : memref<16x32xf32, #tpu.memory_space<vmem>>, vector<16x32xf32>
    %c0_27 = arith.constant 0 : index
    %c0_28 = arith.constant 0 : index
    %43 = vector.load %arg9[%c0_27, %c0_28] : memref<16x32xf32, #tpu.memory_space<vmem>>, vector<16x32xf32>
    %44 = vector.extract_strided_slice %41 {offsets = [0, 0], sizes = [16, 32], strides = [1, 1]} : vector<16x64xf32> to vector<16x32xf32>
    %45 = vector.extract_strided_slice %41 {offsets = [0, 32], sizes = [16, 32], strides = [1, 1]} : vector<16x64xf32> to vector<16x32xf32>
    %46 = arith.mulf %44, %42 : vector<16x32xf32>
    %47 = arith.mulf %45, %43 : vector<16x32xf32>
    %48 = arith.subf %46, %47 : vector<16x32xf32>
    %49 = arith.mulf %44, %43 : vector<16x32xf32>
    %50 = arith.mulf %45, %42 : vector<16x32xf32>
    %51 = arith.addf %49, %50 : vector<16x32xf32>
    %52 = tpu.concatenate %48, %51 in 1 : vector<16x32xf32>, vector<16x32xf32> -> vector<16x64xf32>
    %c0_29 = arith.constant 0 : index
    %c0_30 = arith.constant 0 : index
    %c0_31 = arith.constant 0 : index
    %53 = vector.load %arg7[%c0_29, %c0_30, %c0_31] : memref<1x16x1xf32, #tpu.memory_space<vmem>>, vector<1x16x1xf32>
    %54 = vector.shape_cast %53 : vector<1x16x1xf32> to vector<16x1xf32>
    %55 = vector.broadcast %54 : vector<16x1xf32> to vector<16x64xf32>
    %56 = arith.mulf %52, %55 : vector<16x64xf32>
    %c0_32 = arith.constant 0 : index
    %c0_33 = arith.constant 0 : index
    %c0_34 = arith.constant 0 : index
    %57 = vector.load %arg4[%c0_32, %c0_33, %c0_34] : memref<1x8x64xf32, #tpu.memory_space<vmem>>, vector<1x8x64xf32>
    %58 = vector.shape_cast %57 : vector<1x8x64xf32> to vector<8x64xf32>
    %c0_35 = arith.constant 0 : index
    %c0_36 = arith.constant 0 : index
    %c0_37 = arith.constant 0 : index
    %59 = vector.load %arg5[%c0_35, %c0_36, %c0_37] : memref<1x8x1xf32, #tpu.memory_space<vmem>>, vector<1x8x1xf32>
    %60 = vector.shape_cast %59 : vector<1x8x1xf32> to vector<8x1xf32>
    %61 = vector.broadcast %60 : vector<8x1xf32> to vector<8x64xf32>
    %62 = arith.mulf %58, %61 : vector<8x64xf32>
    %c0_38 = arith.constant 0 : index
    %c0_39 = arith.constant 0 : index
    %c0_40 = arith.constant 0 : index
    %63 = vector.load %arg6[%c0_38, %c0_39, %c0_40] : memref<1x1x8xf32, #tpu.memory_space<vmem>>, vector<1x1x8xf32>
    %64 = vector.shape_cast %63 : vector<1x1x8xf32> to vector<1x8xf32>
    %65 = vector.broadcast %1 : f32 to vector<16x64xf32>
    %66 = arith.mulf %56, %65 : vector<16x64xf32>
    %c0_41 = arith.constant 0 : index
    %c0_42 = arith.constant 0 : index
    %67 = vector.load %arg16[%c0_41, %c0_42] : memref<64x64xf32, #tpu.memory_space<vmem>>, vector<64x64xf32>
    %cst_43 = arith.constant dense<0.000000e+00> : vector<16x64xf32>
    %68 = tpu.matmul %66, %67, %cst_43 {dimension_numbers = #tpu.dot_dimension_numbers<[1], [1], [0], [0], [0, 0, 1, 0], [], []>} : vector<16x64xf32>, vector<64x64xf32>, vector<16x64xf32> -> vector<16x64xf32>
    %c0_44 = arith.constant 0 : index
    %c0_45 = arith.constant 0 : index
    %69 = vector.load %arg17[%c0_44, %c0_45] : memref<1x64xf32, #tpu.memory_space<vmem>>, vector<1x64xf32>
    %70 = vector.broadcast %69 : vector<1x64xf32> to vector<16x64xf32>
    %71 = arith.addf %68, %70 : vector<16x64xf32>
    %c0_46 = arith.constant 0 : index
    %c0_47 = arith.constant 0 : index
    %72 = vector.load %arg18[%c0_46, %c0_47] : memref<64x64xf32, #tpu.memory_space<vmem>>, vector<64x64xf32>
    %cst_48 = arith.constant dense<0.000000e+00> : vector<8x64xf32>
    %73 = tpu.matmul %62, %72, %cst_48 {dimension_numbers = #tpu.dot_dimension_numbers<[1], [1], [0], [0], [0, 0, 1, 0], [], []>} : vector<8x64xf32>, vector<64x64xf32>, vector<8x64xf32> -> vector<8x64xf32>
    %c0_49 = arith.constant 0 : index
    %c0_50 = arith.constant 0 : index
    %74 = vector.load %arg19[%c0_49, %c0_50] : memref<1x64xf32, #tpu.memory_space<vmem>>, vector<1x64xf32>
    %75 = vector.broadcast %74 : vector<1x64xf32> to vector<8x64xf32>
    %76 = arith.addf %73, %75 : vector<8x64xf32>
    %c0_51 = arith.constant 0 : index
    %c0_52 = arith.constant 0 : index
    %77 = vector.load %arg20[%c0_51, %c0_52] : memref<64x64xf32, #tpu.memory_space<vmem>>, vector<64x64xf32>
    %cst_53 = arith.constant dense<0.000000e+00> : vector<8x64xf32>
    %78 = tpu.matmul %62, %77, %cst_53 {dimension_numbers = #tpu.dot_dimension_numbers<[1], [1], [0], [0], [0, 0, 1, 0], [], []>} : vector<8x64xf32>, vector<64x64xf32>, vector<8x64xf32> -> vector<8x64xf32>
    %c0_54 = arith.constant 0 : index
    %c0_55 = arith.constant 0 : index
    %79 = vector.load %arg21[%c0_54, %c0_55] : memref<1x64xf32, #tpu.memory_space<vmem>>, vector<1x64xf32>
    %80 = vector.broadcast %79 : vector<1x64xf32> to vector<8x64xf32>
    %81 = arith.addf %78, %80 : vector<8x64xf32>
    %82 = vector.extract_strided_slice %71 {offsets = [0, 0], sizes = [16, 16], strides = [1, 1]} : vector<16x64xf32> to vector<16x16xf32>
    %83 = vector.extract_strided_slice %76 {offsets = [0, 0], sizes = [8, 16], strides = [1, 1]} : vector<8x64xf32> to vector<8x16xf32>
    %cst_56 = arith.constant dense<0.000000e+00> : vector<16x8xf32>
    %84 = tpu.matmul %82, %83, %cst_56 {dimension_numbers = #tpu.dot_dimension_numbers<[1], [1], [0], [0], [0, 0, 1, 0], [], []>} : vector<16x16xf32>, vector<8x16xf32>, vector<16x8xf32> -> vector<16x8xf32>
    %cst_57 = arith.constant 2.500000e-01 : f32
    %85 = vector.broadcast %cst_57 : f32 to vector<16x8xf32>
    %86 = arith.mulf %84, %85 : vector<16x8xf32>
    %87 = vector.broadcast %64 : vector<1x8xf32> to vector<16x8xf32>
    %88 = arith.addf %86, %87 : vector<16x8xf32>
    %cst_58 = arith.constant dense<0xFF800000> : vector<16xf32>
    %89 = vector.multi_reduction <maximumf>, %88, %cst_58 [1] : vector<16x8xf32> to vector<16xf32>
    %90 = vector.shape_cast %89 : vector<16xf32> to vector<16x1xf32>
    %91 = vector.broadcast %90 : vector<16x1xf32> to vector<16x8xf32>
    %92 = arith.subf %88, %91 : vector<16x8xf32>
    %93 = math.exp %92 : vector<16x8xf32>
    %cst_59 = arith.constant dense<0.000000e+00> : vector<16xf32>
    %94 = vector.multi_reduction <add>, %93, %cst_59 [1] : vector<16x8xf32> to vector<16xf32>
    %95 = vector.shape_cast %94 : vector<16xf32> to vector<16x1xf32>
    %96 = vector.broadcast %95 : vector<16x1xf32> to vector<16x8xf32>
    %97 = arith.divf %93, %96 : vector<16x8xf32>
    %98 = vector.extract_strided_slice %81 {offsets = [0, 0], sizes = [8, 16], strides = [1, 1]} : vector<8x64xf32> to vector<8x16xf32>
    %cst_60 = arith.constant dense<0.000000e+00> : vector<16x16xf32>
    %99 = tpu.matmul %97, %98, %cst_60 {dimension_numbers = #tpu.dot_dimension_numbers<[1], [0], [0], [1], [0, 0, 1, 1], [], []>} : vector<16x8xf32>, vector<8x16xf32>, vector<16x16xf32> -> vector<16x16xf32>
    %100 = vector.extract_strided_slice %71 {offsets = [0, 16], sizes = [16, 16], strides = [1, 1]} : vector<16x64xf32> to vector<16x16xf32>
    %101 = vector.extract_strided_slice %76 {offsets = [0, 16], sizes = [8, 16], strides = [1, 1]} : vector<8x64xf32> to vector<8x16xf32>
    %cst_61 = arith.constant dense<0.000000e+00> : vector<16x8xf32>
    %102 = tpu.matmul %100, %101, %cst_61 {dimension_numbers = #tpu.dot_dimension_numbers<[1], [1], [0], [0], [0, 0, 1, 0], [], []>} : vector<16x16xf32>, vector<8x16xf32>, vector<16x8xf32> -> vector<16x8xf32>
    %cst_62 = arith.constant 2.500000e-01 : f32
    %103 = vector.broadcast %cst_62 : f32 to vector<16x8xf32>
    %104 = arith.mulf %102, %103 : vector<16x8xf32>
    %105 = vector.broadcast %64 : vector<1x8xf32> to vector<16x8xf32>
    %106 = arith.addf %104, %105 : vector<16x8xf32>
    %cst_63 = arith.constant dense<0xFF800000> : vector<16xf32>
    %107 = vector.multi_reduction <maximumf>, %106, %cst_63 [1] : vector<16x8xf32> to vector<16xf32>
    %108 = vector.shape_cast %107 : vector<16xf32> to vector<16x1xf32>
    %109 = vector.broadcast %108 : vector<16x1xf32> to vector<16x8xf32>
    %110 = arith.subf %106, %109 : vector<16x8xf32>
    %111 = math.exp %110 : vector<16x8xf32>
    %cst_64 = arith.constant dense<0.000000e+00> : vector<16xf32>
    %112 = vector.multi_reduction <add>, %111, %cst_64 [1] : vector<16x8xf32> to vector<16xf32>
    %113 = vector.shape_cast %112 : vector<16xf32> to vector<16x1xf32>
    %114 = vector.broadcast %113 : vector<16x1xf32> to vector<16x8xf32>
    %115 = arith.divf %111, %114 : vector<16x8xf32>
    %116 = vector.extract_strided_slice %81 {offsets = [0, 16], sizes = [8, 16], strides = [1, 1]} : vector<8x64xf32> to vector<8x16xf32>
    %cst_65 = arith.constant dense<0.000000e+00> : vector<16x16xf32>
    %117 = tpu.matmul %115, %116, %cst_65 {dimension_numbers = #tpu.dot_dimension_numbers<[1], [0], [0], [1], [0, 0, 1, 1], [], []>} : vector<16x8xf32>, vector<8x16xf32>, vector<16x16xf32> -> vector<16x16xf32>
    %118 = vector.extract_strided_slice %71 {offsets = [0, 32], sizes = [16, 16], strides = [1, 1]} : vector<16x64xf32> to vector<16x16xf32>
    %119 = vector.extract_strided_slice %76 {offsets = [0, 32], sizes = [8, 16], strides = [1, 1]} : vector<8x64xf32> to vector<8x16xf32>
    %cst_66 = arith.constant dense<0.000000e+00> : vector<16x8xf32>
    %120 = tpu.matmul %118, %119, %cst_66 {dimension_numbers = #tpu.dot_dimension_numbers<[1], [1], [0], [0], [0, 0, 1, 0], [], []>} : vector<16x16xf32>, vector<8x16xf32>, vector<16x8xf32> -> vector<16x8xf32>
    %cst_67 = arith.constant 2.500000e-01 : f32
    %121 = vector.broadcast %cst_67 : f32 to vector<16x8xf32>
    %122 = arith.mulf %120, %121 : vector<16x8xf32>
    %123 = vector.broadcast %64 : vector<1x8xf32> to vector<16x8xf32>
    %124 = arith.addf %122, %123 : vector<16x8xf32>
    %cst_68 = arith.constant dense<0xFF800000> : vector<16xf32>
    %125 = vector.multi_reduction <maximumf>, %124, %cst_68 [1] : vector<16x8xf32> to vector<16xf32>
    %126 = vector.shape_cast %125 : vector<16xf32> to vector<16x1xf32>
    %127 = vector.broadcast %126 : vector<16x1xf32> to vector<16x8xf32>
    %128 = arith.subf %124, %127 : vector<16x8xf32>
    %129 = math.exp %128 : vector<16x8xf32>
    %cst_69 = arith.constant dense<0.000000e+00> : vector<16xf32>
    %130 = vector.multi_reduction <add>, %129, %cst_69 [1] : vector<16x8xf32> to vector<16xf32>
    %131 = vector.shape_cast %130 : vector<16xf32> to vector<16x1xf32>
    %132 = vector.broadcast %131 : vector<16x1xf32> to vector<16x8xf32>
    %133 = arith.divf %129, %132 : vector<16x8xf32>
    %134 = vector.extract_strided_slice %81 {offsets = [0, 32], sizes = [8, 16], strides = [1, 1]} : vector<8x64xf32> to vector<8x16xf32>
    %cst_70 = arith.constant dense<0.000000e+00> : vector<16x16xf32>
    %135 = tpu.matmul %133, %134, %cst_70 {dimension_numbers = #tpu.dot_dimension_numbers<[1], [0], [0], [1], [0, 0, 1, 1], [], []>} : vector<16x8xf32>, vector<8x16xf32>, vector<16x16xf32> -> vector<16x16xf32>
    %136 = vector.extract_strided_slice %71 {offsets = [0, 48], sizes = [16, 16], strides = [1, 1]} : vector<16x64xf32> to vector<16x16xf32>
    %137 = vector.extract_strided_slice %76 {offsets = [0, 48], sizes = [8, 16], strides = [1, 1]} : vector<8x64xf32> to vector<8x16xf32>
    %cst_71 = arith.constant dense<0.000000e+00> : vector<16x8xf32>
    %138 = tpu.matmul %136, %137, %cst_71 {dimension_numbers = #tpu.dot_dimension_numbers<[1], [1], [0], [0], [0, 0, 1, 0], [], []>} : vector<16x16xf32>, vector<8x16xf32>, vector<16x8xf32> -> vector<16x8xf32>
    %cst_72 = arith.constant 2.500000e-01 : f32
    %139 = vector.broadcast %cst_72 : f32 to vector<16x8xf32>
    %140 = arith.mulf %138, %139 : vector<16x8xf32>
    %141 = vector.broadcast %64 : vector<1x8xf32> to vector<16x8xf32>
    %142 = arith.addf %140, %141 : vector<16x8xf32>
    %cst_73 = arith.constant dense<0xFF800000> : vector<16xf32>
    %143 = vector.multi_reduction <maximumf>, %142, %cst_73 [1] : vector<16x8xf32> to vector<16xf32>
    %144 = vector.shape_cast %143 : vector<16xf32> to vector<16x1xf32>
    %145 = vector.broadcast %144 : vector<16x1xf32> to vector<16x8xf32>
    %146 = arith.subf %142, %145 : vector<16x8xf32>
    %147 = math.exp %146 : vector<16x8xf32>
    %cst_74 = arith.constant dense<0.000000e+00> : vector<16xf32>
    %148 = vector.multi_reduction <add>, %147, %cst_74 [1] : vector<16x8xf32> to vector<16xf32>
    %149 = vector.shape_cast %148 : vector<16xf32> to vector<16x1xf32>
    %150 = vector.broadcast %149 : vector<16x1xf32> to vector<16x8xf32>
    %151 = arith.divf %147, %150 : vector<16x8xf32>
    %152 = vector.extract_strided_slice %81 {offsets = [0, 48], sizes = [8, 16], strides = [1, 1]} : vector<8x64xf32> to vector<8x16xf32>
    %cst_75 = arith.constant dense<0.000000e+00> : vector<16x16xf32>
    %153 = tpu.matmul %151, %152, %cst_75 {dimension_numbers = #tpu.dot_dimension_numbers<[1], [0], [0], [1], [0, 0, 1, 1], [], []>} : vector<16x8xf32>, vector<8x16xf32>, vector<16x16xf32> -> vector<16x16xf32>
    %154 = tpu.concatenate %99, %117, %135, %153 in 1 : vector<16x16xf32>, vector<16x16xf32>, vector<16x16xf32>, vector<16x16xf32> -> vector<16x64xf32>
    %c0_76 = arith.constant 0 : index
    %c0_77 = arith.constant 0 : index
    %155 = vector.load %arg22[%c0_76, %c0_77] : memref<64x64xf32, #tpu.memory_space<vmem>>, vector<64x64xf32>
    %cst_78 = arith.constant dense<0.000000e+00> : vector<16x64xf32>
    %156 = tpu.matmul %154, %155, %cst_78 {dimension_numbers = #tpu.dot_dimension_numbers<[1], [1], [0], [0], [0, 0, 1, 0], [], []>} : vector<16x64xf32>, vector<64x64xf32>, vector<16x64xf32> -> vector<16x64xf32>
    %c0_79 = arith.constant 0 : index
    %c0_80 = arith.constant 0 : index
    %157 = vector.load %arg23[%c0_79, %c0_80] : memref<1x64xf32, #tpu.memory_space<vmem>>, vector<1x64xf32>
    %158 = vector.broadcast %157 : vector<1x64xf32> to vector<16x64xf32>
    %159 = arith.addf %156, %158 : vector<16x64xf32>
    %160 = vector.broadcast %54 : vector<16x1xf32> to vector<16x64xf32>
    %161 = arith.mulf %159, %160 : vector<16x64xf32>
    %162 = arith.addf %56, %161 : vector<16x64xf32>
    %c0_81 = arith.constant 0 : index
    %c0_82 = arith.constant 0 : index
    %163 = vector.load %arg24[%c0_81, %c0_82] : memref<1x64xf32, #tpu.memory_space<vmem>>, vector<1x64xf32>
    %c0_83 = arith.constant 0 : index
    %c0_84 = arith.constant 0 : index
    %164 = vector.load %arg25[%c0_83, %c0_84] : memref<1x64xf32, #tpu.memory_space<vmem>>, vector<1x64xf32>
    %cst_85 = arith.constant dense<0.000000e+00> : vector<16xf32>
    %165 = vector.multi_reduction <add>, %162, %cst_85 [1] : vector<16x64xf32> to vector<16xf32>
    %166 = vector.shape_cast %165 : vector<16xf32> to vector<16x1xf32>
    %cst_86 = arith.constant 6.400000e+01 : f32
    %167 = vector.broadcast %cst_86 : f32 to vector<16x1xf32>
    %168 = arith.divf %166, %167 : vector<16x1xf32>
    %169 = vector.broadcast %168 : vector<16x1xf32> to vector<16x64xf32>
    %170 = arith.subf %162, %169 : vector<16x64xf32>
    %171 = arith.mulf %170, %170 : vector<16x64xf32>
    %cst_87 = arith.constant dense<0.000000e+00> : vector<16xf32>
    %172 = vector.multi_reduction <add>, %171, %cst_87 [1] : vector<16x64xf32> to vector<16xf32>
    %173 = vector.shape_cast %172 : vector<16xf32> to vector<16x1xf32>
    %cst_88 = arith.constant 6.400000e+01 : f32
    %174 = vector.broadcast %cst_88 : f32 to vector<16x1xf32>
    %175 = arith.divf %173, %174 : vector<16x1xf32>
    %cst_89 = arith.constant 9.99999974E-6 : f32
    %176 = vector.broadcast %cst_89 : f32 to vector<16x1xf32>
    %177 = arith.addf %175, %176 : vector<16x1xf32>
    %178 = math.rsqrt %177 : vector<16x1xf32>
    %179 = vector.broadcast %178 : vector<16x1xf32> to vector<16x64xf32>
    %180 = arith.mulf %170, %179 : vector<16x64xf32>
    %181 = vector.broadcast %163 : vector<1x64xf32> to vector<16x64xf32>
    %182 = arith.mulf %180, %181 : vector<16x64xf32>
    %183 = vector.broadcast %164 : vector<1x64xf32> to vector<16x64xf32>
    %184 = arith.addf %182, %183 : vector<16x64xf32>
    %c0_90 = arith.constant 0 : index
    %c0_91 = arith.constant 0 : index
    %185 = vector.load %arg26[%c0_90, %c0_91] : memref<256x64xf32, #tpu.memory_space<vmem>>, vector<256x64xf32>
    %cst_92 = arith.constant dense<0.000000e+00> : vector<16x256xf32>
    %186 = tpu.matmul %184, %185, %cst_92 {dimension_numbers = #tpu.dot_dimension_numbers<[1], [1], [0], [0], [0, 0, 1, 0], [], []>} : vector<16x64xf32>, vector<256x64xf32>, vector<16x256xf32> -> vector<16x256xf32>
    %c0_93 = arith.constant 0 : index
    %c0_94 = arith.constant 0 : index
    %187 = vector.load %arg27[%c0_93, %c0_94] : memref<1x256xf32, #tpu.memory_space<vmem>>, vector<1x256xf32>
    %188 = vector.broadcast %187 : vector<1x256xf32> to vector<16x256xf32>
    %189 = arith.addf %186, %188 : vector<16x256xf32>
    %cst_95 = arith.constant 0.000000e+00 : f32
    %190 = vector.broadcast %cst_95 : f32 to vector<16x256xf32>
    %191 = arith.maximumf %189, %190 : vector<16x256xf32>
    %c0_96 = arith.constant 0 : index
    %c0_97 = arith.constant 0 : index
    %192 = vector.load %arg28[%c0_96, %c0_97] : memref<64x256xf32, #tpu.memory_space<vmem>>, vector<64x256xf32>
    %cst_98 = arith.constant dense<0.000000e+00> : vector<16x64xf32>
    %193 = tpu.matmul %191, %192, %cst_98 {dimension_numbers = #tpu.dot_dimension_numbers<[1], [1], [0], [0], [0, 0, 1, 0], [], []>} : vector<16x256xf32>, vector<64x256xf32>, vector<16x64xf32> -> vector<16x64xf32>
    %c0_99 = arith.constant 0 : index
    %c0_100 = arith.constant 0 : index
    %194 = vector.load %arg29[%c0_99, %c0_100] : memref<1x64xf32, #tpu.memory_space<vmem>>, vector<1x64xf32>
    %195 = vector.broadcast %194 : vector<1x64xf32> to vector<16x64xf32>
    %196 = arith.addf %193, %195 : vector<16x64xf32>
    %197 = arith.addf %184, %196 : vector<16x64xf32>
    %c0_101 = arith.constant 0 : index
    %c0_102 = arith.constant 0 : index
    %198 = vector.load %arg30[%c0_101, %c0_102] : memref<1x64xf32, #tpu.memory_space<vmem>>, vector<1x64xf32>
    %c0_103 = arith.constant 0 : index
    %c0_104 = arith.constant 0 : index
    %199 = vector.load %arg31[%c0_103, %c0_104] : memref<1x64xf32, #tpu.memory_space<vmem>>, vector<1x64xf32>
    %cst_105 = arith.constant dense<0.000000e+00> : vector<16xf32>
    %200 = vector.multi_reduction <add>, %197, %cst_105 [1] : vector<16x64xf32> to vector<16xf32>
    %201 = vector.shape_cast %200 : vector<16xf32> to vector<16x1xf32>
    %cst_106 = arith.constant 6.400000e+01 : f32
    %202 = vector.broadcast %cst_106 : f32 to vector<16x1xf32>
    %203 = arith.divf %201, %202 : vector<16x1xf32>
    %204 = vector.broadcast %203 : vector<16x1xf32> to vector<16x64xf32>
    %205 = arith.subf %197, %204 : vector<16x64xf32>
    %206 = arith.mulf %205, %205 : vector<16x64xf32>
    %cst_107 = arith.constant dense<0.000000e+00> : vector<16xf32>
    %207 = vector.multi_reduction <add>, %206, %cst_107 [1] : vector<16x64xf32> to vector<16xf32>
    %208 = vector.shape_cast %207 : vector<16xf32> to vector<16x1xf32>
    %cst_108 = arith.constant 6.400000e+01 : f32
    %209 = vector.broadcast %cst_108 : f32 to vector<16x1xf32>
    %210 = arith.divf %208, %209 : vector<16x1xf32>
    %cst_109 = arith.constant 9.99999974E-6 : f32
    %211 = vector.broadcast %cst_109 : f32 to vector<16x1xf32>
    %212 = arith.addf %210, %211 : vector<16x1xf32>
    %213 = math.rsqrt %212 : vector<16x1xf32>
    %214 = vector.broadcast %213 : vector<16x1xf32> to vector<16x64xf32>
    %215 = arith.mulf %205, %214 : vector<16x64xf32>
    %216 = vector.broadcast %198 : vector<1x64xf32> to vector<16x64xf32>
    %217 = arith.mulf %215, %216 : vector<16x64xf32>
    %218 = vector.broadcast %199 : vector<1x64xf32> to vector<16x64xf32>
    %219 = arith.addf %217, %218 : vector<16x64xf32>
    %c0_110 = arith.constant 0 : index
    %c0_111 = arith.constant 0 : index
    %220 = vector.load %arg32[%c0_110, %c0_111] : memref<32x64xf32, #tpu.memory_space<vmem>>, vector<32x64xf32>
    %cst_112 = arith.constant dense<0.000000e+00> : vector<32x16xf32>
    %221 = tpu.matmul %220, %219, %cst_112 {dimension_numbers = #tpu.dot_dimension_numbers<[1], [1], [0], [0], [0, 0, 1, 0], [], []>} : vector<32x64xf32>, vector<16x64xf32>, vector<32x16xf32> -> vector<32x16xf32>
    %c0_113 = arith.constant 0 : index
    %c0_114 = arith.constant 0 : index
    %222 = vector.load %arg33[%c0_113, %c0_114] : memref<32x1xf32, #tpu.memory_space<vmem>>, vector<32x1xf32>
    %223 = vector.broadcast %222 : vector<32x1xf32> to vector<32x16xf32>
    %224 = arith.addf %221, %223 : vector<32x16xf32>
    %225 = arith.mulf %224, %224 : vector<32x16xf32>
    %cst_115 = arith.constant dense<0.000000e+00> : vector<32xf32>
    %226 = vector.multi_reduction <add>, %225, %cst_115 [1] : vector<32x16xf32> to vector<32xf32>
    %227 = vector.shape_cast %226 : vector<32xf32> to vector<32x1xf32>
    %cst_116 = arith.constant dense<0.000000e+00> : vector<1xf32>
    %228 = vector.multi_reduction <add>, %227, %cst_116 [0] : vector<32x1xf32> to vector<1xf32>
    %229 = vector.shape_cast %228 : vector<1xf32> to vector<1x1xf32>
    %cst_117 = arith.constant 6.250000e-02 : f32
    %230 = vector.broadcast %cst_117 : f32 to vector<1x1xf32>
    %231 = arith.mulf %229, %230 : vector<1x1xf32>
    %232 = math.sqrt %231 : vector<1x1xf32>
    %cst_118 = arith.constant 9.99999974E-6 : f32
    %233 = vector.broadcast %cst_118 : f32 to vector<1x1xf32>
    %234 = arith.maximumf %232, %233 : vector<1x1xf32>
    %235 = vector.broadcast %234 : vector<1x1xf32> to vector<32x16xf32>
    %236 = arith.divf %224, %235 : vector<32x16xf32>
    %cst_119 = arith.constant 1.000000e+00 : f32
    %237 = arith.subf %cst_119, %2 : f32
    %238 = vector.broadcast %237 : f32 to vector<32x16xf32>
    %239 = arith.mulf %238, %4 : vector<32x16xf32>
    %240 = vector.broadcast %2 : f32 to vector<32x16xf32>
    %241 = arith.mulf %240, %236 : vector<32x16xf32>
    %242 = arith.addf %239, %241 : vector<32x16xf32>
    %243 = arith.mulf %4, %4 : vector<32x16xf32>
    %cst_120 = arith.constant dense<0.000000e+00> : vector<16xf32>
    %244 = vector.multi_reduction <add>, %243, %cst_120 [0] : vector<32x16xf32> to vector<16xf32>
    %245 = vector.shape_cast %244 : vector<16xf32> to vector<1x16xf32>
    %246 = math.sqrt %245 : vector<1x16xf32>
    %247 = arith.mulf %242, %242 : vector<32x16xf32>
    %cst_121 = arith.constant dense<0.000000e+00> : vector<16xf32>
    %248 = vector.multi_reduction <add>, %247, %cst_121 [0] : vector<32x16xf32> to vector<16xf32>
    %249 = vector.shape_cast %248 : vector<16xf32> to vector<1x16xf32>
    %250 = math.sqrt %249 : vector<1x16xf32>
    %cst_122 = arith.constant 9.99999993E-9 : f32
    %251 = vector.broadcast %cst_122 : f32 to vector<1x16xf32>
    %252 = arith.maximumf %250, %251 : vector<1x16xf32>
    %253 = arith.divf %246, %252 : vector<1x16xf32>
    %254 = vector.broadcast %253 : vector<1x16xf32> to vector<32x16xf32>
    %255 = arith.mulf %242, %254 : vector<32x16xf32>
    %c0_123 = arith.constant 0 : index
    %c0_124 = arith.constant 0 : index
    %c0_125 = arith.constant 0 : index
    %256 = vector.load %arg34[%c0_123, %c0_124, %c0_125] : memref<1x32x16xf32, #tpu.memory_space<vmem>>, vector<1x32x16xf32>
    %257 = vector.shape_cast %256 : vector<1x32x16xf32> to vector<32x16xf32>
    %258 = vector.shape_cast %255 : vector<32x16xf32> to vector<1x32x16xf32>
    tpu.vector_store %arg34[%c0_123, %c0_124, %c0_125], %258 {strides = array<i32>} : memref<1x32x16xf32, #tpu.memory_space<vmem>>, vector<1x32x16xf32>,
    return
  }
  func.func @transform_0(%arg0: i32) -> i32 {
    %c0_i32 = arith.constant 0 : i32
    %c0_i32_0 = arith.constant 0 : i32
    return %c0_i32 : i32
  }
  func.func @transform_1(%arg0: i32) -> (i32, i32, i32) {
    %c0_i32 = arith.constant 0 : i32
    %c0_i32_0 = arith.constant 0 : i32
    %c0_i32_1 = arith.constant 0 : i32
    return %arg0, %c0_i32, %c0_i32_0 : i32, i32, i32
  }
  func.func @transform_2(%arg0: i32) -> (i32, i32, i32) {
    %c0_i32 = arith.constant 0 : i32
    %c0_i32_0 = arith.constant 0 : i32
    %c0_i32_1 = arith.constant 0 : i32
    return %arg0, %c0_i32, %c0_i32_0 : i32, i32, i32
  }
  func.func @transform_3(%arg0: i32) -> (i32, i32, i32) {
    %c0_i32 = arith.constant 0 : i32
    %c0_i32_0 = arith.constant 0 : i32
    %c0_i32_1 = arith.constant 0 : i32
    return %arg0, %c0_i32, %c0_i32_0 : i32, i32, i32
  }
  func.func @transform_4(%arg0: i32) -> (i32, i32, i32) {
    %c0_i32 = arith.constant 0 : i32
    %c0_i32_0 = arith.constant 0 : i32
    %c0_i32_1 = arith.constant 0 : i32
    return %arg0, %c0_i32, %c0_i32_0 : i32, i32, i32
  }
  func.func @transform_5(%arg0: i32) -> (i32, i32, i32) {
    %c0_i32 = arith.constant 0 : i32
    %c0_i32_0 = arith.constant 0 : i32
    %c0_i32_1 = arith.constant 0 : i32
    return %arg0, %c0_i32, %c0_i32_0 : i32, i32, i32
  }
  func.func @transform_6(%arg0: i32) -> (i32, i32, i32) {
    %c0_i32 = arith.constant 0 : i32
    %c0_i32_0 = arith.constant 0 : i32
    %c0_i32_1 = arith.constant 0 : i32
    return %arg0, %c0_i32, %c0_i32_0 : i32, i32, i32
  }
  func.func @transform_7(%arg0: i32) -> (i32, i32) {
    %c0_i32 = arith.constant 0 : i32
    %c0_i32_0 = arith.constant 0 : i32
    %c0_i32_1 = arith.constant 0 : i32
    return %c0_i32, %c0_i32_0 : i32, i32
  }
  func.func @transform_8(%arg0: i32) -> (i32, i32) {
    %c0_i32 = arith.constant 0 : i32
    %c0_i32_0 = arith.constant 0 : i32
    %c0_i32_1 = arith.constant 0 : i32
    return %c0_i32, %c0_i32_0 : i32, i32
  }
  func.func @transform_9(%arg0: i32) -> (i32, i32) {
    %c0_i32 = arith.constant 0 : i32
    %c0_i32_0 = arith.constant 0 : i32
    %c0_i32_1 = arith.constant 0 : i32
    return %c0_i32, %c0_i32_0 : i32, i32
  }
  func.func @transform_10(%arg0: i32) -> (i32, i32) {
    %c0_i32 = arith.constant 0 : i32
    %c0_i32_0 = arith.constant 0 : i32
    %c0_i32_1 = arith.constant 0 : i32
    return %c0_i32, %c0_i32_0 : i32, i32
  }
  func.func @transform_11(%arg0: i32) -> (i32, i32) {
    %c0_i32 = arith.constant 0 : i32
    %c0_i32_0 = arith.constant 0 : i32
    %c0_i32_1 = arith.constant 0 : i32
    return %c0_i32, %c0_i32_0 : i32, i32
  }
  func.func @transform_12(%arg0: i32) -> (i32, i32) {
    %c0_i32 = arith.constant 0 : i32
    %c0_i32_0 = arith.constant 0 : i32
    %c0_i32_1 = arith.constant 0 : i32
    return %c0_i32, %c0_i32_0 : i32, i32
  }
  func.func @transform_13(%arg0: i32) -> (i32, i32) {
    %c0_i32 = arith.constant 0 : i32
    %c0_i32_0 = arith.constant 0 : i32
    %c0_i32_1 = arith.constant 0 : i32
    return %c0_i32, %c0_i32_0 : i32, i32
  }
  func.func @transform_14(%arg0: i32) -> (i32, i32) {
    %c0_i32 = arith.constant 0 : i32
    %c0_i32_0 = arith.constant 0 : i32
    %c0_i32_1 = arith.constant 0 : i32
    return %c0_i32, %c0_i32_0 : i32, i32
  }
  func.func @transform_15(%arg0: i32) -> (i32, i32) {
    %c0_i32 = arith.constant 0 : i32
    %c0_i32_0 = arith.constant 0 : i32
    %c0_i32_1 = arith.constant 0 : i32
    return %c0_i32, %c0_i32_0 : i32, i32
  }
  func.func @transform_16(%arg0: i32) -> (i32, i32) {
    %c0_i32 = arith.constant 0 : i32
    %c0_i32_0 = arith.constant 0 : i32
    %c0_i32_1 = arith.constant 0 : i32
    return %c0_i32, %c0_i32_0 : i32, i32
  }
  func.func @transform_17(%arg0: i32) -> (i32, i32) {
    %c0_i32 = arith.constant 0 : i32
    %c0_i32_0 = arith.constant 0 : i32
    %c0_i32_1 = arith.constant 0 : i32
    return %c0_i32, %c0_i32_0 : i32, i32
  }
  func.func @transform_18(%arg0: i32) -> (i32, i32) {
    %c0_i32 = arith.constant 0 : i32
    %c0_i32_0 = arith.constant 0 : i32
    %c0_i32_1 = arith.constant 0 : i32
    return %c0_i32, %c0_i32_0 : i32, i32
  }
  func.func @transform_19(%arg0: i32) -> (i32, i32) {
    %c0_i32 = arith.constant 0 : i32
    %c0_i32_0 = arith.constant 0 : i32
    %c0_i32_1 = arith.constant 0 : i32
    return %c0_i32, %c0_i32_0 : i32, i32
  }
  func.func @transform_20(%arg0: i32) -> (i32, i32) {
    %c0_i32 = arith.constant 0 : i32
    %c0_i32_0 = arith.constant 0 : i32
    %c0_i32_1 = arith.constant 0 : i32
    return %c0_i32, %c0_i32_0 : i32, i32
  }
  func.func @transform_21(%arg0: i32) -> (i32, i32) {
    %c0_i32 = arith.constant 0 : i32
    %c0_i32_0 = arith.constant 0 : i32
    %c0_i32_1 = arith.constant 0 : i32
    return %c0_i32, %c0_i32_0 : i32, i32
  }
  func.func @transform_22(%arg0: i32) -> (i32, i32) {
    %c0_i32 = arith.constant 0 : i32
    %c0_i32_0 = arith.constant 0 : i32
    %c0_i32_1 = arith.constant 0 : i32
    return %c0_i32, %c0_i32_0 : i32, i32
  }
  func.func @transform_23(%arg0: i32) -> (i32, i32) {
    %c0_i32 = arith.constant 0 : i32
    %c0_i32_0 = arith.constant 0 : i32
    %c0_i32_1 = arith.constant 0 : i32
    return %c0_i32, %c0_i32_0 : i32, i32
  }
  func.func @transform_24(%arg0: i32) -> (i32, i32) {
    %c0_i32 = arith.constant 0 : i32
    %c0_i32_0 = arith.constant 0 : i32
    %c0_i32_1 = arith.constant 0 : i32
    return %c0_i32, %c0_i32_0 : i32, i32
  }
  func.func @transform_25(%arg0: i32) -> (i32, i32) {
    %c0_i32 = arith.constant 0 : i32
    %c0_i32_0 = arith.constant 0 : i32
    %c0_i32_1 = arith.constant 0 : i32
    return %c0_i32, %c0_i32_0 : i32, i32
  }
  func.func @transform_26(%arg0: i32) -> (i32, i32) {
    %c0_i32 = arith.constant 0 : i32
    %c0_i32_0 = arith.constant 0 : i32
    %c0_i32_1 = arith.constant 0 : i32
    return %c0_i32, %c0_i32_0 : i32, i32
  }
  func.func @transform_27(%arg0: i32) -> (i32, i32) {
    %c0_i32 = arith.constant 0 : i32
    %c0_i32_0 = arith.constant 0 : i32
    %c0_i32_1 = arith.constant 0 : i32
    return %c0_i32, %c0_i32_0 : i32, i32
  }
  func.func @transform_28(%arg0: i32) -> (i32, i32) {
    %c0_i32 = arith.constant 0 : i32
    %c0_i32_0 = arith.constant 0 : i32
    %c0_i32_1 = arith.constant 0 : i32
    return %c0_i32, %c0_i32_0 : i32, i32
  }
  func.func @transform_29(%arg0: i32) -> (i32, i32) {
    %c0_i32 = arith.constant 0 : i32
    %c0_i32_0 = arith.constant 0 : i32
    %c0_i32_1 = arith.constant 0 : i32
    return %c0_i32, %c0_i32_0 : i32, i32
  }
  func.func @transform_30(%arg0: i32) -> (i32, i32) {
    %c0_i32 = arith.constant 0 : i32
    %c0_i32_0 = arith.constant 0 : i32
    %c0_i32_1 = arith.constant 0 : i32
    return %c0_i32, %c0_i32_0 : i32, i32
  }
  func.func @transform_31(%arg0: i32) -> (i32, i32) {
    %c0_i32 = arith.constant 0 : i32
    %c0_i32_0 = arith.constant 0 : i32
    %c0_i32_1 = arith.constant 0 : i32
    return %c0_i32, %c0_i32_0 : i32, i32
  }
  func.func @transform_32(%arg0: i32) -> (i32, i32) {
    %c0_i32 = arith.constant 0 : i32
    %c0_i32_0 = arith.constant 0 : i32
    %c0_i32_1 = arith.constant 0 : i32
    return %c0_i32, %c0_i32_0 : i32, i32
  }
  func.func @transform_33(%arg0: i32) -> (i32, i32, i32) {
    %c0_i32 = arith.constant 0 : i32
    %c0_i32_0 = arith.constant 0 : i32
    %c0_i32_1 = arith.constant 0 : i32
    return %arg0, %c0_i32, %c0_i32_0 : i32, i32, i32
  }
}

</mosaic_0001>

<llo_original>
// kernel: text_conditioner_forward.1
$region0: #{text_conditioner_forward.1}
  #allocation0 [shape = 'u32[]', space=smem, size = 0x4, offset = 0x4, fixed_abs, tag = 'smem constant byte address 0x4 - core index']
  #allocation1 [shape = 'u32[72,128]{1,0:T(1,128)}', space=vmem, size = 0x9000, scoped, tag = 'internal scratch']
  %s0 = inlined_call_operand.smem [shape: u32[34], index: -1, kind: input, shape index: {}]
  %s1 = sld [smem:[%s0]]
  %s2 = scalar_lea.smem %s0, 1
  %s3 = sld [smem:[%s2]]
  %s4 = scalar_lea.smem %s0, 2
  %s5 = sld [smem:[%s4]]
  %s6 = scalar_lea.smem %s0, 3
  %s7 = sld [smem:[%s6]]
  %s8 = scalar_lea.smem %s0, 4
  %s9 = sld [smem:[%s8]]
  %s10 = scalar_lea.smem %s0, 5
  %s11 = sld [smem:[%s10]]
  %s12 = scalar_lea.smem %s0, 6
  %s13 = sld [smem:[%s12]]
  %s14 = scalar_lea.smem %s0, 7
  %s15 = sld [smem:[%s14]]
  %s16 = scalar_lea.smem %s0, 8
  %s17 = sld [smem:[%s16]]
  %s18 = scalar_lea.smem %s0, 9
  %s19 = sld [smem:[%s18]]
  %s20 = scalar_lea.smem %s0, 10
  %s21 = sld [smem:[%s20]]
  %s22 = scalar_lea.smem %s0, 11
  %s23 = sld [smem:[%s22]]
  %s24 = scalar_lea.smem %s0, 12
  %s25 = sld [smem:[%s24]]
  %s26 = scalar_lea.smem %s0, 13
  %s27 = sld [smem:[%s26]]
  %s28 = scalar_lea.smem %s0, 14
  %s29 = sld [smem:[%s28]]
  %s30 = scalar_lea.smem %s0, 15
  %s31 = sld [smem:[%s30]]
  %s32 = scalar_lea.smem %s0, 16
  %s33 = sld [smem:[%s32]]
  %s34 = scalar_lea.smem %s0, 17
  %s35 = sld [smem:[%s34]]
  %s36 = scalar_lea.smem %s0, 18
  %s37 = sld [smem:[%s36]]
  %s38 = scalar_lea.smem %s0, 19
  %s39 = sld [smem:[%s38]]
  %s40 = scalar_lea.smem %s0, 20
  %s41 = sld [smem:[%s40]]
  %s42 = scalar_lea.smem %s0, 21
  %s43 = sld [smem:[%s42]]
  %s44 = scalar_lea.smem %s0, 22
  %s45 = sld [smem:[%s44]]
  %s46 = scalar_lea.smem %s0, 23
  %s47 = sld [smem:[%s46]]
  %s48 = scalar_lea.smem %s0, 24
  %s49 = sld [smem:[%s48]]
  %s50 = scalar_lea.smem %s0, 25
  %s51 = sld [smem:[%s50]]
  %s52 = scalar_lea.smem %s0, 26
  %s53 = sld [smem:[%s52]]
  %s54 = scalar_lea.smem %s0, 27
  %s55 = sld [smem:[%s54]]
  %s56 = scalar_lea.smem %s0, 28
  %s57 = sld [smem:[%s56]]
  %s58 = scalar_lea.smem %s0, 29
  %s59 = sld [smem:[%s58]]
  %s60 = scalar_lea.smem %s0, 30
  %s61 = sld [smem:[%s60]]
  %s62 = scalar_lea.smem %s0, 31
  %s63 = sld [smem:[%s62]]
  %s64 = scalar_lea.smem %s0, 32
  %s65 = sld [smem:[%s64]]
  %s66 = scalar_lea.smem %s0, 33
  %s67 = sld [smem:[%s66]]
  %s68 = sld [smem:[#allocation0]]
  $region169: #{text_conditioner_forward.1} parent=0
    _
  %s70 = ssub.s32 1, %s68
  %s71 = scalar_select 0, %s70, %s68
  $region1: #{text_conditioner_forward.1} parent=0
    #allocation2 [shape = 'u8[512]{0}', space=smem, size = 0x200, scoped, tag = 'input window, operand 0, single buffered']
    #allocation3 [shape = 's32[2]{0}', space=sflag, size = 0x8, scoped, tag = 'scoped memory for text_conditioner_forward.1']
    %72 = vsyncpa [#allocation3], 0
    loop: start=0, step=1, limit=4
    $region2: #{text_conditioner_forward.1} parent=1 // loop_pre_header
      _
    $region3: #{text_conditioner_forward.1} parent=1 // loop_header
      %s74 = sphi 0, %s78
      %p75 = scmp.ge.s32.totalorder %s74, 4
      %s82 = sphi 0, %s82
      %s84 = sphi 0, %s82
      %s85 = sphi 0, %s84
      %s99 = sphi 0, %s85
      %s105 = sphi 0, %s107
      %s108 = sphi 0, %s105
      %s109 = sphi 0, %s108
      %s125 = sphi 0, %s109
      %s131 = sphi 0, %s133
      %s134 = sphi 0, %s131
      %s135 = sphi 0, %s134
      %s151 = sphi 0, %s135
      %s157 = sphi 0, %s159
      %s160 = sphi 0, %s157
      %s161 = sphi 0, %s160
      %s177 = sphi 0, %s161
      %s183 = sphi 0, %s185
      %s186 = sphi 0, %s183
      %s187 = sphi 0, %s186
      %s203 = sphi 0, %s187
      %s209 = sphi 0, %s211
      %s212 = sphi 0, %s209
      %s213 = sphi 0, %s212
      %s229 = sphi 0, %s213
      %s235 = sphi 0, %s237
      %s238 = sphi 0, %s235
      %s239 = sphi 0, %s238
      %s255 = sphi 0, %s239
      %s259 = sphi 0, %s259
      %s261 = sphi 0, %s259
      %s262 = sphi 0, %s261
      %s276 = sphi 0, %s262
      %s280 = sphi 0, %s280
      %s282 = sphi 0, %s280
      %s283 = sphi 0, %s282
      %s297 = sphi 0, %s283
      %s301 = sphi 0, %s301
      %s303 = sphi 0, %s301
      %s304 = sphi 0, %s303
      %s318 = sphi 0, %s304
      %s322 = sphi 0, %s322
      %s324 = sphi 0, %s322
      %s325 = sphi 0, %s324
      %s339 = sphi 0, %s325
      %s343 = sphi 0, %s343
      %s345 = sphi 0, %s343
      %s346 = sphi 0, %s345
      %s360 = sphi 0, %s346
      %s364 = sphi 0, %s364
      %s366 = sphi 0, %s364
      %s367 = sphi 0, %s366
      %s381 = sphi 0, %s367
      %s385 = sphi 0, %s385
      %s387 = sphi 0, %s385
      %s388 = sphi 0, %s387
      %s402 = sphi 0, %s388
      %s406 = sphi 0, %s406
      %s408 = sphi 0, %s406
      %s409 = sphi 0, %s408
      %s423 = sphi 0, %s409
      %s427 = sphi 0, %s427
      %s429 = sphi 0, %s427
      %s430 = sphi 0, %s429
      %s444 = sphi 0, %s430
      %s448 = sphi 0, %s448
      %s450 = sphi 0, %s448
      %s451 = sphi 0, %s450
      %s465 = sphi 0, %s451
      %s469 = sphi 0, %s469
      %s471 = sphi 0, %s469
      %s472 = sphi 0, %s471
      %s486 = sphi 0, %s472
      %s490 = sphi 0, %s490
      %s492 = sphi 0, %s490
      %s493 = sphi 0, %s492
      %s507 = sphi 0, %s493
      %s511 = sphi 0, %s511
      %s513 = sphi 0, %s511
      %s514 = sphi 0, %s513
      %s528 = sphi 0, %s514
      %s532 = sphi 0, %s532
      %s534 = sphi 0, %s532
      %s535 = sphi 0, %s534
      %s549 = sphi 0, %s535
      %s553 = sphi 0, %s553
      %s555 = sphi 0, %s553
      %s556 = sphi 0, %s555
      %s570 = sphi 0, %s556
      %s574 = sphi 0, %s574
      %s576 = sphi 0, %s574
      %s577 = sphi 0, %s576
      %s591 = sphi 0, %s577
      %s595 = sphi 0, %s595
      %s597 = sphi 0, %s595
      %s598 = sphi 0, %s597
      %s612 = sphi 0, %s598
      %s616 = sphi 0, %s616
      %s618 = sphi 0, %s616
      %s619 = sphi 0, %s618
      %s633 = sphi 0, %s619
      %s637 = sphi 0, %s637
      %s639 = sphi 0, %s637
      %s640 = sphi 0, %s639
      %s654 = sphi 0, %s640
      %s658 = sphi 0, %s658
      %s660 = sphi 0, %s658
      %s661 = sphi 0, %s660
      %s675 = sphi 0, %s661
      %s679 = sphi 0, %s679
      %s681 = sphi 0, %s679
      %s682 = sphi 0, %s681
      %s696 = sphi 0, %s682
      %s700 = sphi 0, %s700
      %s702 = sphi 0, %s700
      %s703 = sphi 0, %s702
      %s717 = sphi 0, %s703
      %s721 = sphi 0, %s721
      %s723 = sphi 0, %s721
      %s724 = sphi 0, %s723
      %s738 = sphi 0, %s724
      %s742 = sphi 0, %s742
      %s744 = sphi 0, %s742
      %s745 = sphi 0, %s744
      %s759 = sphi 0, %s745
      %s763 = sphi 0, %s763
      %s765 = sphi 0, %s763
      %s766 = sphi 0, %s765
      %s780 = sphi 0, %s766
      %s784 = sphi 0, %s784
      %s786 = sphi 0, %s784
      %s787 = sphi 0, %s786
      %s801 = sphi 0, %s787
      %s807 = sphi 0, %s809
      %s810 = sphi 0, %s807
      %s811 = sphi 0, %s810
      %s827 = sphi 0, %s811
    $region4: #{text_conditioner_forward.1} parent=1 // loop_header_branch
      %77 = sbr.rel (%p75) target = $region8
    $region5: #{text_conditioner_forward.1} parent=1 // loop_body
      %s79 = ssub.s32 %s74, 1
      %s80 = ssub.s32 %s74, 2
      %s81 = sadd.s32 %s74, 1
      %s83 = sadd.s32 %s82, 1
      %p86 = scmp.eq.s32.totalorder %s74, 1
      %p87 = scmp.ne.s32.totalorder %s82, %s84
      %p88 = scmp.eq.s32.totalorder %s74, 0
      %p89 = por %p87, %p88
      %p90 = scmp.ne.s32.totalorder %s82, %s84
      %p91 = scmp.eq.s32.totalorder %s79, 1
      %p92 = por %p90, %p91
      %p93 = scmp.ne.s32.totalorder %s84, %s85
      %p94 = scmp.eq.s32.totalorder %s79, 0
      %p95 = por %p93, %p94
      %p96 = scmp.ne.s32.totalorder %s84, %s85
      %p97 = scmp.eq.s32.totalorder %s80, 1
      %p98 = por %p96, %p97
      %p100 = scmp.ne.s32.totalorder %s85, %s99
      %p101 = scmp.eq.s32.totalorder %s80, 0
      %p102 = por %p100, %p101
      %s103 = ssub.s32 %s74, %s81
      %p104 = scmp.eq.s32.totalorder %s103, 0
      %s106 = sadd.s32 %s105, 1
      %s107 = scalar_select %p104, %s105, %s106
      %p110 = pneg %p104
      %p111 = scmp.eq.s32.totalorder %s74, 1
      %p112 = por %p110, %p111
      %p113 = scmp.ne.s32.totalorder %s105, %s108
      %p114 = scmp.eq.s32.totalorder %s74, 0
      %p115 = por %p113, %p114
      %p116 = scmp.ne.s32.totalorder %s105, %s108
      %p117 = scmp.eq.s32.totalorder %s79, 1
      %p118 = por %p116, %p117
      %p119 = scmp.ne.s32.totalorder %s108, %s109
      %p120 = scmp.eq.s32.totalorder %s79, 0
      %p121 = por %p119, %p120
      %p122 = scmp.ne.s32.totalorder %s108, %s109
      %p123 = scmp.eq.s32.totalorder %s80, 1
      %p124 = por %p122, %p123
      %p126 = scmp.ne.s32.totalorder %s109, %s125
      %p127 = scmp.eq.s32.totalorder %s80, 0
      %p128 = por %p126, %p127
      %s129 = ssub.s32 %s74, %s81
      %p130 = scmp.eq.s32.totalorder %s129, 0
      %s132 = sadd.s32 %s131, 1
      %s133 = scalar_select %p130, %s131, %s132
      %p136 = pneg %p130
      %p137 = scmp.eq.s32.totalorder %s74, 1
      %p138 = por %p136, %p137
      %p139 = scmp.ne.s32.totalorder %s131, %s134
      %p140 = scmp.eq.s32.totalorder %s74, 0
      %p141 = por %p139, %p140
      %p142 = scmp.ne.s32.totalorder %s131, %s134
      %p143 = scmp.eq.s32.totalorder %s79, 1
      %p144 = por %p142, %p143
      %p145 = scmp.ne.s32.totalorder %s134, %s135
      %p146 = scmp.eq.s32.totalorder %s79, 0
      %p147 = por %p145, %p146
      %p148 = scmp.ne.s32.totalorder %s134, %s135
      %p149 = scmp.eq.s32.totalorder %s80, 1
      %p150 = por %p148, %p149
      %p152 = scmp.ne.s32.totalorder %s135, %s151
      %p153 = scmp.eq.s32.totalorder %s80, 0
      %p154 = por %p152, %p153
      %s155 = ssub.s32 %s74, %s81
      %p156 = scmp.eq.s32.totalorder %s155, 0
      %s158 = sadd.s32 %s157, 1
      %s159 = scalar_select %p156, %s157, %s158
      %p162 = pneg %p156
      %p163 = scmp.eq.s32.totalorder %s74, 1
      %p164 = por %p162, %p163
      %p165 = scmp.ne.s32.totalorder %s157, %s160
      %p166 = scmp.eq.s32.totalorder %s74, 0
      %p167 = por %p165, %p166
      %p168 = scmp.ne.s32.totalorder %s157, %s160
      %p169 = scmp.eq.s32.totalorder %s79, 1
      %p170 = por %p168, %p169
      %p171 = scmp.ne.s32.totalorder %s160, %s161
      %p172 = scmp.eq.s32.totalorder %s79, 0
      %p173 = por %p171, %p172
      %p174 = scmp.ne.s32.totalorder %s160, %s161
      %p175 = scmp.eq.s32.totalorder %s80, 1
      %p176 = por %p174, %p175
      %p178 = scmp.ne.s32.totalorder %s161, %s177
      %p179 = scmp.eq.s32.totalorder %s80, 0
      %p180 = por %p178, %p179
      %s181 = ssub.s32 %s74, %s81
      %p182 = scmp.eq.s32.totalorder %s181, 0
      %s184 = sadd.s32 %s183, 1
      %s185 = scalar_select %p182, %s183, %s184
      %p188 = pneg %p182
      %p189 = scmp.eq.s32.totalorder %s74, 1
      %p190 = por %p188, %p189
      %p191 = scmp.ne.s32.totalorder %s183, %s186
      %p192 = scmp.eq.s32.totalorder %s74, 0
      %p193 = por %p191, %p192
      %p194 = scmp.ne.s32.totalorder %s183, %s186
      %p195 = scmp.eq.s32.totalorder %s79, 1
      %p196 = por %p194, %p195
      %p197 = scmp.ne.s32.totalorder %s186, %s187
      %p198 = scmp.eq.s32.totalorder %s79, 0
      %p199 = por %p197, %p198
      %p200 = scmp.ne.s32.totalorder %s186, %s187
      %p201 = scmp.eq.s32.totalorder %s80, 1
      %p202 = por %p200, %p201
      %p204 = scmp.ne.s32.totalorder %s187, %s203
      %p205 = scmp.eq.s32.totalorder %s80, 0
      %p206 = por %p204, %p205
      %s207 = ssub.s32 %s74, %s81
      %p208 = scmp.eq.s32.totalorder %s207, 0
      %s210 = sadd.s32 %s209, 1
      %s211 = scalar_select %p208, %s209, %s210
      %p214 = pneg %p208
      %p215 = scmp.eq.s32.totalorder %s74, 1
      %p216 = por %p214, %p215
      %p217 = scmp.ne.s32.totalorder %s209, %s212
      %p218 = scmp.eq.s32.totalorder %s74, 0
      %p219 = por %p217, %p218
      %p220 = scmp.ne.s32.totalorder %s209, %s212
      %p221 = scmp.eq.s32.totalorder %s79, 1
      %p222 = por %p220, %p221
      %p223 = scmp.ne.s32.totalorder %s212, %s213
      %p224 = scmp.eq.s32.totalorder %s79, 0
      %p225 = por %p223, %p224
      %p226 = scmp.ne.s32.totalorder %s212, %s213
      %p227 = scmp.eq.s32.totalorder %s80, 1
      %p228 = por %p226, %p227
      %p230 = scmp.ne.s32.totalorder %s213, %s229
      %p231 = scmp.eq.s32.totalorder %s80, 0
      %p232 = por %p230, %p231
      %s233 = ssub.s32 %s74, %s81
      %p234 = scmp.eq.s32.totalorder %s233, 0
      %s236 = sadd.s32 %s235, 1
      %s237 = scalar_select %p234, %s235, %s236
      %p240 = pneg %p234
      %p241 = scmp.eq.s32.totalorder %s74, 1
      %p242 = por %p240, %p241
      %p243 = scmp.ne.s32.totalorder %s235, %s238
      %p244 = scmp.eq.s32.totalorder %s74, 0
      %p245 = por %p243, %p244
      %p246 = scmp.ne.s32.totalorder %s235, %s238
      %p247 = scmp.eq.s32.totalorder %s79, 1
      %p248 = por %p246, %p247
      %p249 = scmp.ne.s32.totalorder %s238, %s239
      %p250 = scmp.eq.s32.totalorder %s79, 0
      %p251 = por %p249, %p250
      %p252 = scmp.ne.s32.totalorder %s238, %s239
      %p253 = scmp.eq.s32.totalorder %s80, 1
      %p254 = por %p252, %p253
      %p256 = scmp.ne.s32.totalorder %s239, %s255
      %p257 = scmp.eq.s32.totalorder %s80, 0
      %p258 = por %p256, %p257
      %s260 = sadd.s32 %s259, 1
      %p263 = scmp.eq.s32.totalorder %s74, 1
      %p264 = scmp.ne.s32.totalorder %s259, %s261
      %p265 = scmp.eq.s32.totalorder %s74, 0
      %p266 = por %p264, %p265
      %p267 = scmp.ne.s32.totalorder %s259, %s261
      %p268 = scmp.eq.s32.totalorder %s79, 1
      %p269 = por %p267, %p268
      %p270 = scmp.ne.s32.totalorder %s261, %s262
      %p271 = scmp.eq.s32.totalorder %s79, 0
      %p272 = por %p270, %p271
      %p273 = scmp.ne.s32.totalorder %s261, %s262
      %p274 = scmp.eq.s32.totalorder %s80, 1
      %p275 = por %p273, %p274
      %p277 = scmp.ne.s32.totalorder %s262, %s276
      %p278 = scmp.eq.s32.totalorder %s80, 0
      %p279 = por %p277, %p278
      %s281 = sadd.s32 %s280, 1
      %p284 = scmp.eq.s32.totalorder %s74, 1
      %p285 = scmp.ne.s32.totalorder %s280, %s282
      %p286 = scmp.eq.s32.totalorder %s74, 0
      %p287 = por %p285, %p286
      %p288 = scmp.ne.s32.totalorder %s280, %s282
      %p289 = scmp.eq.s32.totalorder %s79, 1
      %p290 = por %p288, %p289
      %p291 = scmp.ne.s32.totalorder %s282, %s283
      %p292 = scmp.eq.s32.totalorder %s79, 0
      %p293 = por %p291, %p292
      %p294 = scmp.ne.s32.totalorder %s282, %s283
      %p295 = scmp.eq.s32.totalorder %s80, 1
      %p296 = por %p294, %p295
      %p298 = scmp.ne.s32.totalorder %s283, %s297
      %p299 = scmp.eq.s32.totalorder %s80, 0
      %p300 = por %p298, %p299
      %s302 = sadd.s32 %s301, 1
      %p305 = scmp.eq.s32.totalorder %s74, 1
      %p306 = scmp.ne.s32.totalorder %s301, %s303
      %p307 = scmp.eq.s32.totalorder %s74, 0
      %p308 = por %p306, %p307
      %p309 = scmp.ne.s32.totalorder %s301, %s303
      %p310 = scmp.eq.s32.totalorder %s79, 1
      %p311 = por %p309, %p310
      %p312 = scmp.ne.s32.totalorder %s303, %s304
      %p313 = scmp.eq.s32.totalorder %s79, 0
      %p314 = por %p312, %p313
      %p315 = scmp.ne.s32.totalorder %s303, %s304
      %p316 = scmp.eq.s32.totalorder %s80, 1
      %p317 = por %p315, %p316
      %p319 = scmp.ne.s32.totalorder %s304, %s318
      %p320 = scmp.eq.s32.totalorder %s80, 0
      %p321 = por %p319, %p320
      %s323 = sadd.s32 %s322, 1
      %p326 = scmp.eq.s32.totalorder %s74, 1
      %p327 = scmp.ne.s32.totalorder %s322, %s324
      %p328 = scmp.eq.s32.totalorder %s74, 0
      %p329 = por %p327, %p328
      %p330 = scmp.ne.s32.totalorder %s322, %s324
      %p331 = scmp.eq.s32.totalorder %s79, 1
      %p332 = por %p330, %p331
      %p333 = scmp.ne.s32.totalorder %s324, %s325
      %p334 = scmp.eq.s32.totalorder %s79, 0
      %p335 = por %p333, %p334
      %p336 = scmp.ne.s32.totalorder %s324, %s325
      %p337 = scmp.eq.s32.totalorder %s80, 1
      %p338 = por %p336, %p337
      %p340 = scmp.ne.s32.totalorder %s325, %s339
      %p341 = scmp.eq.s32.totalorder %s80, 0
      %p342 = por %p340, %p341
      %s344 = sadd.s32 %s343, 1
      %p347 = scmp.eq.s32.totalorder %s74, 1
      %p348 = scmp.ne.s32.totalorder %s343, %s345
      %p349 = scmp.eq.s32.totalorder %s74, 0
      %p350 = por %p348, %p349
      %p351 = scmp.ne.s32.totalorder %s343, %s345
      %p352 = scmp.eq.s32.totalorder %s79, 1
      %p353 = por %p351, %p352
      %p354 = scmp.ne.s32.totalorder %s345, %s346
      %p355 = scmp.eq.s32.totalorder %s79, 0
      %p356 = por %p354, %p355
      %p357 = scmp.ne.s32.totalorder %s345, %s346
      %p358 = scmp.eq.s32.totalorder %s80, 1
      %p359 = por %p357, %p358
      %p361 = scmp.ne.s32.totalorder %s346, %s360
      %p362 = scmp.eq.s32.totalorder %s80, 0
      %p363 = por %p361, %p362
      %s365 = sadd.s32 %s364, 1
      %p368 = scmp.eq.s32.totalorder %s74, 1
      %p369 = scmp.ne.s32.totalorder %s364, %s366
      %p370 = scmp.eq.s32.totalorder %s74, 0
      %p371 = por %p369, %p370
      %p372 = scmp.ne.s32.totalorder %s364, %s366
      %p373 = scmp.eq.s32.totalorder %s79, 1
      %p374 = por %p372, %p373
      %p375 = scmp.ne.s32.totalorder %s366, %s367
      %p376 = scmp.eq.s32.totalorder %s79, 0
      %p377 = por %p375, %p376
      %p378 = scmp.ne.s32.totalorder %s366, %s367
      %p379 = scmp.eq.s32.totalorder %s80, 1
      %p380 = por %p378, %p379
      %p382 = scmp.ne.s32.totalorder %s367, %s381
      %p383 = scmp.eq.s32.totalorder %s80, 0
      %p384 = por %p382, %p383
      %s386 = sadd.s32 %s385, 1
      %p389 = scmp.eq.s32.totalorder %s74, 1
      %p390 = scmp.ne.s32.totalorder %s385, %s387
      %p391 = scmp.eq.s32.totalorder %s74, 0
      %p392 = por %p390, %p391
      %p393 = scmp.ne.s32.totalorder %s385, %s387
      %p394 = scmp.eq.s32.totalorder %s79, 1
      %p395 = por %p393, %p394
      %p396 = scmp.ne.s32.totalorder %s387, %s388
      %p397 = scmp.eq.s32.totalorder %s79, 0
      %p398 = por %p396, %p397
      %p399 = scmp.ne.s32.totalorder %s387, %s388
      %p400 = scmp.eq.s32.totalorder %s80, 1
      %p401 = por %p399, %p400
      %p403 = scmp.ne.s32.totalorder %s388, %s402
      %p404 = scmp.eq.s32.totalorder %s80, 0
      %p405 = por %p403, %p404
      %s407 = sadd.s32 %s406, 1
      %p410 = scmp.eq.s32.totalorder %s74, 1
      %p411 = scmp.ne.s32.totalorder %s406, %s408
      %p412 = scmp.eq.s32.totalorder %s74, 0
      %p413 = por %p411, %p412
      %p414 = scmp.ne.s32.totalorder %s406, %s408
      %p415 = scmp.eq.s32.totalorder %s79, 1
      %p416 = por %p414, %p415
      %p417 = scmp.ne.s32.totalorder %s408, %s409
      %p418 = scmp.eq.s32.totalorder %s79, 0
      %p419 = por %p417, %p418
      %p420 = scmp.ne.s32.totalorder %s408, %s409
      %p421 = scmp.eq.s32.totalorder %s80, 1
      %p422 = por %p420, %p421
      %p424 = scmp.ne.s32.totalorder %s409, %s423
      %p425 = scmp.eq.s32.totalorder %s80, 0
      %p426 = por %p424, %p425
      %s428 = sadd.s32 %s427, 1
      %p431 = scmp.eq.s32.totalorder %s74, 1
      %p432 = scmp.ne.s32.totalorder %s427, %s429
      %p433 = scmp.eq.s32.totalorder %s74, 0
      %p434 = por %p432, %p433
      %p435 = scmp.ne.s32.totalorder %s427, %s429
      %p436 = scmp.eq.s32.totalorder %s79, 1
      %p437 = por %p435, %p436
      %p438 = scmp.ne.s32.totalorder %s429, %s430
      %p439 = scmp.eq.s32.totalorder %s79, 0
      %p440 = por %p438, %p439
      %p441 = scmp.ne.s32.totalorder %s429, %s430
      %p442 = scmp.eq.s32.totalorder %s80, 1
      %p443 = por %p441, %p442
      %p445 = scmp.ne.s32.totalorder %s430, %s444
      %p446 = scmp.eq.s32.totalorder %s80, 0
      %p447 = por %p445, %p446
      %s449 = sadd.s32 %s448, 1
      %p452 = scmp.eq.s32.totalorder %s74, 1
      %p453 = scmp.ne.s32.totalorder %s448, %s450
      %p454 = scmp.eq.s32.totalorder %s74, 0
      %p455 = por %p453, %p454
      %p456 = scmp.ne.s32.totalorder %s448, %s450
      %p457 = scmp.eq.s32.totalorder %s79, 1
      %p458 = por %p456, %p457
      %p459 = scmp.ne.s32.totalorder %s450, %s451
      %p460 = scmp.eq.s32.totalorder %s79, 0
      %p461 = por %p459, %p460
      %p462 = scmp.ne.s32.totalorder %s450, %s451
      %p463 = scmp.eq.s32.totalorder %s80, 1
      %p464 = por %p462, %p463
      %p466 = scmp.ne.s32.totalorder %s451, %s465
      %p467 = scmp.eq.s32.totalorder %s80, 0
      %p468 = por %p466, %p467
      %s470 = sadd.s32 %s469, 1
      %p473 = scmp.eq.s32.totalorder %s74, 1
      %p474 = scmp.ne.s32.totalorder %s469, %s471
      %p475 = scmp.eq.s32.totalorder %s74, 0
      %p476 = por %p474, %p475
      %p477 = scmp.ne.s32.totalorder %s469, %s471
      %p478 = scmp.eq.s32.totalorder %s79, 1
      %p479 = por %p477, %p478
      %p480 = scmp.ne.s32.totalorder %s471, %s472
      %p481 = scmp.eq.s32.totalorder %s79, 0
      %p482 = por %p480, %p481
      %p483 = scmp.ne.s32.totalorder %s471, %s472
      %p484 = scmp.eq.s32.totalorder %s80, 1
      %p485 = por %p483, %p484
      %p487 = scmp.ne.s32.totalorder %s472, %s486
      %p488 = scmp.eq.s32.totalorder %s80, 0
      %p489 = por %p487, %p488
      %s491 = sadd.s32 %s490, 1
      %p494 = scmp.eq.s32.totalorder %s74, 1
      %p495 = scmp.ne.s32.totalorder %s490, %s492
      %p496 = scmp.eq.s32.totalorder %s74, 0
      %p497 = por %p495, %p496
      %p498 = scmp.ne.s32.totalorder %s490, %s492
      %p499 = scmp.eq.s32.totalorder %s79, 1
      %p500 = por %p498, %p499
      %p501 = scmp.ne.s32.totalorder %s492, %s493
      %p502 = scmp.eq.s32.totalorder %s79, 0
      %p503 = por %p501, %p502
      %p504 = scmp.ne.s32.totalorder %s492, %s493
      %p505 = scmp.eq.s32.totalorder %s80, 1
      %p506 = por %p504, %p505
      %p508 = scmp.ne.s32.totalorder %s493, %s507
      %p509 = scmp.eq.s32.totalorder %s80, 0
      %p510 = por %p508, %p509
      %s512 = sadd.s32 %s511, 1
      %p515 = scmp.eq.s32.totalorder %s74, 1
      %p516 = scmp.ne.s32.totalorder %s511, %s513
      %p517 = scmp.eq.s32.totalorder %s74, 0
      %p518 = por %p516, %p517
      %p519 = scmp.ne.s32.totalorder %s511, %s513
      %p520 = scmp.eq.s32.totalorder %s79, 1
      %p521 = por %p519, %p520
      %p522 = scmp.ne.s32.totalorder %s513, %s514
      %p523 = scmp.eq.s32.totalorder %s79, 0
      %p524 = por %p522, %p523
      %p525 = scmp.ne.s32.totalorder %s513, %s514
      %p526 = scmp.eq.s32.totalorder %s80, 1
      %p527 = por %p525, %p526
      %p529 = scmp.ne.s32.totalorder %s514, %s528
      %p530 = scmp.eq.s32.totalorder %s80, 0
      %p531 = por %p529, %p530
      %s533 = sadd.s32 %s532, 1
      %p536 = scmp.eq.s32.totalorder %s74, 1
      %p537 = scmp.ne.s32.totalorder %s532, %s534
      %p538 = scmp.eq.s32.totalorder %s74, 0
      %p539 = por %p537, %p538
      %p540 = scmp.ne.s32.totalorder %s532, %s534
      %p541 = scmp.eq.s32.totalorder %s79, 1
      %p542 = por %p540, %p541
      %p543 = scmp.ne.s32.totalorder %s534, %s535
      %p544 = scmp.eq.s32.totalorder %s79, 0
      %p545 = por %p543, %p544
      %p546 = scmp.ne.s32.totalorder %s534, %s535
      %p547 = scmp.eq.s32.totalorder %s80, 1
      %p548 = por %p546, %p547
      %p550 = scmp.ne.s32.totalorder %s535, %s549
      %p551 = scmp.eq.s32.totalorder %s80, 0
      %p552 = por %p550, %p551
      %s554 = sadd.s32 %s553, 1
      %p557 = scmp.eq.s32.totalorder %s74, 1
      %p558 = scmp.ne.s32.totalorder %s553, %s555
      %p559 = scmp.eq.s32.totalorder %s74, 0
      %p560 = por %p558, %p559
      %p561 = scmp.ne.s32.totalorder %s553, %s555
      %p562 = scmp.eq.s32.totalorder %s79, 1
      %p563 = por %p561, %p562
      %p564 = scmp.ne.s32.totalorder %s555, %s556
      %p565 = scmp.eq.s32.totalorder %s79, 0
      %p566 = por %p564, %p565
      %p567 = scmp.ne.s32.totalorder %s555, %s556
      %p568 = scmp.eq.s32.totalorder %s80, 1
      %p569 = por %p567, %p568
      %p571 = scmp.ne.s32.totalorder %s556, %s570
      %p572 = scmp.eq.s32.totalorder %s80, 0
      %p573 = por %p571, %p572
      %s575 = sadd.s32 %s574, 1
      %p578 = scmp.eq.s32.totalorder %s74, 1
      %p579 = scmp.ne.s32.totalorder %s574, %s576
      %p580 = scmp.eq.s32.totalorder %s74, 0
      %p581 = por %p579, %p580
      %p582 = scmp.ne.s32.totalorder %s574, %s576
      %p583 = scmp.eq.s32.totalorder %s79, 1
      %p584 = por %p582, %p583
      %p585 = scmp.ne.s32.totalorder %s576, %s577
      %p586 = scmp.eq.s32.totalorder %s79, 0
      %p587 = por %p585, %p586
      %p588 = scmp.ne.s32.totalorder %s576, %s577
      %p589 = scmp.eq.s32.totalorder %s80, 1
      %p590 = por %p588, %p589
      %p592 = scmp.ne.s32.totalorder %s577, %s591
      %p593 = scmp.eq.s32.totalorder %s80, 0
      %p594 = por %p592, %p593
      %s596 = sadd.s32 %s595, 1
      %p599 = scmp.eq.s32.totalorder %s74, 1
      %p600 = scmp.ne.s32.totalorder %s595, %s597
      %p601 = scmp.eq.s32.totalorder %s74, 0
      %p602 = por %p600, %p601
      %p603 = scmp.ne.s32.totalorder %s595, %s597
      %p604 = scmp.eq.s32.totalorder %s79, 1
      %p605 = por %p603, %p604
      %p606 = scmp.ne.s32.totalorder %s597, %s598
      %p607 = scmp.eq.s32.totalorder %s79, 0
      %p608 = por %p606, %p607
      %p609 = scmp.ne.s32.totalorder %s597, %s598
      %p610 = scmp.eq.s32.totalorder %s80, 1
      %p611 = por %p609, %p610
      %p613 = scmp.ne.s32.totalorder %s598, %s612
      %p614 = scmp.eq.s32.totalorder %s80, 0
      %p615 = por %p613, %p614
      %s617 = sadd.s32 %s616, 1
      %p620 = scmp.eq.s32.totalorder %s74, 1
      %p621 = scmp.ne.s32.totalorder %s616, %s618
      %p622 = scmp.eq.s32.totalorder %s74, 0
      %p623 = por %p621, %p622
      %p624 = scmp.ne.s32.totalorder %s616, %s618
      %p625 = scmp.eq.s32.totalorder %s79, 1
      %p626 = por %p624, %p625
      %p627 = scmp.ne.s32.totalorder %s618, %s619
      %p628 = scmp.eq.s32.totalorder %s79, 0
      %p629 = por %p627, %p628
      %p630 = scmp.ne.s32.totalorder %s618, %s619
      %p631 = scmp.eq.s32.totalorder %s80, 1
      %p632 = por %p630, %p631
      %p634 = scmp.ne.s32.totalorder %s619, %s633
      %p635 = scmp.eq.s32.totalorder %s80, 0
      %p636 = por %p634, %p635
      %s638 = sadd.s32 %s637, 1
      %p641 = scmp.eq.s32.totalorder %s74, 1
      %p642 = scmp.ne.s32.totalorder %s637, %s639
      %p643 = scmp.eq.s32.totalorder %s74, 0
      %p644 = por %p642, %p643
      %p645 = scmp.ne.s32.totalorder %s637, %s639
      %p646 = scmp.eq.s32.totalorder %s79, 1
      %p647 = por %p645, %p646
      %p648 = scmp.ne.s32.totalorder %s639, %s640
      %p649 = scmp.eq.s32.totalorder %s79, 0
      %p650 = por %p648, %p649
      %p651 = scmp.ne.s32.totalorder %s639, %s640
      %p652 = scmp.eq.s32.totalorder %s80, 1
      %p653 = por %p651, %p652
      %p655 = scmp.ne.s32.totalorder %s640, %s654
      %p656 = scmp.eq.s32.totalorder %s80, 0
      %p657 = por %p655, %p656
      %s659 = sadd.s32 %s658, 1
      %p662 = scmp.eq.s32.totalorder %s74, 1
      %p663 = scmp.ne.s32.totalorder %s658, %s660
      %p664 = scmp.eq.s32.totalorder %s74, 0
      %p665 = por %p663, %p664
      %p666 = scmp.ne.s32.totalorder %s658, %s660
      %p667 = scmp.eq.s32.totalorder %s79, 1
      %p668 = por %p666, %p667
      %p669 = scmp.ne.s32.totalorder %s660, %s661
      %p670 = scmp.eq.s32.totalorder %s79, 0
      %p671 = por %p669, %p670
      %p672 = scmp.ne.s32.totalorder %s660, %s661
      %p673 = scmp.eq.s32.totalorder %s80, 1
      %p674 = por %p672, %p673
      %p676 = scmp.ne.s32.totalorder %s661, %s675
      %p677 = scmp.eq.s32.totalorder %s80, 0
      %p678 = por %p676, %p677
      %s680 = sadd.s32 %s679, 1
      %p683 = scmp.eq.s32.totalorder %s74, 1
      %p684 = scmp.ne.s32.totalorder %s679, %s681
      %p685 = scmp.eq.s32.totalorder %s74, 0
      %p686 = por %p684, %p685
      %p687 = scmp.ne.s32.totalorder %s679, %s681
      %p688 = scmp.eq.s32.totalorder %s79, 1
      %p689 = por %p687, %p688
      %p690 = scmp.ne.s32.totalorder %s681, %s682
      %p691 = scmp.eq.s32.totalorder %s79, 0
      %p692 = por %p690, %p691
      %p693 = scmp.ne.s32.totalorder %s681, %s682
      %p694 = scmp.eq.s32.totalorder %s80, 1
      %p695 = por %p693, %p694
      %p697 = scmp.ne.s32.totalorder %s682, %s696
      %p698 = scmp.eq.s32.totalorder %s80, 0
      %p699 = por %p697, %p698
      %s701 = sadd.s32 %s700, 1
      %p704 = scmp.eq.s32.totalorder %s74, 1
      %p705 = scmp.ne.s32.totalorder %s700, %s702
      %p706 = scmp.eq.s32.totalorder %s74, 0
      %p707 = por %p705, %p706
      %p708 = scmp.ne.s32.totalorder %s700, %s702
      %p709 = scmp.eq.s32.totalorder %s79, 1
      %p710 = por %p708, %p709
      %p711 = scmp.ne.s32.totalorder %s702, %s703
      %p712 = scmp.eq.s32.totalorder %s79, 0
      %p713 = por %p711, %p712
      %p714 = scmp.ne.s32.totalorder %s702, %s703
      %p715 = scmp.eq.s32.totalorder %s80, 1
      %p716 = por %p714, %p715
      %p718 = scmp.ne.s32.totalorder %s703, %s717
      %p719 = scmp.eq.s32.totalorder %s80, 0
      %p720 = por %p718, %p719
      %s722 = sadd.s32 %s721, 1
      %p725 = scmp.eq.s32.totalorder %s74, 1
      %p726 = scmp.ne.s32.totalorder %s721, %s723
      %p727 = scmp.eq.s32.totalorder %s74, 0
      %p728 = por %p726, %p727
      %p729 = scmp.ne.s32.totalorder %s721, %s723
      %p730 = scmp.eq.s32.totalorder %s79, 1
      %p731 = por %p729, %p730
      %p732 = scmp.ne.s32.totalorder %s723, %s724
      %p733 = scmp.eq.s32.totalorder %s79, 0
      %p734 = por %p732, %p733
      %p735 = scmp.ne.s32.totalorder %s723, %s724
      %p736 = scmp.eq.s32.totalorder %s80, 1
      %p737 = por %p735, %p736
      %p739 = scmp.ne.s32.totalorder %s724, %s738
      %p740 = scmp.eq.s32.totalorder %s80, 0
      %p741 = por %p739, %p740
      %s743 = sadd.s32 %s742, 1
      %p746 = scmp.eq.s32.totalorder %s74, 1
      %p747 = scmp.ne.s32.totalorder %s742, %s744
      %p748 = scmp.eq.s32.totalorder %s74, 0
      %p749 = por %p747, %p748
      %p750 = scmp.ne.s32.totalorder %s742, %s744
      %p751 = scmp.eq.s32.totalorder %s79, 1
      %p752 = por %p750, %p751
      %p753 = scmp.ne.s32.totalorder %s744, %s745
      %p754 = scmp.eq.s32.totalorder %s79, 0
      %p755 = por %p753, %p754
      %p756 = scmp.ne.s32.totalorder %s744, %s745
      %p757 = scmp.eq.s32.totalorder %s80, 1
      %p758 = por %p756, %p757
      %p760 = scmp.ne.s32.totalorder %s745, %s759
      %p761 = scmp.eq.s32.totalorder %s80, 0
      %p762 = por %p760, %p761
      %s764 = sadd.s32 %s763, 1
      %p767 = scmp.eq.s32.totalorder %s74, 1
      %p768 = scmp.ne.s32.totalorder %s763, %s765
      %p769 = scmp.eq.s32.totalorder %s74, 0
      %p770 = por %p768, %p769
      %p771 = scmp.ne.s32.totalorder %s763, %s765
      %p772 = scmp.eq.s32.totalorder %s79, 1
      %p773 = por %p771, %p772
      %p774 = scmp.ne.s32.totalorder %s765, %s766
      %p775 = scmp.eq.s32.totalorder %s79, 0
      %p776 = por %p774, %p775
      %p777 = scmp.ne.s32.totalorder %s765, %s766
      %p778 = scmp.eq.s32.totalorder %s80, 1
      %p779 = por %p777, %p778
      %p781 = scmp.ne.s32.totalorder %s766, %s780
      %p782 = scmp.eq.s32.totalorder %s80, 0
      %p783 = por %p781, %p782
      %s785 = sadd.s32 %s784, 1
      %p788 = scmp.eq.s32.totalorder %s74, 1
      %p789 = scmp.ne.s32.totalorder %s784, %s786
      %p790 = scmp.eq.s32.totalorder %s74, 0
      %p791 = por %p789, %p790
      %p792 = scmp.ne.s32.totalorder %s784, %s786
      %p793 = scmp.eq.s32.totalorder %s79, 1
      %p794 = por %p792, %p793
      %p795 = scmp.ne.s32.totalorder %s786, %s787
      %p796 = scmp.eq.s32.totalorder %s79, 0
      %p797 = por %p795, %p796
      %p798 = scmp.ne.s32.totalorder %s786, %s787
      %p799 = scmp.eq.s32.totalorder %s80, 1
      %p800 = por %p798, %p799
      %p802 = scmp.ne.s32.totalorder %s787, %s801
      %p803 = scmp.eq.s32.totalorder %s80, 0
      %p804 = por %p802, %p803
      %s805 = ssub.s32 %s74, %s81
      %p806 = scmp.eq.s32.totalorder %s805, 0
      %s808 = sadd.s32 %s807, 1
      %s809 = scalar_select %p806, %s807, %s808
      %p812 = pneg %p806
      %p813 = scmp.eq.s32.totalorder %s74, 1
      %p814 = por %p812, %p813
      %p815 = scmp.ne.s32.totalorder %s807, %s810
      %p816 = scmp.eq.s32.totalorder %s74, 0
      %p817 = por %p815, %p816
      %p818 = scmp.ne.s32.totalorder %s807, %s810
      %p819 = scmp.eq.s32.totalorder %s79, 1
      %p820 = por %p818, %p819
      %p821 = scmp.ne.s32.totalorder %s810, %s811
      %p822 = scmp.eq.s32.totalorder %s79, 0
      %p823 = por %p821, %p822
      %p824 = scmp.ne.s32.totalorder %s810, %s811
      %p825 = scmp.eq.s32.totalorder %s80, 1
      %p826 = por %p824, %p825
      %p828 = scmp.ne.s32.totalorder %s811, %s827
      %p829 = scmp.eq.s32.totalorder %s80, 0
      %p830 = por %p828, %p829
      %p831 = scmp.le.s32.totalorder 1, %s74
      %p832 = scmp.lt.s32.totalorder %s74, 3
      %p833 = pnand %p831, %p832
      %p834 = pneg %p833
      // Predicated region
      $region9: #{text_conditioner_forward.1} parent=5 // pred_check
        _
      $region10: #{text_conditioner_forward.1} parent=5 // pred_check_branch
        %836 = sbr.rel (%p833) target = $region12
      $region11: #{text_conditioner_forward.1} parent=5 // pred_region
        %s837 = ssub.s32 %s74, 1
        // Predicated region
        $region13: #{text_conditioner_forward.1} parent=11 // pred_check
          %p838 = pneg %p95
        $region14: #{text_conditioner_forward.1} parent=11 // pred_check_branch
          %840 = sbr.rel (%p838) target = $region16
        $region15: #{text_conditioner_forward.1} parent=11 // pred_region
          %842 = vsyncadd [#allocation3], 0
          %s844 = sshll.u32 %s1, 4
          %s845 = int_to_ptr.vmem [resolvable:$true] %s844
          %847 = dma.vmem_to_smem %s845, 16, [#allocation2], [#allocation3]
        $region16: #{text_conditioner_forward.1} parent=11 // pred_fallthru
          _
        // Predicated region
        $region17: #{text_conditioner_forward.1} parent=11 // pred_check
          %p848 = pneg %p272
        $region18: #{text_conditioner_forward.1} parent=11 // pred_check_branch
          %850 = sbr.rel (%p848) target = $region20
        $region19: #{text_conditioner_forward.1} parent=11 // pred_region
          _
        $region20: #{text_conditioner_forward.1} parent=11 // pred_fallthru
          _
        // Predicated region
        $region21: #{text_conditioner_forward.1} parent=11 // pred_check
          %p851 = pneg %p293
        $region22: #{text_conditioner_forward.1} parent=11 // pred_check_branch
          %853 = sbr.rel (%p851) target = $region24
        $region23: #{text_conditioner_forward.1} parent=11 // pred_region
          _
        $region24: #{text_conditioner_forward.1} parent=11 // pred_fallthru
          _
        // Predicated region
        $region25: #{text_conditioner_forward.1} parent=11 // pred_check
          %p854 = pneg %p314
        $region26: #{text_conditioner_forward.1} parent=11 // pred_check_branch
          %856 = sbr.rel (%p854) target = $region28
        $region27: #{text_conditioner_forward.1} parent=11 // pred_region
          _
        $region28: #{text_conditioner_forward.1} parent=11 // pred_fallthru
          _
        // Predicated region
        $region29: #{text_conditioner_forward.1} parent=11 // pred_check
          %p857 = pneg %p335
        $region30: #{text_conditioner_forward.1} parent=11 // pred_check_branch
          %859 = sbr.rel (%p857) target = $region32
        $region31: #{text_conditioner_forward.1} parent=11 // pred_region
          _
        $region32: #{text_conditioner_forward.1} parent=11 // pred_fallthru
          _
        // Predicated region
        $region33: #{text_conditioner_forward.1} parent=11 // pred_check
          %p860 = pneg %p356
        $region34: #{text_conditioner_forward.1} parent=11 // pred_check_branch
          %862 = sbr.rel (%p860) target = $region36
        $region35: #{text_conditioner_forward.1} parent=11 // pred_region
          _
        $region36: #{text_conditioner_forward.1} parent=11 // pred_fallthru
          _
        // Predicated region
        $region37: #{text_conditioner_forward.1} parent=11 // pred_check
          %p863 = pneg %p377
        $region38: #{text_conditioner_forward.1} parent=11 // pred_check_branch
          %865 = sbr.rel (%p863) target = $region40
        $region39: #{text_conditioner_forward.1} parent=11 // pred_region
          _
        $region40: #{text_conditioner_forward.1} parent=11 // pred_fallthru
          _
        // Predicated region
        $region41: #{text_conditioner_forward.1} parent=11 // pred_check
          %p866 = pneg %p398
        $region42: #{text_conditioner_forward.1} parent=11 // pred_check_branch
          %868 = sbr.rel (%p866) target = $region44
        $region43: #{text_conditioner_forward.1} parent=11 // pred_region
          _
        $region44: #{text_conditioner_forward.1} parent=11 // pred_fallthru
          _
        // Predicated region
        $region45: #{text_conditioner_forward.1} parent=11 // pred_check
          %p869 = pneg %p419
        $region46: #{text_conditioner_forward.1} parent=11 // pred_check_branch
          %871 = sbr.rel (%p869) target = $region48
        $region47: #{text_conditioner_forward.1} parent=11 // pred_region
          _
        $region48: #{text_conditioner_forward.1} parent=11 // pred_fallthru
          _
        // Predicated region
        $region49: #{text_conditioner_forward.1} parent=11 // pred_check
          %p872 = pneg %p440
        $region50: #{text_conditioner_forward.1} parent=11 // pred_check_branch
          %874 = sbr.rel (%p872) target = $region52
        $region51: #{text_conditioner_forward.1} parent=11 // pred_region
          _
        $region52: #{text_conditioner_forward.1} parent=11 // pred_fallthru
          _
        // Predicated region
        $region53: #{text_conditioner_forward.1} parent=11 // pred_check
          %p875 = pneg %p461
        $region54: #{text_conditioner_forward.1} parent=11 // pred_check_branch
          %877 = sbr.rel (%p875) target = $region56
        $region55: #{text_conditioner_forward.1} parent=11 // pred_region
          _
        $region56: #{text_conditioner_forward.1} parent=11 // pred_fallthru
          _
        // Predicated region
        $region57: #{text_conditioner_forward.1} parent=11 // pred_check
          %p878 = pneg %p482
        $region58: #{text_conditioner_forward.1} parent=11 // pred_check_branch
          %880 = sbr.rel (%p878) target = $region60
        $region59: #{text_conditioner_forward.1} parent=11 // pred_region
          _
        $region60: #{text_conditioner_forward.1} parent=11 // pred_fallthru
          _
        // Predicated region
        $region61: #{text_conditioner_forward.1} parent=11 // pred_check
          %p881 = pneg %p503
        $region62: #{text_conditioner_forward.1} parent=11 // pred_check_branch
          %883 = sbr.rel (%p881) target = $region64
        $region63: #{text_conditioner_forward.1} parent=11 // pred_region
          _
        $region64: #{text_conditioner_forward.1} parent=11 // pred_fallthru
          _
        // Predicated region
        $region65: #{text_conditioner_forward.1} parent=11 // pred_check
          %p884 = pneg %p524
        $region66: #{text_conditioner_forward.1} parent=11 // pred_check_branch
          %886 = sbr.rel (%p884) target = $region68
        $region67: #{text_conditioner_forward.1} parent=11 // pred_region
          _
        $region68: #{text_conditioner_forward.1} parent=11 // pred_fallthru
          _
        // Predicated region
        $region69: #{text_conditioner_forward.1} parent=11 // pred_check
          %p887 = pneg %p545
        $region70: #{text_conditioner_forward.1} parent=11 // pred_check_branch
          %889 = sbr.rel (%p887) target = $region72
        $region71: #{text_conditioner_forward.1} parent=11 // pred_region
          _
        $region72: #{text_conditioner_forward.1} parent=11 // pred_fallthru
          _
        // Predicated region
        $region73: #{text_conditioner_forward.1} parent=11 // pred_check
          %p890 = pneg %p566
        $region74: #{text_conditioner_forward.1} parent=11 // pred_check_branch
          %892 = sbr.rel (%p890) target = $region76
        $region75: #{text_conditioner_forward.1} parent=11 // pred_region
          _
        $region76: #{text_conditioner_forward.1} parent=11 // pred_fallthru
          _
        // Predicated region
        $region77: #{text_conditioner_forward.1} parent=11 // pred_check
          %p893 = pneg %p587
        $region78: #{text_conditioner_forward.1} parent=11 // pred_check_branch
          %895 = sbr.rel (%p893) target = $region80
        $region79: #{text_conditioner_forward.1} parent=11 // pred_region
          _
        $region80: #{text_conditioner_forward.1} parent=11 // pred_fallthru
          _
        // Predicated region
        $region81: #{text_conditioner_forward.1} parent=11 // pred_check
          %p896 = pneg %p608
        $region82: #{text_conditioner_forward.1} parent=11 // pred_check_branch
          %898 = sbr.rel (%p896) target = $region84
        $region83: #{text_conditioner_forward.1} parent=11 // pred_region
          _
        $region84: #{text_conditioner_forward.1} parent=11 // pred_fallthru
          _
        // Predicated region
        $region85: #{text_conditioner_forward.1} parent=11 // pred_check
          %p899 = pneg %p629
        $region86: #{text_conditioner_forward.1} parent=11 // pred_check_branch
          %901 = sbr.rel (%p899) target = $region88
        $region87: #{text_conditioner_forward.1} parent=11 // pred_region
          _
        $region88: #{text_conditioner_forward.1} parent=11 // pred_fallthru
          _
        // Predicated region
        $region89: #{text_conditioner_forward.1} parent=11 // pred_check
          %p902 = pneg %p650
        $region90: #{text_conditioner_forward.1} parent=11 // pred_check_branch
          %904 = sbr.rel (%p902) target = $region92
        $region91: #{text_conditioner_forward.1} parent=11 // pred_region
          _
        $region92: #{text_conditioner_forward.1} parent=11 // pred_fallthru
          _
        // Predicated region
        $region93: #{text_conditioner_forward.1} parent=11 // pred_check
          %p905 = pneg %p671
        $region94: #{text_conditioner_forward.1} parent=11 // pred_check_branch
          %907 = sbr.rel (%p905) target = $region96
        $region95: #{text_conditioner_forward.1} parent=11 // pred_region
          _
        $region96: #{text_conditioner_forward.1} parent=11 // pred_fallthru
          _
        // Predicated region
        $region97: #{text_conditioner_forward.1} parent=11 // pred_check
          %p908 = pneg %p692
        $region98: #{text_conditioner_forward.1} parent=11 // pred_check_branch
          %910 = sbr.rel (%p908) target = $region100
        $region99: #{text_conditioner_forward.1} parent=11 // pred_region
          _
        $region100: #{text_conditioner_forward.1} parent=11 // pred_fallthru
          _
        // Predicated region
        $region101: #{text_conditioner_forward.1} parent=11 // pred_check
          %p911 = pneg %p713
        $region102: #{text_conditioner_forward.1} parent=11 // pred_check_branch
          %913 = sbr.rel (%p911) target = $region104
        $region103: #{text_conditioner_forward.1} parent=11 // pred_region
          _
        $region104: #{text_conditioner_forward.1} parent=11 // pred_fallthru
          _
        // Predicated region
        $region105: #{text_conditioner_forward.1} parent=11 // pred_check
          %p914 = pneg %p734
        $region106: #{text_conditioner_forward.1} parent=11 // pred_check_branch
          %916 = sbr.rel (%p914) target = $region108
        $region107: #{text_conditioner_forward.1} parent=11 // pred_region
          _
        $region108: #{text_conditioner_forward.1} parent=11 // pred_fallthru
          _
        // Predicated region
        $region109: #{text_conditioner_forward.1} parent=11 // pred_check
          %p917 = pneg %p755
        $region110: #{text_conditioner_forward.1} parent=11 // pred_check_branch
          %919 = sbr.rel (%p917) target = $region112
        $region111: #{text_conditioner_forward.1} parent=11 // pred_region
          _
        $region112: #{text_conditioner_forward.1} parent=11 // pred_fallthru
          _
        // Predicated region
        $region113: #{text_conditioner_forward.1} parent=11 // pred_check
          %p920 = pneg %p776
        $region114: #{text_conditioner_forward.1} parent=11 // pred_check_branch
          %922 = sbr.rel (%p920) target = $region116
        $region115: #{text_conditioner_forward.1} parent=11 // pred_region
          _
        $region116: #{text_conditioner_forward.1} parent=11 // pred_fallthru
          _
        // Predicated region
        $region117: #{text_conditioner_forward.1} parent=11 // pred_check
          %p923 = pneg %p797
        $region118: #{text_conditioner_forward.1} parent=11 // pred_check_branch
          %925 = sbr.rel (%p923) target = $region120
        $region119: #{text_conditioner_forward.1} parent=11 // pred_region
          _
        $region120: #{text_conditioner_forward.1} parent=11 // pred_fallthru
          _
      $region12: #{text_conditioner_forward.1} parent=5 // pred_fallthru
        _
      %p926 = scmp.lt.s32.totalorder %s74, 2
      // Predicated region
      $region121: #{text_conditioner_forward.1} parent=5 // pred_check
        %p927 = pneg %p926
      $region122: #{text_conditioner_forward.1} parent=5 // pred_check_branch
        %929 = sbr.rel (%p927) target = $region124
      $region123: #{text_conditioner_forward.1} parent=5 // pred_region
        // Predicated region
        $region125: #{text_conditioner_forward.1} parent=123 // pred_check
          %p930 = pneg %p115
        $region126: #{text_conditioner_forward.1} parent=123 // pred_check_branch
          %932 = sbr.rel (%p930) target = $region128
        $region127: #{text_conditioner_forward.1} parent=123 // pred_region
          %p933 = scmp.lt.s32.totalorder %s74, 1
          %s934 = scalar_select %p933, %s74, 1
          %s935 = smul.addr %s934, 4
          %s936 = smul.addr %s935, 8
          %s937 = scalar_lea.vmem %s3, %s936
        $region128: #{text_conditioner_forward.1} parent=123 // pred_fallthru
          _
        // Predicated region
        $region129: #{text_conditioner_forward.1} parent=123 // pred_check
          %p938 = pneg %p141
        $region130: #{text_conditioner_forward.1} parent=123 // pred_check_branch
          %940 = sbr.rel (%p938) target = $region132
        $region131: #{text_conditioner_forward.1} parent=123 // pred_region
          %p941 = scmp.lt.s32.totalorder %s74, 1
          %s942 = scalar_select %p941, %s74, 1
          %s943 = scalar_lea.vmem %s5, %s942
        $region132: #{text_conditioner_forward.1} parent=123 // pred_fallthru
          _
        // Predicated region
        $region133: #{text_conditioner_forward.1} parent=123 // pred_check
          %p944 = pneg %p167
        $region134: #{text_conditioner_forward.1} parent=123 // pred_check_branch
          %946 = sbr.rel (%p944) target = $region136
        $region135: #{text_conditioner_forward.1} parent=123 // pred_region
          %p947 = scmp.lt.s32.totalorder %s74, 1
          %s948 = scalar_select %p947, %s74, 1
          %s949 = smul.addr %s948, 8
          %s950 = scalar_lea.vmem %s7, %s949
        $region136: #{text_conditioner_forward.1} parent=123 // pred_fallthru
          _
        // Predicated region
        $region137: #{text_conditioner_forward.1} parent=123 // pred_check
          %p951 = pneg %p193
        $region138: #{text_conditioner_forward.1} parent=123 // pred_check_branch
          %953 = sbr.rel (%p951) target = $region140
        $region139: #{text_conditioner_forward.1} parent=123 // pred_region
          %p954 = scmp.lt.s32.totalorder %s74, 1
          %s955 = scalar_select %p954, %s74, 1
          %s956 = smul.addr %s955, 8
          %s957 = scalar_lea.vmem %s9, %s956
        $region140: #{text_conditioner_forward.1} parent=123 // pred_fallthru
          _
        // Predicated region
        $region141: #{text_conditioner_forward.1} parent=123 // pred_check
          %p958 = pneg %p219
        $region142: #{text_conditioner_forward.1} parent=123 // pred_check_branch
          %960 = sbr.rel (%p958) target = $region144
        $region143: #{text_conditioner_forward.1} parent=123 // pred_region
          %p961 = scmp.lt.s32.totalorder %s74, 1
          %s962 = scalar_select %p961, %s74, 1
          %s963 = scalar_lea.vmem %s11, %s962
        $region144: #{text_conditioner_forward.1} parent=123 // pred_fallthru
          _
        // Predicated region
        $region145: #{text_conditioner_forward.1} parent=123 // pred_check
          %p964 = pneg %p245
        $region146: #{text_conditioner_forward.1} parent=123 // pred_check_branch
          %966 = sbr.rel (%p964) target = $region148
        $region147: #{text_conditioner_forward.1} parent=123 // pred_region
          %p967 = scmp.lt.s32.totalorder %s74, 1
          %s968 = scalar_select %p967, %s74, 1
          %s969 = smul.addr %s968, 2
          %s970 = smul.addr %s969, 8
          %s971 = scalar_lea.vmem %s13, %s970
        $region148: #{text_conditioner_forward.1} parent=123 // pred_fallthru
          _
      $region124: #{text_conditioner_forward.1} parent=5 // pred_fallthru
        _
      %p972 = scmp.le.s32.totalorder 1, %s74
      %p973 = scmp.lt.s32.totalorder %s74, 3
      %p974 = pnand %p972, %p973
      %p975 = pneg %p974
      // Predicated region
      $region149: #{text_conditioner_forward.1} parent=5 // pred_check
        _
      $region150: #{text_conditioner_forward.1} parent=5 // pred_check_branch
        %977 = sbr.rel (%p974) target = $region152
      $region151: #{text_conditioner_forward.1} parent=5 // pred_region
        %s978 = ssub.s32 %s74, 1
        // Predicated region
        $region153: #{text_conditioner_forward.1} parent=151 // pred_check
          %p979 = pneg %p95
        $region154: #{text_conditioner_forward.1} parent=151 // pred_check_branch
          %981 = sbr.rel (%p979) target = $region156
        $region155: #{text_conditioner_forward.1} parent=151 // pred_region
          %983 = dma.done [#allocation3], 16
        $region156: #{text_conditioner_forward.1} parent=151 // pred_fallthru
          _
        %984 = sfence
        %p985 = pneg %p95
        %p986 = pneg %p92
        %p987 = scmp.lt.s32.totalorder %s79, 1
        %s988 = scalar_select %p987, %s79, 1
        %s989 = smul.addr %s988, 4
        %s990 = smul.addr %s989, 8
        %s991 = scalar_lea.vmem %s3, %s990
        %p992 = pneg %p121
        %p993 = pneg %p118
        %p994 = scmp.lt.s32.totalorder %s79, 1
        %s995 = scalar_select %p994, %s79, 1
        %s996 = scalar_lea.vmem %s5, %s995
        %p997 = pneg %p147
        %p998 = pneg %p144
        %p999 = scmp.lt.s32.totalorder %s79, 1
        %s1000 = scalar_select %p999, %s79, 1
        %s1001 = smul.addr %s1000, 8
        %s1002 = scalar_lea.vmem %s7, %s1001
        %p1003 = pneg %p173
        %p1004 = pneg %p170
        %p1005 = scmp.lt.s32.totalorder %s79, 1
        %s1006 = scalar_select %p1005, %s79, 1
        %s1007 = smul.addr %s1006, 8
        %s1008 = scalar_lea.vmem %s9, %s1007
        %p1009 = pneg %p199
        %p1010 = pneg %p196
        %p1011 = scmp.lt.s32.totalorder %s79, 1
        %s1012 = scalar_select %p1011, %s79, 1
        %s1013 = scalar_lea.vmem %s11, %s1012
        %p1014 = pneg %p225
        %p1015 = pneg %p222
        %p1016 = scmp.lt.s32.totalorder %s79, 1
        %s1017 = scalar_select %p1016, %s79, 1
        %s1018 = smul.addr %s1017, 2
        %s1019 = smul.addr %s1018, 8
        %s1020 = scalar_lea.vmem %s13, %s1019
        %p1021 = pneg %p251
        %p1022 = pneg %p248
        %p1023 = pneg %p272
        %p1024 = pneg %p269
        %p1025 = pneg %p293
        %p1026 = pneg %p290
        %p1027 = pneg %p314
        %p1028 = pneg %p311
        %p1029 = pneg %p335
        %p1030 = pneg %p332
        %p1031 = pneg %p356
        %p1032 = pneg %p353
        %p1033 = pneg %p377
        %p1034 = pneg %p374
        %p1035 = pneg %p398
        %p1036 = pneg %p395
        %p1037 = pneg %p419
        %p1038 = pneg %p416
        %p1039 = pneg %p440
        %p1040 = pneg %p437
        %p1041 = pneg %p461
        %p1042 = pneg %p458
        %p1043 = pneg %p482
        %p1044 = pneg %p479
        %p1045 = pneg %p503
        %p1046 = pneg %p500
        %p1047 = pneg %p524
        %p1048 = pneg %p521
        %p1049 = pneg %p545
        %p1050 = pneg %p542
        %p1051 = pneg %p566
        %p1052 = pneg %p563
        %p1053 = pneg %p587
        %p1054 = pneg %p584
        %p1055 = pneg %p608
        %p1056 = pneg %p605
        %p1057 = pneg %p629
        %p1058 = pneg %p626
        %p1059 = pneg %p650
        %p1060 = pneg %p647
        %p1061 = pneg %p671
        %p1062 = pneg %p668
        %p1063 = pneg %p692
        %p1064 = pneg %p689
        %p1065 = pneg %p713
        %p1066 = pneg %p710
        %p1067 = pneg %p734
        %p1068 = pneg %p731
        %p1069 = pneg %p755
        %p1070 = pneg %p752
        %p1071 = pneg %p776
        %p1072 = pneg %p773
        %p1073 = pneg %p797
        %p1074 = pneg %p794
        %p1075 = pneg %p823
        %p1076 = pneg %p820
        %p1077 = scmp.lt.s32.totalorder %s79, 1
        %s1078 = scalar_select %p1077, %s79, 1
        %s1079 = smul.addr %s1078, 4
        %s1080 = smul.addr %s1079, 8
        %s1081 = scalar_lea.vmem %s67, %s1080
        %p1082 = scmp.lt.s32.totalorder %s79, 1
        %s1083 = scalar_select %p1082, %s79, 1
        %s1084 = smul.addr %s1083, 4
        %s1085 = smul.addr %s1084, 8
        %s1086 = scalar_lea.vmem %s3, %s1085
        %p1087 = scmp.lt.s32.totalorder %s79, 1
        %s1088 = scalar_select %p1087, %s79, 1
        %s1089 = scalar_lea.vmem %s5, %s1088
        %p1090 = scmp.lt.s32.totalorder %s79, 1
        %s1091 = scalar_select %p1090, %s79, 1
        %s1092 = smul.addr %s1091, 8
        %s1093 = scalar_lea.vmem %s7, %s1092
        %p1094 = scmp.lt.s32.totalorder %s79, 1
        %s1095 = scalar_select %p1094, %s79, 1
        %s1096 = smul.addr %s1095, 8
        %s1097 = scalar_lea.vmem %s9, %s1096
        %p1098 = scmp.lt.s32.totalorder %s79, 1
        %s1099 = scalar_select %p1098, %s79, 1
        %s1100 = scalar_lea.vmem %s11, %s1099
        %p1101 = scmp.lt.s32.totalorder %s79, 1
        %s1102 = scalar_select %p1101, %s79, 1
        %s1103 = smul.addr %s1102, 2
        %s1104 = smul.addr %s1103, 8
        %s1105 = scalar_lea.vmem %s13, %s1104
        %p1106 = scmp.lt.s32.totalorder %s79, 1
        %s1107 = scalar_select %p1106, %s79, 1
        %s1108 = smul.addr %s1107, 4
        %s1109 = smul.addr %s1108, 8
        %s1110 = scalar_lea.vmem %s67, %s1109
        %s1111 = sld [smem:[#allocation2]]
        %s1112 = sld [smem:[#allocation2 + $0x1]]
        %s1113 = sld [smem:[#allocation2 + $0x2]]
        %v1114 = vld [vmem:[%s1086] sm:$0xff]
        %v1115 = vld [vmem:[%s1086 + $0x8] sm:$0xff]
        %v1116 = vld [vmem:[%s1086 + $0x10] sm:$0xff]
        %v1117 = vld [vmem:[%s1086 + $0x18] sm:$0xff]
        %v1118 = vlaneseq
        %v1119 = vshrl.u32 %v1118, 7
        %v1120 = vadd.s32 %v1119, 8
        %v1121 = vlaneseq
        %v1122 = vand.u32 %v1121, 127
        %vm1123 = vcmp.eq.s32.totalorder %v1119, %v1122
        %vm1124 = vcmp.eq.s32.totalorder %v1120, %v1122
        %v1125 = vsel %vm1123, 1, 0
        %v1126 = vsel %vm1124, 1, 0
        %v1127 = vcvt.s32.f32 %v1125
        %v1128 = vcvt.s32.f32 %v1126
        %vm1129 = vcmask 130048
        %v1131 = vsel %vm1129, %v1127, 0
        %v1134 = vsel %vm1129, %v1128, 0
        %v1137 = vsel %vm1129, %v1114, 0
        %v1140 = vsel %vm1129, %v1115, 0
        %v1143 = vsel %vm1129, %v1116, 0
        %v1146 = vsel %vm1129, %v1117, 0
        %1148 = vmatpush.xpose.msra.mxu0 0.0
        %1149 = vmatpush.xpose.msra.mxu0 0.0
        %1150 = vmatpush.xpose.msra.mxu0 0.0
        %1151 = vmatpush.xpose.msra.mxu0 0.0
        %1152 = vmatpush.xpose.msra.mxu0 0.0
        %1153 = vmatpush.xpose.msra.mxu0 0.0
        %1154 = vmatpush.xpose.msra.mxu0 0.0
        %1155 = vmatpush.xpose.msra.mxu0 0.0
        %1156 = vmatpush.xpose.msra.mxu0 0.0
        %1157 = vmatpush.xpose.msra.mxu0 0.0
        %1158 = vmatpush.xpose.msra.mxu0 0.0
        %1159 = vmatpush.xpose.msra.mxu0 0.0
        %1160 = vmatpush.xpose.msra.mxu0 %v1146
        %1161 = vmatpush.xpose.msra.mxu0 %v1143
        %1162 = vmatpush.xpose.msra.mxu0 %v1140
        %1163 = vmatpush.xpose.msra.mxu0 %v1137
        %1164 = vmatmul.f32.gmra.mxu0 %v1131
        %v1165 = vpop.f32.mrf.mxu0
        %v1166 = vadd.f32 0.0, %v1165
        %1167 = vmatmul.f32.gmra.mxu0 %v1134
        %v1168 = vpop.f32.mrf.mxu0
        %v1169 = vadd.f32 0.0, %v1168
        %1170 = vdwg.mxu0
        %v1171 = vld [vmem:[%s1089] sm:$0x1]
        %v1172 = vld [vmem:[%s19] sm:$0xff]
        %v1173 = vld [vmem:[%s19 + $0x8] sm:$0xff]
        %v1174 = vld [vmem:[%s19 + $0x10] sm:$0xff]
        %v1175 = vld [vmem:[%s19 + $0x18] sm:$0xff]
        %v1176 = vld [vmem:[%s21] sm:$0x1]
        %v1178 = vsel %vm1129, %v1171, 0
        %v1181 = vsel %vm1129, %v1172, 0
        %v1184 = vsel %vm1129, %v1173, 0
        %v1187 = vsel %vm1129, %v1174, 0
        %v1190 = vsel %vm1129, %v1175, 0
        %1192 = vmatpush.xpose.msra.mxu0 0.0
        %1193 = vmatpush.xpose.msra.mxu0 0.0
        %1194 = vmatpush.xpose.msra.mxu0 0.0
        %1195 = vmatpush.xpose.msra.mxu0 0.0
        %1196 = vmatpush.xpose.msra.mxu0 0.0
        %1197 = vmatpush.xpose.msra.mxu0 0.0
        %1198 = vmatpush.xpose.msra.mxu0 0.0
        %1199 = vmatpush.xpose.msra.mxu0 0.0
        %1200 = vmatpush.xpose.msra.mxu0 0.0
        %1201 = vmatpush.xpose.msra.mxu0 0.0
        %1202 = vmatpush.xpose.msra.mxu0 0.0
        %1203 = vmatpush.xpose.msra.mxu0 0.0
        %1204 = vmatpush.xpose.msra.mxu0 %v1190
        %1205 = vmatpush.xpose.msra.mxu0 %v1187
        %1206 = vmatpush.xpose.msra.mxu0 %v1184
        %1207 = vmatpush.xpose.msra.mxu0 %v1181
        %1208 = vmatmul.f32.gmra.mxu0 %v1178
        %v1209 = vpop.f32.mrf.mxu0
        %v1210 = vadd.f32 %v1176, %v1209
        %1211 = vdwg.mxu0
        %v1212 = vld [vmem:[%s23] sm:$0xff]
        %v1213 = vld [vmem:[%s23 + $0x8] sm:$0xff]
        %v1214 = vld [vmem:[%s23 + $0x10] sm:$0xff]
        %v1215 = vld [vmem:[%s23 + $0x18] sm:$0xff]
        %v1216 = vld [vmem:[%s25] sm:$0x1]
        %v1218 = vsel %vm1129, %v1212, 0
        %v1221 = vsel %vm1129, %v1213, 0
        %v1224 = vsel %vm1129, %v1214, 0
        %v1227 = vsel %vm1129, %v1215, 0
        %1229 = vmatpush.xpose.msra.mxu0 0.0
        %1230 = vmatpush.xpose.msra.mxu0 0.0
        %1231 = vmatpush.xpose.msra.mxu0 0.0
        %1232 = vmatpush.xpose.msra.mxu0 0.0
        %1233 = vmatpush.xpose.msra.mxu0 0.0
        %1234 = vmatpush.xpose.msra.mxu0 0.0
        %1235 = vmatpush.xpose.msra.mxu0 0.0
        %1236 = vmatpush.xpose.msra.mxu0 0.0
        %1237 = vmatpush.xpose.msra.mxu0 0.0
        %1238 = vmatpush.xpose.msra.mxu0 0.0
        %1239 = vmatpush.xpose.msra.mxu0 0.0
        %1240 = vmatpush.xpose.msra.mxu0 0.0
        %1241 = vmatpush.xpose.msra.mxu0 %v1227
        %1242 = vmatpush.xpose.msra.mxu0 %v1224
        %1243 = vmatpush.xpose.msra.mxu0 %v1221
        %1244 = vmatpush.xpose.msra.mxu0 %v1218
        %1245 = vmatmul.f32.gmra.mxu0 %v1178
        %v1246 = vpop.f32.mrf.mxu0
        %v1247 = vadd.f32 %v1216, %v1246
        %1248 = vdwg.mxu0
        %v1249 = vrcp.pop 300.0
        %v1250 = vmul.f32 300.0, %v1249
        %v1251 = vsub.f32 1.0, %v1250
        %v1252 = vmul.f32 %v1249, %v1251
        %v1253 = vadd.f32 %v1249, %v1252
        %vm1254 = vweird.f32 %v1249
        %v1255 = vsel %vm1254, %v1249, %v1253
        %v1256 = vmul.f32 %v1210, %v1255
        %v1257 = vtanh.pop %v1256
        %v1258 = vmul.f32 %v1257, 300.0
        %v1259 = vmul.f32 %v1247, %v1255
        %v1260 = vtanh.pop %v1259
        %v1261 = vmul.f32 %v1260, 300.0
        %v1262 = vperm.slane %v1258, 0
        %v1263 = vmul.f32 %v1262, %v1166
        %v1264 = vmul.f32 %v1262, %v1169
        %v1265 = vperm.slane %v1261, 0
        %v1266 = vadd.f32 %v1263, %v1265
        %v1267 = vadd.f32 %v1264, %v1265
        %v1268 = vstv %s1111
        %v1269 = vmul.f32 %v1268, %v1266
        %v1270 = vmul.f32 %v1268, %v1267
        %v1271 = vld [vmem:[%s27] sm:$0xff]
        %v1272 = vld [vmem:[%s27 + $0x8] sm:$0xff]
        %v1273 = vld [vmem:[%s27 + $0x10] sm:$0xff]
        %v1274 = vld [vmem:[%s27 + $0x18] sm:$0xff]
        %v1275 = vld [vmem:[%s27 + $0x20] sm:$0xff]
        %v1276 = vld [vmem:[%s27 + $0x28] sm:$0xff]
        %v1277 = vld [vmem:[%s27 + $0x30] sm:$0xff]
        %v1278 = vld [vmem:[%s27 + $0x38] sm:$0xff]
        %v1279 = vld [vmem:[%s29] sm:$0x1]
        %v1281 = vperm.slane %v1279, 0
        %vm1283 = vcmask 261120
        %v1285 = vsel %vm1283, %v1269, 0
        %v1288 = vsel %vm1283, %v1270, 0
        %v1291 = vsel %vm1283, %v1271, 0
        %v1294 = vsel %vm1283, %v1272, 0
        %v1297 = vsel %vm1283, %v1273, 0
        %v1300 = vsel %vm1283, %v1274, 0
        %v1303 = vsel %vm1283, %v1275, 0
        %v1306 = vsel %vm1283, %v1276, 0
        %v1309 = vsel %vm1283, %v1277, 0
        %v1312 = vsel %vm1283, %v1278, 0
        %1314 = vmatpush.xpose.msra.mxu0 0.0
        %1315 = vmatpush.xpose.msra.mxu0 0.0
        %1316 = vmatpush.xpose.msra.mxu0 0.0
        %1317 = vmatpush.xpose.msra.mxu0 0.0
        %1318 = vmatpush.xpose.msra.mxu0 0.0
        %1319 = vmatpush.xpose.msra.mxu0 0.0
        %1320 = vmatpush.xpose.msra.mxu0 0.0
        %1321 = vmatpush.xpose.msra.mxu0 0.0
        %1322 = vmatpush.xpose.msra.mxu0 %v1312
        %1323 = vmatpush.xpose.msra.mxu0 %v1309
        %1324 = vmatpush.xpose.msra.mxu0 %v1306
        %1325 = vmatpush.xpose.msra.mxu0 %v1303
        %1326 = vmatpush.xpose.msra.mxu0 %v1300
        %1327 = vmatpush.xpose.msra.mxu0 %v1297
        %1328 = vmatpush.xpose.msra.mxu0 %v1294
        %1329 = vmatpush.xpose.msra.mxu0 %v1291
        %1330 = vmatmul.f32.gmra.mxu0 %v1285
        %v1331 = vpop.f32.mrf.mxu0
        %v1332 = vadd.f32 %v1281, %v1331
        %1333 = vmatmul.f32.gmra.mxu0 %v1288
        %v1334 = vpop.f32.mrf.mxu0
        %v1335 = vadd.f32 %v1281, %v1334
        %1336 = vdwg.mxu0
        %v1337 = vld [vmem:[%s15] sm:$0xff]
        %v1338 = vld [vmem:[%s15 + $0x8] sm:$0xff]
        %v1339 = vld [vmem:[%s17] sm:$0xff]
        %v1340 = vld [vmem:[%s17 + $0x8] sm:$0xff]
        %v1341 = vmul.f32 %v1332, %v1337
        %v1342 = vmul.f32 %v1335, %v1338
        %1345 = vrot.lane.b32.xlu0 %v1339, 32
        %v1346 = vpop.permute.xlu0 %1345
        %1347 = vrot.lane.b32.xlu0 %v1340, 32
        %v1348 = vpop.permute.xlu0 %1347
        %v1351 = vmul.f32 %v1332, %v1346
        %v1352 = vmul.f32 %v1335, %v1348
        %1355 = vrot.lane.b32.xlu0 %v1351, 96
        %v1356 = vpop.permute.xlu0 %1355
        %1357 = vrot.lane.b32.xlu0 %v1352, 96
        %v1358 = vpop.permute.xlu0 %1357
        %v1361 = vsub.f32 %v1341, %v1356
        %v1362 = vsub.f32 %v1342, %v1358
        %v1363 = vmul.f32 %v1332, %v1339
        %v1364 = vmul.f32 %v1335, %v1340
        %1367 = vrot.lane.b32.xlu0 %v1337, 32
        %v1368 = vpop.permute.xlu0 %1367
        %1369 = vrot.lane.b32.xlu0 %v1338, 32
        %v1370 = vpop.permute.xlu0 %1369
        %v1373 = vmul.f32 %v1332, %v1368
        %v1374 = vmul.f32 %v1335, %v1370
        %1377 = vrot.lane.b32.xlu0 %v1373, 96
        %v1378 = vpop.permute.xlu0 %1377
        %1379 = vrot.lane.b32.xlu0 %v1374, 96
        %v1380 = vpop.permute.xlu0 %1379
        %v1383 = vadd.f32 %v1363, %v1378
        %v1384 = vadd.f32 %v1364, %v1380
        %1387 = vrot.lane.b32.xlu0 %v1383, 32
        %v1388 = vpop.permute.xlu0 %1387
        %1389 = vrot.lane.b32.xlu0 %v1384, 32
        %v1390 = vpop.permute.xlu0 %1389
        %v1393 = vsel %vm1283, %v1361, %v1388
        %v1394 = vsel %vm1283, %v1362, %v1390
        %v1395 = vld [vmem:[%s1105] sm:$0xff]
        %v1396 = vld [vmem:[%s1105 + $0x8] sm:$0xff]
        %1398 = vset.pattern.permute.xlu0 0
        %1399 = vperm.xlu0 %1398, %v1395
        %v1400 = vpop.permute.xlu0 %1399
        %1403 = vset.pattern.permute.xlu0 0
        %1404 = vperm.xlu0 %1403, %v1396
        %v1405 = vpop.permute.xlu0 %1404
        %v1407 = vmul.f32 %v1393, %v1400
        %v1408 = vmul.f32 %v1394, %v1405
        %v1409 = vld [vmem:[%s1093] sm:$0xff]
        %v1410 = vld [vmem:[%s1097] sm:$0xff]
        %1412 = vset.pattern.permute.xlu0 0
        %1413 = vperm.xlu0 %1412, %v1410
        %v1414 = vpop.permute.xlu0 %1413
        %v1416 = vmul.f32 %v1409, %v1414
        %v1417 = vld [vmem:[%s1100] sm:$0x1]
        %v1418 = vstv %s1112
        %v1419 = vmul.f32 %v1407, %v1418
        %v1420 = vmul.f32 %v1408, %v1418
        %v1421 = vld [vmem:[%s31] sm:$0xff]
        %v1422 = vld [vmem:[%s31 + $0x8] sm:$0xff]
        %v1423 = vld [vmem:[%s31 + $0x10] sm:$0xff]
        %v1424 = vld [vmem:[%s31 + $0x18] sm:$0xff]
        %v1425 = vld [vmem:[%s31 + $0x20] sm:$0xff]
        %v1426 = vld [vmem:[%s31 + $0x28] sm:$0xff]
        %v1427 = vld [vmem:[%s31 + $0x30] sm:$0xff]
        %v1428 = vld [vmem:[%s31 + $0x38] sm:$0xff]
        %v1429 = vld [vmem:[%s33] sm:$0x1]
        %v1431 = vperm.slane %v1429, 0
        %vm1433 = vcmask 523264
        %v1435 = vsel %vm1433, %v1419, 0
        %v1438 = vsel %vm1433, %v1420, 0
        %v1441 = vsel %vm1433, %v1421, 0
        %v1444 = vsel %vm1433, %v1422, 0
        %v1447 = vsel %vm1433, %v1423, 0
        %v1450 = vsel %vm1433, %v1424, 0
        %v1453 = vsel %vm1433, %v1425, 0
        %v1456 = vsel %vm1433, %v1426, 0
        %v1459 = vsel %vm1433, %v1427, 0
        %v1462 = vsel %vm1433, %v1428, 0
        %1464 = vmatpush.xpose.msra.mxu0 0.0
        %1465 = vmatpush.xpose.msra.mxu0 0.0
        %1466 = vmatpush.xpose.msra.mxu0 0.0
        %1467 = vmatpush.xpose.msra.mxu0 0.0
        %1468 = vmatpush.xpose.msra.mxu0 0.0
        %1469 = vmatpush.xpose.msra.mxu0 0.0
        %1470 = vmatpush.xpose.msra.mxu0 0.0
        %1471 = vmatpush.xpose.msra.mxu0 0.0
        %1472 = vmatpush.xpose.msra.mxu0 %v1462
        %1473 = vmatpush.xpose.msra.mxu0 %v1459
        %1474 = vmatpush.xpose.msra.mxu0 %v1456
        %1475 = vmatpush.xpose.msra.mxu0 %v1453
        %1476 = vmatpush.xpose.msra.mxu0 %v1450
        %1477 = vmatpush.xpose.msra.mxu0 %v1447
        %1478 = vmatpush.xpose.msra.mxu0 %v1444
        %1479 = vmatpush.xpose.msra.mxu0 %v1441
        %1480 = vmatmul.f32.gmra.mxu0 %v1435
        %v1481 = vpop.f32.mrf.mxu0
        %v1482 = vadd.f32 %v1431, %v1481
        %1483 = vmatmul.f32.gmra.mxu0 %v1438
        %v1484 = vpop.f32.mrf.mxu0
        %v1485 = vadd.f32 %v1431, %v1484
        %1486 = vdwg.mxu0
        %v1487 = vld [vmem:[%s35] sm:$0xff]
        %v1488 = vld [vmem:[%s35 + $0x8] sm:$0xff]
        %v1489 = vld [vmem:[%s35 + $0x10] sm:$0xff]
        %v1490 = vld [vmem:[%s35 + $0x18] sm:$0xff]
        %v1491 = vld [vmem:[%s35 + $0x20] sm:$0xff]
        %v1492 = vld [vmem:[%s35 + $0x28] sm:$0xff]
        %v1493 = vld [vmem:[%s35 + $0x30] sm:$0xff]
        %v1494 = vld [vmem:[%s35 + $0x38] sm:$0xff]
        %v1495 = vld [vmem:[%s37] sm:$0x1]
        %v1497 = vperm.slane %v1495, 0
        %v1500 = vsel %vm1433, %v1416, 0
        %v1503 = vsel %vm1433, %v1487, 0
        %v1506 = vsel %vm1433, %v1488, 0
        %v1509 = vsel %vm1433, %v1489, 0
        %v1512 = vsel %vm1433, %v1490, 0
        %v1515 = vsel %vm1433, %v1491, 0
        %v1518 = vsel %vm1433, %v1492, 0
        %v1521 = vsel %vm1433, %v1493, 0
        %v1524 = vsel %vm1433, %v1494, 0
        %1526 = vmatpush.xpose.msra.mxu0 0.0
        %1527 = vmatpush.xpose.msra.mxu0 0.0
        %1528 = vmatpush.xpose.msra.mxu0 0.0
        %1529 = vmatpush.xpose.msra.mxu0 0.0
        %1530 = vmatpush.xpose.msra.mxu0 0.0
        %1531 = vmatpush.xpose.msra.mxu0 0.0
        %1532 = vmatpush.xpose.msra.mxu0 0.0
        %1533 = vmatpush.xpose.msra.mxu0 0.0
        %1534 = vmatpush.xpose.msra.mxu0 %v1524
        %1535 = vmatpush.xpose.msra.mxu0 %v1521
        %1536 = vmatpush.xpose.msra.mxu0 %v1518
        %1537 = vmatpush.xpose.msra.mxu0 %v1515
        %1538 = vmatpush.xpose.msra.mxu0 %v1512
        %1539 = vmatpush.xpose.msra.mxu0 %v1509
        %1540 = vmatpush.xpose.msra.mxu0 %v1506
        %1541 = vmatpush.xpose.msra.mxu0 %v1503
        %1542 = vmatmul.f32.gmra.mxu0 %v1500
        %v1543 = vpop.f32.mrf.mxu0
        %v1544 = vadd.f32 %v1497, %v1543
        %1545 = vdwg.mxu0
        %v1546 = vld [vmem:[%s39] sm:$0xff]
        %v1547 = vld [vmem:[%s39 + $0x8] sm:$0xff]
        %v1548 = vld [vmem:[%s39 + $0x10] sm:$0xff]
        %v1549 = vld [vmem:[%s39 + $0x18] sm:$0xff]
        %v1550 = vld [vmem:[%s39 + $0x20] sm:$0xff]
        %v1551 = vld [vmem:[%s39 + $0x28] sm:$0xff]
        %v1552 = vld [vmem:[%s39 + $0x30] sm:$0xff]
        %v1553 = vld [vmem:[%s39 + $0x38] sm:$0xff]
        %v1554 = vld [vmem:[%s41] sm:$0x1]
        %v1556 = vperm.slane %v1554, 0
        %v1559 = vsel %vm1433, %v1546, 0
        %v1562 = vsel %vm1433, %v1547, 0
        %v1565 = vsel %vm1433, %v1548, 0
        %v1568 = vsel %vm1433, %v1549, 0
        %v1571 = vsel %vm1433, %v1550, 0
        %v1574 = vsel %vm1433, %v1551, 0
        %v1577 = vsel %vm1433, %v1552, 0
        %v1580 = vsel %vm1433, %v1553, 0
        %1582 = vmatpush.xpose.msra.mxu0 0.0
        %1583 = vmatpush.xpose.msra.mxu0 0.0
        %1584 = vmatpush.xpose.msra.mxu0 0.0
        %1585 = vmatpush.xpose.msra.mxu0 0.0
        %1586 = vmatpush.xpose.msra.mxu0 0.0
        %1587 = vmatpush.xpose.msra.mxu0 0.0
        %1588 = vmatpush.xpose.msra.mxu0 0.0
        %1589 = vmatpush.xpose.msra.mxu0 0.0
        %1590 = vmatpush.xpose.msra.mxu0 %v1580
        %1591 = vmatpush.xpose.msra.mxu0 %v1577
        %1592 = vmatpush.xpose.msra.mxu0 %v1574
        %1593 = vmatpush.xpose.msra.mxu0 %v1571
        %1594 = vmatpush.xpose.msra.mxu0 %v1568
        %1595 = vmatpush.xpose.msra.mxu0 %v1565
        %1596 = vmatpush.xpose.msra.mxu0 %v1562
        %1597 = vmatpush.xpose.msra.mxu0 %v1559
        %1598 = vmatmul.f32.gmra.mxu0 %v1500
        %v1599 = vpop.f32.mrf.mxu0
        %v1600 = vadd.f32 %v1556, %v1599
        %1601 = vdwg.mxu0
        %v1603 = vsel %vm1129, %v1482, 0
        %v1606 = vsel %vm1129, %v1485, 0
        %v1609 = vsel %vm1129, %v1544, 0
        %1611 = vmatpush.xpose.msra.mxu0 0.0
        %1612 = vmatpush.xpose.msra.mxu0 0.0
        %1613 = vmatpush.xpose.msra.mxu0 0.0
        %1614 = vmatpush.xpose.msra.mxu0 0.0
        %1615 = vmatpush.xpose.msra.mxu0 0.0
        %1616 = vmatpush.xpose.msra.mxu0 0.0
        %1617 = vmatpush.xpose.msra.mxu0 0.0
        %1618 = vmatpush.xpose.msra.mxu0 0.0
        %1619 = vmatpush.xpose.msra.mxu0 0.0
        %1620 = vmatpush.xpose.msra.mxu0 0.0
        %1621 = vmatpush.xpose.msra.mxu0 0.0
        %1622 = vmatpush.xpose.msra.mxu0 0.0
        %1623 = vmatpush.xpose.msra.mxu0 0.0
        %1624 = vmatpush.xpose.msra.mxu0 0.0
        %1625 = vmatpush.xpose.msra.mxu0 0.0
        %1626 = vmatpush.xpose.msra.mxu0 %v1609
        %1627 = vmatmul.f32.gmra.mxu0 %v1603
        %v1628 = vpop.f32.mrf.mxu0
        %v1629 = vadd.f32 0.0, %v1628
        %1630 = vmatmul.f32.gmra.mxu0 %v1606
        %v1631 = vpop.f32.mrf.mxu0
        %v1632 = vadd.f32 0.0, %v1631
        %1633 = vdwg.mxu0
        %v1634 = vmul.f32 %v1629, 0.25
        %v1635 = vmul.f32 %v1632, 0.25
        %v1637 = vperm.slane %v1417, 0
        %v1639 = vadd.f32 %v1634, %v1637
        %v1640 = vadd.f32 %v1635, %v1637
        %vm1641 = vcmask 64512
        %v1642 = vsel %vm1641, %v1639, -inf
        %1643 = vmax.xlane.f32.xlu0 %v1642
        %v1644 = vpop.xlane.xlu0 %1643
        %v1645 = vsel %vm1641, %v1640, -inf
        %1646 = vmax.xlane.f32.xlu0 %v1645
        %v1647 = vpop.xlane.xlu0 %1646
        %v1648 = vsub.f32 %v1639, %v1644
        %v1649 = vsub.f32 %v1640, %v1647
        %v1650 = vmul.f32 %v1648, 1.442695
        %v1651 = vpow.pop %v1650
        %v1652 = vmul.f32 %v1649, 1.442695
        %v1653 = vpow.pop %v1652
        %v1654 = vsel %vm1641, %v1651, 0.0
        %1655 = vadd.xlane.f32.xlu0 %v1654
        %v1656 = vpop.xlane.xlu0 %1655
        %v1657 = vsel %vm1641, %v1653, 0.0
        %1658 = vadd.xlane.f32.xlu0 %v1657
        %v1659 = vpop.xlane.xlu0 %1658
        %v1660 = vrcp.pop %v1656
        %v1661 = vmul.f32 %v1656, %v1660
        %v1662 = vsub.f32 1.0, %v1661
        %v1663 = vmul.f32 %v1660, %v1662
        %v1664 = vadd.f32 %v1660, %v1663
        %vm1665 = vweird.f32 %v1656
        %vm1666 = vweird.f32 %v1660
        %vm1667 = vmor %vm1665, %vm1666
        %v1668 = vsel %vm1667, %v1660, %v1664
        %v1669 = vand.u32 2147483647, %v1656
        %vm1670 = vcmp.eq.f32.partialorder %v1669, 8.507059e+37
        %v1671 = vand.u32 %v1656, 2147483648
        %v1672 = vor.u32 1.1754944e-38, %v1671
        %v1673 = vsel %vm1670, %v1672, %v1668
        %v1674 = vmul.f32 %v1651, %v1673
        %v1675 = vrcp.pop %v1659
        %v1676 = vmul.f32 %v1659, %v1675
        %v1677 = vsub.f32 1.0, %v1676
        %v1678 = vmul.f32 %v1675, %v1677
        %v1679 = vadd.f32 %v1675, %v1678
        %vm1680 = vweird.f32 %v1659
        %vm1681 = vweird.f32 %v1675
        %vm1682 = vmor %vm1680, %vm1681
        %v1683 = vsel %vm1682, %v1675, %v1679
        %v1684 = vand.u32 2147483647, %v1659
        %vm1685 = vcmp.eq.f32.partialorder %v1684, 8.507059e+37
        %v1686 = vand.u32 %v1659, 2147483648
        %v1687 = vor.u32 1.1754944e-38, %v1686
        %v1688 = vsel %vm1685, %v1687, %v1683
        %v1689 = vmul.f32 %v1653, %v1688
        %v1691 = vsel %vm1641, %v1674, 0
        %v1694 = vsel %vm1641, %v1689, 0
        %1696 = vmatpush.msra.mxu0 0.0
        %1697 = vmatpush.msra.mxu0 0.0
        %1698 = vmatpush.msra.mxu0 0.0
        %1699 = vmatpush.msra.mxu0 0.0
        %1700 = vmatpush.msra.mxu0 0.0
        %1701 = vmatpush.msra.mxu0 0.0
        %1702 = vmatpush.msra.mxu0 0.0
        %1703 = vmatpush.msra.mxu0 0.0
        %1704 = vmatpush.msra.mxu0 0.0
        %1705 = vmatpush.msra.mxu0 0.0
        %1706 = vmatpush.msra.mxu0 0.0
        %1707 = vmatpush.msra.mxu0 0.0
        %1708 = vmatpush.msra.mxu0 0.0
        %1709 = vmatpush.msra.mxu0 0.0
        %1710 = vmatpush.msra.mxu0 0.0
        %1711 = vmatpush.msra.mxu0 %v1600
        %1712 = vmatmul.f32.gmra.mxu0 %v1691
        %v1713 = vpop.f32.mrf.mxu0
        %v1714 = vadd.f32 0.0, %v1713
        %1715 = vmatmul.f32.gmra.mxu0 %v1694
        %v1716 = vpop.f32.mrf.mxu0
        %v1717 = vadd.f32 0.0, %v1716
        %1718 = vdwg.mxu0
        %1719 = vrot.lane.b32.xlu0 %v1482, 112
        %v1720 = vpop.permute.xlu0 %1719
        %1721 = vrot.lane.b32.xlu0 %v1485, 112
        %v1722 = vpop.permute.xlu0 %1721
        %1723 = vrot.lane.b32.xlu0 %v1544, 112
        %v1724 = vpop.permute.xlu0 %1723
        %v1725 = vsel %vm1129, %v1720, 0
        %v1727 = vsel %vm1129, %v1722, 0
        %v1729 = vsel %vm1129, %v1724, 0
        %1731 = vmatpush.xpose.msra.mxu0 0.0
        %1732 = vmatpush.xpose.msra.mxu0 0.0
        %1733 = vmatpush.xpose.msra.mxu0 0.0
        %1734 = vmatpush.xpose.msra.mxu0 0.0
        %1735 = vmatpush.xpose.msra.mxu0 0.0
        %1736 = vmatpush.xpose.msra.mxu0 0.0
        %1737 = vmatpush.xpose.msra.mxu0 0.0
        %1738 = vmatpush.xpose.msra.mxu0 0.0
        %1739 = vmatpush.xpose.msra.mxu0 0.0
        %1740 = vmatpush.xpose.msra.mxu0 0.0
        %1741 = vmatpush.xpose.msra.mxu0 0.0
        %1742 = vmatpush.xpose.msra.mxu0 0.0
        %1743 = vmatpush.xpose.msra.mxu0 0.0
        %1744 = vmatpush.xpose.msra.mxu0 0.0
        %1745 = vmatpush.xpose.msra.mxu0 0.0
        %1746 = vmatpush.xpose.msra.mxu0 %v1729
        %1747 = vmatmul.f32.gmra.mxu0 %v1725
        %v1748 = vpop.f32.mrf.mxu0
        %v1749 = vadd.f32 0.0, %v1748
        %1750 = vmatmul.f32.gmra.mxu0 %v1727
        %v1751 = vpop.f32.mrf.mxu0
        %v1752 = vadd.f32 0.0, %v1751
        %1753 = vdwg.mxu0
        %v1754 = vmul.f32 %v1749, 0.25
        %v1755 = vmul.f32 %v1752, 0.25
        %v1756 = vadd.f32 %v1754, %v1637
        %v1757 = vadd.f32 %v1755, %v1637
        %v1758 = vsel %vm1641, %v1756, -inf
        %1759 = vmax.xlane.f32.xlu0 %v1758
        %v1760 = vpop.xlane.xlu0 %1759
        %v1761 = vsel %vm1641, %v1757, -inf
        %1762 = vmax.xlane.f32.xlu0 %v1761
        %v1763 = vpop.xlane.xlu0 %1762
        %v1764 = vsub.f32 %v1756, %v1760
        %v1765 = vsub.f32 %v1757, %v1763
        %v1766 = vmul.f32 %v1764, 1.442695
        %v1767 = vpow.pop %v1766
        %v1768 = vmul.f32 %v1765, 1.442695
        %v1769 = vpow.pop %v1768
        %v1770 = vsel %vm1641, %v1767, 0.0
        %1771 = vadd.xlane.f32.xlu0 %v1770
        %v1772 = vpop.xlane.xlu0 %1771
        %v1773 = vsel %vm1641, %v1769, 0.0
        %1774 = vadd.xlane.f32.xlu0 %v1773
        %v1775 = vpop.xlane.xlu0 %1774
        %v1776 = vrcp.pop %v1772
        %v1777 = vmul.f32 %v1772, %v1776
        %v1778 = vsub.f32 1.0, %v1777
        %v1779 = vmul.f32 %v1776, %v1778
        %v1780 = vadd.f32 %v1776, %v1779
        %vm1781 = vweird.f32 %v1772
        %vm1782 = vweird.f32 %v1776
        %vm1783 = vmor %vm1781, %vm1782
        %v1784 = vsel %vm1783, %v1776, %v1780
        %v1785 = vand.u32 2147483647, %v1772
        %vm1786 = vcmp.eq.f32.partialorder %v1785, 8.507059e+37
        %v1787 = vand.u32 %v1772, 2147483648
        %v1788 = vor.u32 1.1754944e-38, %v1787
        %v1789 = vsel %vm1786, %v1788, %v1784
        %v1790 = vmul.f32 %v1767, %v1789
        %v1791 = vrcp.pop %v1775
        %v1792 = vmul.f32 %v1775, %v1791
        %v1793 = vsub.f32 1.0, %v1792
        %v1794 = vmul.f32 %v1791, %v1793
        %v1795 = vadd.f32 %v1791, %v1794
        %vm1796 = vweird.f32 %v1775
        %vm1797 = vweird.f32 %v1791
        %vm1798 = vmor %vm1796, %vm1797
        %v1799 = vsel %vm1798, %v1791, %v1795
        %v1800 = vand.u32 2147483647, %v1775
        %vm1801 = vcmp.eq.f32.partialorder %v1800, 8.507059e+37
        %v1802 = vand.u32 %v1775, 2147483648
        %v1803 = vor.u32 1.1754944e-38, %v1802
        %v1804 = vsel %vm1801, %v1803, %v1799
        %v1805 = vmul.f32 %v1769, %v1804
        %1807 = vrot.lane.b32.xlu0 %v1600, 112
        %v1808 = vpop.permute.xlu0 %1807
        %v1811 = vsel %vm1641, %v1790, 0
        %v1814 = vsel %vm1641, %v1805, 0
        %1816 = vmatpush.msra.mxu0 0.0
        %1817 = vmatpush.msra.mxu0 0.0
        %1818 = vmatpush.msra.mxu0 0.0
        %1819 = vmatpush.msra.mxu0 0.0
        %1820 = vmatpush.msra.mxu0 0.0
        %1821 = vmatpush.msra.mxu0 0.0
        %1822 = vmatpush.msra.mxu0 0.0
        %1823 = vmatpush.msra.mxu0 0.0
        %1824 = vmatpush.msra.mxu0 0.0
        %1825 = vmatpush.msra.mxu0 0.0
        %1826 = vmatpush.msra.mxu0 0.0
        %1827 = vmatpush.msra.mxu0 0.0
        %1828 = vmatpush.msra.mxu0 0.0
        %1829 = vmatpush.msra.mxu0 0.0
        %1830 = vmatpush.msra.mxu0 0.0
        %1831 = vmatpush.msra.mxu0 %v1808
        %1832 = vmatmul.f32.gmra.mxu0 %v1811
        %v1833 = vpop.f32.mrf.mxu0
        %v1834 = vadd.f32 0.0, %v1833
        %1835 = vmatmul.f32.gmra.mxu0 %v1814
        %v1836 = vpop.f32.mrf.mxu0
        %v1837 = vadd.f32 0.0, %v1836
        %1838 = vdwg.mxu0
        %1839 = vrot.lane.b32.xlu0 %v1482, 96
        %v1840 = vpop.permute.xlu0 %1839
        %1841 = vrot.lane.b32.xlu0 %v1485, 96
        %v1842 = vpop.permute.xlu0 %1841
        %1843 = vrot.lane.b32.xlu0 %v1544, 96
        %v1844 = vpop.permute.xlu0 %1843
        %v1845 = vsel %vm1129, %v1840, 0
        %v1847 = vsel %vm1129, %v1842, 0
        %v1849 = vsel %vm1129, %v1844, 0
        %1851 = vmatpush.xpose.msra.mxu0 0.0
        %1852 = vmatpush.xpose.msra.mxu0 0.0
        %1853 = vmatpush.xpose.msra.mxu0 0.0
        %1854 = vmatpush.xpose.msra.mxu0 0.0
        %1855 = vmatpush.xpose.msra.mxu0 0.0
        %1856 = vmatpush.xpose.msra.mxu0 0.0
        %1857 = vmatpush.xpose.msra.mxu0 0.0
        %1858 = vmatpush.xpose.msra.mxu0 0.0
        %1859 = vmatpush.xpose.msra.mxu0 0.0
        %1860 = vmatpush.xpose.msra.mxu0 0.0
        %1861 = vmatpush.xpose.msra.mxu0 0.0
        %1862 = vmatpush.xpose.msra.mxu0 0.0
        %1863 = vmatpush.xpose.msra.mxu0 0.0
        %1864 = vmatpush.xpose.msra.mxu0 0.0
        %1865 = vmatpush.xpose.msra.mxu0 0.0
        %1866 = vmatpush.xpose.msra.mxu0 %v1849
        %1867 = vmatmul.f32.gmra.mxu0 %v1845
        %v1868 = vpop.f32.mrf.mxu0
        %v1869 = vadd.f32 0.0, %v1868
        %1870 = vmatmul.f32.gmra.mxu0 %v1847
        %v1871 = vpop.f32.mrf.mxu0
        %v1872 = vadd.f32 0.0, %v1871
        %1873 = vdwg.mxu0
        %v1874 = vmul.f32 %v1869, 0.25
        %v1875 = vmul.f32 %v1872, 0.25
        %v1876 = vadd.f32 %v1874, %v1637
        %v1877 = vadd.f32 %v1875, %v1637
        %v1878 = vsel %vm1641, %v1876, -inf
        %1879 = vmax.xlane.f32.xlu0 %v1878
        %v1880 = vpop.xlane.xlu0 %1879
        %v1881 = vsel %vm1641, %v1877, -inf
        %1882 = vmax.xlane.f32.xlu0 %v1881
        %v1883 = vpop.xlane.xlu0 %1882
        %v1884 = vsub.f32 %v1876, %v1880
        %v1885 = vsub.f32 %v1877, %v1883
        %v1886 = vmul.f32 %v1884, 1.442695
        %v1887 = vpow.pop %v1886
        %v1888 = vmul.f32 %v1885, 1.442695
        %v1889 = vpow.pop %v1888
        %v1890 = vsel %vm1641, %v1887, 0.0
        %1891 = vadd.xlane.f32.xlu0 %v1890
        %v1892 = vpop.xlane.xlu0 %1891
        %v1893 = vsel %vm1641, %v1889, 0.0
        %1894 = vadd.xlane.f32.xlu0 %v1893
        %v1895 = vpop.xlane.xlu0 %1894
        %v1896 = vrcp.pop %v1892
        %v1897 = vmul.f32 %v1892, %v1896
        %v1898 = vsub.f32 1.0, %v1897
        %v1899 = vmul.f32 %v1896, %v1898
        %v1900 = vadd.f32 %v1896, %v1899
        %vm1901 = vweird.f32 %v1892
        %vm1902 = vweird.f32 %v1896
        %vm1903 = vmor %vm1901, %vm1902
        %v1904 = vsel %vm1903, %v1896, %v1900
        %v1905 = vand.u32 2147483647, %v1892
        %vm1906 = vcmp.eq.f32.partialorder %v1905, 8.507059e+37
        %v1907 = vand.u32 %v1892, 2147483648
        %v1908 = vor.u32 1.1754944e-38, %v1907
        %v1909 = vsel %vm1906, %v1908, %v1904
        %v1910 = vmul.f32 %v1887, %v1909
        %v1911 = vrcp.pop %v1895
        %v1912 = vmul.f32 %v1895, %v1911
        %v1913 = vsub.f32 1.0, %v1912
        %v1914 = vmul.f32 %v1911, %v1913
        %v1915 = vadd.f32 %v1911, %v1914
        %vm1916 = vweird.f32 %v1895
        %vm1917 = vweird.f32 %v1911
        %vm1918 = vmor %vm1916, %vm1917
        %v1919 = vsel %vm1918, %v1911, %v1915
        %v1920 = vand.u32 2147483647, %v1895
        %vm1921 = vcmp.eq.f32.partialorder %v1920, 8.507059e+37
        %v1922 = vand.u32 %v1895, 2147483648
        %v1923 = vor.u32 1.1754944e-38, %v1922
        %v1924 = vsel %vm1921, %v1923, %v1919
        %v1925 = vmul.f32 %v1889, %v1924
        %1926 = vrot.lane.b32.xlu0 %v1600, 96
        %v1927 = vpop.permute.xlu0 %1926
        %v1930 = vsel %vm1641, %v1910, 0
        %v1933 = vsel %vm1641, %v1925, 0
        %1935 = vmatpush.msra.mxu0 0.0
        %1936 = vmatpush.msra.mxu0 0.0
        %1937 = vmatpush.msra.mxu0 0.0
        %1938 = vmatpush.msra.mxu0 0.0
        %1939 = vmatpush.msra.mxu0 0.0
        %1940 = vmatpush.msra.mxu0 0.0
        %1941 = vmatpush.msra.mxu0 0.0
        %1942 = vmatpush.msra.mxu0 0.0
        %1943 = vmatpush.msra.mxu0 0.0
        %1944 = vmatpush.msra.mxu0 0.0
        %1945 = vmatpush.msra.mxu0 0.0
        %1946 = vmatpush.msra.mxu0 0.0
        %1947 = vmatpush.msra.mxu0 0.0
        %1948 = vmatpush.msra.mxu0 0.0
        %1949 = vmatpush.msra.mxu0 0.0
        %1950 = vmatpush.msra.mxu0 %v1927
        %1951 = vmatmul.f32.gmra.mxu0 %v1930
        %v1952 = vpop.f32.mrf.mxu0
        %v1953 = vadd.f32 0.0, %v1952
        %1954 = vmatmul.f32.gmra.mxu0 %v1933
        %v1955 = vpop.f32.mrf.mxu0
        %v1956 = vadd.f32 0.0, %v1955
        %1957 = vdwg.mxu0
        %1958 = vrot.lane.b32.xlu0 %v1482, 80
        %v1959 = vpop.permute.xlu0 %1958
        %1960 = vrot.lane.b32.xlu0 %v1485, 80
        %v1961 = vpop.permute.xlu0 %1960
        %1962 = vrot.lane.b32.xlu0 %v1544, 80
        %v1963 = vpop.permute.xlu0 %1962
        %v1964 = vsel %vm1129, %v1959, 0
        %v1966 = vsel %vm1129, %v1961, 0
        %v1968 = vsel %vm1129, %v1963, 0
        %1970 = vmatpush.xpose.msra.mxu0 0.0
        %1971 = vmatpush.xpose.msra.mxu0 0.0
        %1972 = vmatpush.xpose.msra.mxu0 0.0
        %1973 = vmatpush.xpose.msra.mxu0 0.0
        %1974 = vmatpush.xpose.msra.mxu0 0.0
        %1975 = vmatpush.xpose.msra.mxu0 0.0
        %1976 = vmatpush.xpose.msra.mxu0 0.0
        %1977 = vmatpush.xpose.msra.mxu0 0.0
        %1978 = vmatpush.xpose.msra.mxu0 0.0
        %1979 = vmatpush.xpose.msra.mxu0 0.0
        %1980 = vmatpush.xpose.msra.mxu0 0.0
        %1981 = vmatpush.xpose.msra.mxu0 0.0
        %1982 = vmatpush.xpose.msra.mxu0 0.0
        %1983 = vmatpush.xpose.msra.mxu0 0.0
        %1984 = vmatpush.xpose.msra.mxu0 0.0
        %1985 = vmatpush.xpose.msra.mxu0 %v1968
        %1986 = vmatmul.f32.gmra.mxu0 %v1964
        %v1987 = vpop.f32.mrf.mxu0
        %v1988 = vadd.f32 0.0, %v1987
        %1989 = vmatmul.f32.gmra.mxu0 %v1966
        %v1990 = vpop.f32.mrf.mxu0
        %v1991 = vadd.f32 0.0, %v1990
        %1992 = vdwg.mxu0
        %v1993 = vmul.f32 %v1988, 0.25
        %v1994 = vmul.f32 %v1991, 0.25
        %v1995 = vadd.f32 %v1993, %v1637
        %v1996 = vadd.f32 %v1994, %v1637
        %v1997 = vsel %vm1641, %v1995, -inf
        %1998 = vmax.xlane.f32.xlu0 %v1997
        %v1999 = vpop.xlane.xlu0 %1998
        %v2000 = vsel %vm1641, %v1996, -inf
        %2001 = vmax.xlane.f32.xlu0 %v2000
        %v2002 = vpop.xlane.xlu0 %2001
        %v2003 = vsub.f32 %v1995, %v1999
        %v2004 = vsub.f32 %v1996, %v2002
        %v2005 = vmul.f32 %v2003, 1.442695
        %v2006 = vpow.pop %v2005
        %v2007 = vmul.f32 %v2004, 1.442695
        %v2008 = vpow.pop %v2007
        %v2009 = vsel %vm1641, %v2006, 0.0
        %2010 = vadd.xlane.f32.xlu0 %v2009
        %v2011 = vpop.xlane.xlu0 %2010
        %v2012 = vsel %vm1641, %v2008, 0.0
        %2013 = vadd.xlane.f32.xlu0 %v2012
        %v2014 = vpop.xlane.xlu0 %2013
        %v2015 = vrcp.pop %v2011
        %v2016 = vmul.f32 %v2011, %v2015
        %v2017 = vsub.f32 1.0, %v2016
        %v2018 = vmul.f32 %v2015, %v2017
        %v2019 = vadd.f32 %v2015, %v2018
        %vm2020 = vweird.f32 %v2011
        %vm2021 = vweird.f32 %v2015
        %vm2022 = vmor %vm2020, %vm2021
        %v2023 = vsel %vm2022, %v2015, %v2019
        %v2024 = vand.u32 2147483647, %v2011
        %vm2025 = vcmp.eq.f32.partialorder %v2024, 8.507059e+37
        %v2026 = vand.u32 %v2011, 2147483648
        %v2027 = vor.u32 1.1754944e-38, %v2026
        %v2028 = vsel %vm2025, %v2027, %v2023
        %v2029 = vmul.f32 %v2006, %v2028
        %v2030 = vrcp.pop %v2014
        %v2031 = vmul.f32 %v2014, %v2030
        %v2032 = vsub.f32 1.0, %v2031
        %v2033 = vmul.f32 %v2030, %v2032
        %v2034 = vadd.f32 %v2030, %v2033
        %vm2035 = vweird.f32 %v2014
        %vm2036 = vweird.f32 %v2030
        %vm2037 = vmor %vm2035, %vm2036
        %v2038 = vsel %vm2037, %v2030, %v2034
        %v2039 = vand.u32 2147483647, %v2014
        %vm2040 = vcmp.eq.f32.partialorder %v2039, 8.507059e+37
        %v2041 = vand.u32 %v2014, 2147483648
        %v2042 = vor.u32 1.1754944e-38, %v2041
        %v2043 = vsel %vm2040, %v2042, %v2038
        %v2044 = vmul.f32 %v2008, %v2043
        %2045 = vrot.lane.b32.xlu0 %v1600, 80
        %v2046 = vpop.permute.xlu0 %2045
        %v2049 = vsel %vm1641, %v2029, 0
        %v2052 = vsel %vm1641, %v2044, 0
        %2054 = vmatpush.msra.mxu0 0.0
        %2055 = vmatpush.msra.mxu0 0.0
        %2056 = vmatpush.msra.mxu0 0.0
        %2057 = vmatpush.msra.mxu0 0.0
        %2058 = vmatpush.msra.mxu0 0.0
        %2059 = vmatpush.msra.mxu0 0.0
        %2060 = vmatpush.msra.mxu0 0.0
        %2061 = vmatpush.msra.mxu0 0.0
        %2062 = vmatpush.msra.mxu0 0.0
        %2063 = vmatpush.msra.mxu0 0.0
        %2064 = vmatpush.msra.mxu0 0.0
        %2065 = vmatpush.msra.mxu0 0.0
        %2066 = vmatpush.msra.mxu0 0.0
        %2067 = vmatpush.msra.mxu0 0.0
        %2068 = vmatpush.msra.mxu0 0.0
        %2069 = vmatpush.msra.mxu0 %v2046
        %2070 = vmatmul.f32.gmra.mxu0 %v2049
        %v2071 = vpop.f32.mrf.mxu0
        %v2072 = vadd.f32 0.0, %v2071
        %2073 = vmatmul.f32.gmra.mxu0 %v2052
        %v2074 = vpop.f32.mrf.mxu0
        %v2075 = vadd.f32 0.0, %v2074
        %2076 = vdwg.mxu0
        %2079 = vrot.lane.b32.xlu0 %v1834, 16
        %v2080 = vpop.permute.xlu0 %2079
        %2081 = vrot.lane.b32.xlu0 %v1837, 16
        %v2082 = vpop.permute.xlu0 %2081
        %2087 = vrot.lane.b32.xlu0 %v1953, 32
        %v2088 = vpop.permute.xlu0 %2087
        %2089 = vrot.lane.b32.xlu0 %v1956, 32
        %v2090 = vpop.permute.xlu0 %2089
        %2095 = vrot.lane.b32.xlu0 %v2072, 48
        %v2096 = vpop.permute.xlu0 %2095
        %2097 = vrot.lane.b32.xlu0 %v2075, 48
        %v2098 = vpop.permute.xlu0 %2097
        %v2101 = vsel %vm1129, %v1714, %v2080
        %v2102 = vsel %vm1129, %v1717, %v2082
        %v2103 = vsel %vm1283, %v2101, %v2088
        %v2104 = vsel %vm1283, %v2102, %v2090
        %vm2105 = vcmask 392192
        %v2106 = vsel %vm2105, %v2103, %v2096
        %v2107 = vsel %vm2105, %v2104, %v2098
        %v2108 = vld [vmem:[%s43] sm:$0xff]
        %v2109 = vld [vmem:[%s43 + $0x8] sm:$0xff]
        %v2110 = vld [vmem:[%s43 + $0x10] sm:$0xff]
        %v2111 = vld [vmem:[%s43 + $0x18] sm:$0xff]
        %v2112 = vld [vmem:[%s43 + $0x20] sm:$0xff]
        %v2113 = vld [vmem:[%s43 + $0x28] sm:$0xff]
        %v2114 = vld [vmem:[%s43 + $0x30] sm:$0xff]
        %v2115 = vld [vmem:[%s43 + $0x38] sm:$0xff]
        %v2116 = vld [vmem:[%s45] sm:$0x1]
        %v2118 = vperm.slane %v2116, 0
        %v2121 = vsel %vm1433, %v2106, 0
        %v2124 = vsel %vm1433, %v2107, 0
        %v2127 = vsel %vm1433, %v2108, 0
        %v2130 = vsel %vm1433, %v2109, 0
        %v2133 = vsel %vm1433, %v2110, 0
        %v2136 = vsel %vm1433, %v2111, 0
        %v2139 = vsel %vm1433, %v2112, 0
        %v2142 = vsel %vm1433, %v2113, 0
        %v2145 = vsel %vm1433, %v2114, 0
        %v2148 = vsel %vm1433, %v2115, 0
        %2150 = vmatpush.xpose.msra.mxu0 0.0
        %2151 = vmatpush.xpose.msra.mxu0 0.0
        %2152 = vmatpush.xpose.msra.mxu0 0.0
        %2153 = vmatpush.xpose.msra.mxu0 0.0
        %2154 = vmatpush.xpose.msra.mxu0 0.0
        %2155 = vmatpush.xpose.msra.mxu0 0.0
        %2156 = vmatpush.xpose.msra.mxu0 0.0
        %2157 = vmatpush.xpose.msra.mxu0 0.0
        %2158 = vmatpush.xpose.msra.mxu0 %v2148
        %2159 = vmatpush.xpose.msra.mxu0 %v2145
        %2160 = vmatpush.xpose.msra.mxu0 %v2142
        %2161 = vmatpush.xpose.msra.mxu0 %v2139
        %2162 = vmatpush.xpose.msra.mxu0 %v2136
        %2163 = vmatpush.xpose.msra.mxu0 %v2133
        %2164 = vmatpush.xpose.msra.mxu0 %v2130
        %2165 = vmatpush.xpose.msra.mxu0 %v2127
        %2166 = vmatmul.f32.gmra.mxu0 %v2121
        %v2167 = vpop.f32.mrf.mxu0
        %v2168 = vadd.f32 %v2118, %v2167
        %2169 = vmatmul.f32.gmra.mxu0 %v2124
        %v2170 = vpop.f32.mrf.mxu0
        %v2171 = vadd.f32 %v2118, %v2170
        %2172 = vdwg.mxu0
        %v2173 = vmul.f32 %v2168, %v1400
        %v2174 = vmul.f32 %v2171, %v1405
        %v2175 = vadd.f32 %v1407, %v2173
        %v2176 = vadd.f32 %v1408, %v2174
        %v2177 = vld [vmem:[%s47] sm:$0x1]
        %v2178 = vld [vmem:[%s49] sm:$0x1]
        %v2179 = vsel %vm1433, %v2175, 0.0
        %2180 = vadd.xlane.f32.xlu0 %v2179
        %v2181 = vpop.xlane.xlu0 %2180
        %v2182 = vsel %vm1433, %v2176, 0.0
        %2183 = vadd.xlane.f32.xlu0 %v2182
        %v2184 = vpop.xlane.xlu0 %2183
        %v2185 = vrcp.pop 64.0
        %v2186 = vmul.f32 64.0, %v2185
        %v2187 = vsub.f32 1.0, %v2186
        %v2188 = vmul.f32 %v2185, %v2187
        %v2189 = vadd.f32 %v2185, %v2188
        %vm2190 = vweird.f32 %v2185
        %v2191 = vsel %vm2190, %v2185, %v2189
        %v2192 = vmul.f32 %v2181, %v2191
        %v2193 = vmul.f32 %v2184, %v2191
        %v2194 = vsub.f32 %v2175, %v2192
        %v2195 = vsub.f32 %v2176, %v2193
        %v2196 = vmul.f32 %v2194, %v2194
        %v2197 = vmul.f32 %v2195, %v2195
        %v2198 = vsel %vm1433, %v2196, 0.0
        %2199 = vadd.xlane.f32.xlu0 %v2198
        %v2200 = vpop.xlane.xlu0 %2199
        %v2201 = vsel %vm1433, %v2197, 0.0
        %2202 = vadd.xlane.f32.xlu0 %v2201
        %v2203 = vpop.xlane.xlu0 %2202
        %v2204 = vmul.f32 %v2200, %v2191
        %v2205 = vmul.f32 %v2203, %v2191
        %v2206 = vadd.f32 %v2204, 1e-05
        %v2207 = vadd.f32 %v2205, 1e-05
        %v2208 = vrsqrt.pop %v2206
        %v2209 = vmul.f32 %v2208, %v2206
        %v2210 = vmul.f32 %v2209, %v2208
        %v2211 = vmul.f32 0.5, %v2210
        %v2212 = vsub.f32 1.5, %v2211
        %v2213 = vmul.f32 %v2208, %v2212
        %vm2214 = vweird.f32 %v2206
        %vm2215 = vweird.f32 %v2208
        %vm2216 = vmor %vm2214, %vm2215
        %v2217 = vsel %vm2216, %v2208, %v2213
        %v2218 = vrsqrt.pop %v2207
        %v2219 = vmul.f32 %v2218, %v2207
        %v2220 = vmul.f32 %v2219, %v2218
        %v2221 = vmul.f32 0.5, %v2220
        %v2222 = vsub.f32 1.5, %v2221
        %v2223 = vmul.f32 %v2218, %v2222
        %vm2224 = vweird.f32 %v2207
        %vm2225 = vweird.f32 %v2218
        %vm2226 = vmor %vm2224, %vm2225
        %v2227 = vsel %vm2226, %v2218, %v2223
        %v2228 = vmul.f32 %v2194, %v2217
        %v2229 = vmul.f32 %v2195, %v2227
        %v2231 = vperm.slane %v2177, 0
        %v2233 = vmul.f32 %v2228, %v2231
        %v2234 = vmul.f32 %v2229, %v2231
        %v2236 = vperm.slane %v2178, 0
        %v2238 = vadd.f32 %v2233, %v2236
        %v2239 = vadd.f32 %v2234, %v2236
        %v2240 = vld [vmem:[%s51] sm:$0xff]
        %v2241 = vld [vmem:[%s51 + $0x8] sm:$0xff]
        %v2242 = vld [vmem:[%s51 + $0x10] sm:$0xff]
        %v2243 = vld [vmem:[%s51 + $0x18] sm:$0xff]
        %v2244 = vld [vmem:[%s51 + $0x20] sm:$0xff]
        %v2245 = vld [vmem:[%s51 + $0x28] sm:$0xff]
        %v2246 = vld [vmem:[%s51 + $0x30] sm:$0xff]
        %v2247 = vld [vmem:[%s51 + $0x38] sm:$0xff]
        %v2248 = vld [vmem:[%s51 + $0x40] sm:$0xff]
        %v2249 = vld [vmem:[%s51 + $0x48] sm:$0xff]
        %v2250 = vld [vmem:[%s51 + $0x50] sm:$0xff]
        %v2251 = vld [vmem:[%s51 + $0x58] sm:$0xff]
        %v2252 = vld [vmem:[%s51 + $0x60] sm:$0xff]
        %v2253 = vld [vmem:[%s51 + $0x68] sm:$0xff]
        %v2254 = vld [vmem:[%s51 + $0x70] sm:$0xff]
        %v2255 = vld [vmem:[%s51 + $0x78] sm:$0xff]
        %v2256 = vld [vmem:[%s51 + $0x80] sm:$0xff]
        %v2257 = vld [vmem:[%s51 + $0x88] sm:$0xff]
        %v2258 = vld [vmem:[%s51 + $0x90] sm:$0xff]
        %v2259 = vld [vmem:[%s51 + $0x98] sm:$0xff]
        %v2260 = vld [vmem:[%s51 + $0xa0] sm:$0xff]
        %v2261 = vld [vmem:[%s51 + $0xa8] sm:$0xff]
        %v2262 = vld [vmem:[%s51 + $0xb0] sm:$0xff]
        %v2263 = vld [vmem:[%s51 + $0xb8] sm:$0xff]
        %v2264 = vld [vmem:[%s51 + $0xc0] sm:$0xff]
        %v2265 = vld [vmem:[%s51 + $0xc8] sm:$0xff]
        %v2266 = vld [vmem:[%s51 + $0xd0] sm:$0xff]
        %v2267 = vld [vmem:[%s51 + $0xd8] sm:$0xff]
        %v2268 = vld [vmem:[%s51 + $0xe0] sm:$0xff]
        %v2269 = vld [vmem:[%s51 + $0xe8] sm:$0xff]
        %v2270 = vld [vmem:[%s51 + $0xf0] sm:$0xff]
        %v2271 = vld [vmem:[%s51 + $0xf8] sm:$0xff]
        %v2272 = vld [vmem:[%s53] sm:$0x3]
        %v2274 = vperm.slane %v2272, 0
        %v2275 = vperm.slane %v2272, 1
        %v2279 = vsel %vm1433, %v2238, 0
        %v2282 = vsel %vm1433, %v2239, 0
        %v2285 = vsel %vm1433, %v2240, 0
        %v2288 = vsel %vm1433, %v2241, 0
        %v2291 = vsel %vm1433, %v2242, 0
        %v2294 = vsel %vm1433, %v2243, 0
        %v2297 = vsel %vm1433, %v2244, 0
        %v2300 = vsel %vm1433, %v2245, 0
        %v2303 = vsel %vm1433, %v2246, 0
        %v2306 = vsel %vm1433, %v2247, 0
        %v2309 = vsel %vm1433, %v2248, 0
        %v2312 = vsel %vm1433, %v2249, 0
        %v2315 = vsel %vm1433, %v2250, 0
        %v2318 = vsel %vm1433, %v2251, 0
        %v2321 = vsel %vm1433, %v2252, 0
        %v2324 = vsel %vm1433, %v2253, 0
        %v2327 = vsel %vm1433, %v2254, 0
        %v2330 = vsel %vm1433, %v2255, 0
        %v2333 = vsel %vm1433, %v2256, 0
        %v2336 = vsel %vm1433, %v2257, 0
        %v2339 = vsel %vm1433, %v2258, 0
        %v2342 = vsel %vm1433, %v2259, 0
        %v2345 = vsel %vm1433, %v2260, 0
        %v2348 = vsel %vm1433, %v2261, 0
        %v2351 = vsel %vm1433, %v2262, 0
        %v2354 = vsel %vm1433, %v2263, 0
        %v2357 = vsel %vm1433, %v2264, 0
        %v2360 = vsel %vm1433, %v2265, 0
        %v2363 = vsel %vm1433, %v2266, 0
        %v2366 = vsel %vm1433, %v2267, 0
        %v2369 = vsel %vm1433, %v2268, 0
        %v2372 = vsel %vm1433, %v2269, 0
        %v2375 = vsel %vm1433, %v2270, 0
        %v2378 = vsel %vm1433, %v2271, 0
        %2380 = vmatpush.xpose.msra.mxu0 %v2330
        %2381 = vmatpush.xpose.msra.mxu0 %v2327
        %2382 = vmatpush.xpose.msra.mxu0 %v2324
        %2383 = vmatpush.xpose.msra.mxu0 %v2321
        %2384 = vmatpush.xpose.msra.mxu0 %v2318
        %2385 = vmatpush.xpose.msra.mxu0 %v2315
        %2386 = vmatpush.xpose.msra.mxu0 %v2312
        %2387 = vmatpush.xpose.msra.mxu0 %v2309
        %2388 = vmatpush.xpose.msra.mxu0 %v2306
        %2389 = vmatpush.xpose.msra.mxu0 %v2303
        %2390 = vmatpush.xpose.msra.mxu0 %v2300
        %2391 = vmatpush.xpose.msra.mxu0 %v2297
        %2392 = vmatpush.xpose.msra.mxu0 %v2294
        %2393 = vmatpush.xpose.msra.mxu0 %v2291
        %2394 = vmatpush.xpose.msra.mxu0 %v2288
        %2395 = vmatpush.xpose.msra.mxu0 %v2285
        %2396 = vmatmul.f32.gmra.mxu0 %v2279
        %v2397 = vpop.f32.mrf.mxu0
        %v2398 = vadd.f32 %v2274, %v2397
        %2399 = vmatmul.f32.gmra.mxu0 %v2282
        %v2400 = vpop.f32.mrf.mxu0
        %v2401 = vadd.f32 %v2274, %v2400
        %2402 = vdwg.mxu0
        %2403 = vmatpush.xpose.msra.mxu0 %v2378
        %2404 = vmatpush.xpose.msra.mxu0 %v2375
        %2405 = vmatpush.xpose.msra.mxu0 %v2372
        %2406 = vmatpush.xpose.msra.mxu0 %v2369
        %2407 = vmatpush.xpose.msra.mxu0 %v2366
        %2408 = vmatpush.xpose.msra.mxu0 %v2363
        %2409 = vmatpush.xpose.msra.mxu0 %v2360
        %2410 = vmatpush.xpose.msra.mxu0 %v2357
        %2411 = vmatpush.xpose.msra.mxu0 %v2354
        %2412 = vmatpush.xpose.msra.mxu0 %v2351
        %2413 = vmatpush.xpose.msra.mxu0 %v2348
        %2414 = vmatpush.xpose.msra.mxu0 %v2345
        %2415 = vmatpush.xpose.msra.mxu0 %v2342
        %2416 = vmatpush.xpose.msra.mxu0 %v2339
        %2417 = vmatpush.xpose.msra.mxu0 %v2336
        %2418 = vmatpush.xpose.msra.mxu0 %v2333
        %2419 = vmatmul.f32.gmra.mxu0 %v2279
        %v2420 = vpop.f32.mrf.mxu0
        %v2421 = vadd.f32 %v2275, %v2420
        %2422 = vmatmul.f32.gmra.mxu0 %v2282
        %v2423 = vpop.f32.mrf.mxu0
        %v2424 = vadd.f32 %v2275, %v2423
        %2425 = vdwg.mxu0
        %v2426 = vmax.f32 %v2398, 0.0
        %v2427 = vmax.f32 %v2421, 0.0
        %v2428 = vmax.f32 %v2401, 0.0
        %v2429 = vmax.f32 %v2424, 0.0
        %v2430 = vld [vmem:[%s55] sm:$0xff]
        %v2431 = vld [vmem:[%s55 + $0x8] sm:$0xff]
        %v2432 = vld [vmem:[%s55 + $0x10] sm:$0xff]
        %v2433 = vld [vmem:[%s55 + $0x18] sm:$0xff]
        %v2434 = vld [vmem:[%s55 + $0x20] sm:$0xff]
        %v2435 = vld [vmem:[%s55 + $0x28] sm:$0xff]
        %v2436 = vld [vmem:[%s55 + $0x30] sm:$0xff]
        %v2437 = vld [vmem:[%s55 + $0x38] sm:$0xff]
        %v2438 = vld [vmem:[%s55 + $0x40] sm:$0xff]
        %v2439 = vld [vmem:[%s55 + $0x48] sm:$0xff]
        %v2440 = vld [vmem:[%s55 + $0x50] sm:$0xff]
        %v2441 = vld [vmem:[%s55 + $0x58] sm:$0xff]
        %v2442 = vld [vmem:[%s55 + $0x60] sm:$0xff]
        %v2443 = vld [vmem:[%s55 + $0x68] sm:$0xff]
        %v2444 = vld [vmem:[%s55 + $0x70] sm:$0xff]
        %v2445 = vld [vmem:[%s55 + $0x78] sm:$0xff]
        %v2446 = vld [vmem:[%s57] sm:$0x1]
        %v2448 = vperm.slane %v2446, 0
        %2450 = vmatpush.xpose.msra.mxu0 0.0
        %2451 = vmatpush.xpose.msra.mxu0 0.0
        %2452 = vmatpush.xpose.msra.mxu0 0.0
        %2453 = vmatpush.xpose.msra.mxu0 0.0
        %2454 = vmatpush.xpose.msra.mxu0 0.0
        %2455 = vmatpush.xpose.msra.mxu0 0.0
        %2456 = vmatpush.xpose.msra.mxu0 0.0
        %2457 = vmatpush.xpose.msra.mxu0 0.0
        %2458 = vmatpush.xpose.msra.mxu0 %v2444
        %2459 = vmatpush.xpose.msra.mxu0 %v2442
        %2460 = vmatpush.xpose.msra.mxu0 %v2440
        %2461 = vmatpush.xpose.msra.mxu0 %v2438
        %2462 = vmatpush.xpose.msra.mxu0 %v2436
        %2463 = vmatpush.xpose.msra.mxu0 %v2434
        %2464 = vmatpush.xpose.msra.mxu0 %v2432
        %2465 = vmatpush.xpose.msra.mxu0 %v2430
        %2466 = vmatmul.f32.gmra.mxu0 %v2426
        %v2467 = vpop.f32.mrf.mxu0
        %v2468 = vadd.f32 %v2448, %v2467
        %2469 = vmatmul.f32.gmra.mxu0 %v2428
        %v2470 = vpop.f32.mrf.mxu0
        %v2471 = vadd.f32 %v2448, %v2470
        %2472 = vdwg.mxu0
        %2473 = vmatpush.xpose.msra.mxu0 0.0
        %2474 = vmatpush.xpose.msra.mxu0 0.0
        %2475 = vmatpush.xpose.msra.mxu0 0.0
        %2476 = vmatpush.xpose.msra.mxu0 0.0
        %2477 = vmatpush.xpose.msra.mxu0 0.0
        %2478 = vmatpush.xpose.msra.mxu0 0.0
        %2479 = vmatpush.xpose.msra.mxu0 0.0
        %2480 = vmatpush.xpose.msra.mxu0 0.0
        %2481 = vmatpush.xpose.msra.mxu0 %v2445
        %2482 = vmatpush.xpose.msra.mxu0 %v2443
        %2483 = vmatpush.xpose.msra.mxu0 %v2441
        %2484 = vmatpush.xpose.msra.mxu0 %v2439
        %2485 = vmatpush.xpose.msra.mxu0 %v2437
        %2486 = vmatpush.xpose.msra.mxu0 %v2435
        %2487 = vmatpush.xpose.msra.mxu0 %v2433
        %2488 = vmatpush.xpose.msra.mxu0 %v2431
        %2489 = vmatmul.f32.gmra.mxu0 %v2427
        %v2490 = vpop.f32.mrf.mxu0
        %v2491 = vadd.f32 %v2468, %v2490
        %2492 = vmatmul.f32.gmra.mxu0 %v2429
        %v2493 = vpop.f32.mrf.mxu0
        %v2494 = vadd.f32 %v2471, %v2493
        %2495 = vdwg.mxu0
        %v2496 = vadd.f32 %v2238, %v2491
        %v2497 = vadd.f32 %v2239, %v2494
        %v2498 = vld [vmem:[%s59] sm:$0x1]
        %v2499 = vld [vmem:[%s61] sm:$0x1]
        %v2500 = vsel %vm1433, %v2496, 0.0
        %2501 = vadd.xlane.f32.xlu0 %v2500
        %v2502 = vpop.xlane.xlu0 %2501
        %v2503 = vsel %vm1433, %v2497, 0.0
        %2504 = vadd.xlane.f32.xlu0 %v2503
        %v2505 = vpop.xlane.xlu0 %2504
        %v2506 = vmul.f32 %v2502, %v2191
        %v2507 = vmul.f32 %v2505, %v2191
        %v2508 = vsub.f32 %v2496, %v2506
        %v2509 = vsub.f32 %v2497, %v2507
        %v2510 = vmul.f32 %v2508, %v2508
        %v2511 = vmul.f32 %v2509, %v2509
        %v2512 = vsel %vm1433, %v2510, 0.0
        %2513 = vadd.xlane.f32.xlu0 %v2512
        %v2514 = vpop.xlane.xlu0 %2513
        %v2515 = vsel %vm1433, %v2511, 0.0
        %2516 = vadd.xlane.f32.xlu0 %v2515
        %v2517 = vpop.xlane.xlu0 %2516
        %v2518 = vmul.f32 %v2514, %v2191
        %v2519 = vmul.f32 %v2517, %v2191
        %v2520 = vadd.f32 %v2518, 1e-05
        %v2521 = vadd.f32 %v2519, 1e-05
        %v2522 = vrsqrt.pop %v2520
        %v2523 = vmul.f32 %v2522, %v2520
        %v2524 = vmul.f32 %v2523, %v2522
        %v2525 = vmul.f32 0.5, %v2524
        %v2526 = vsub.f32 1.5, %v2525
        %v2527 = vmul.f32 %v2522, %v2526
        %vm2528 = vweird.f32 %v2520
        %vm2529 = vweird.f32 %v2522
        %vm2530 = vmor %vm2528, %vm2529
        %v2531 = vsel %vm2530, %v2522, %v2527
        %v2532 = vrsqrt.pop %v2521
        %v2533 = vmul.f32 %v2532, %v2521
        %v2534 = vmul.f32 %v2533, %v2532
        %v2535 = vmul.f32 0.5, %v2534
        %v2536 = vsub.f32 1.5, %v2535
        %v2537 = vmul.f32 %v2532, %v2536
        %vm2538 = vweird.f32 %v2521
        %vm2539 = vweird.f32 %v2532
        %vm2540 = vmor %vm2538, %vm2539
        %v2541 = vsel %vm2540, %v2532, %v2537
        %v2542 = vmul.f32 %v2508, %v2531
        %v2543 = vmul.f32 %v2509, %v2541
        %v2545 = vperm.slane %v2498, 0
        %v2547 = vmul.f32 %v2542, %v2545
        %v2548 = vmul.f32 %v2543, %v2545
        %v2550 = vperm.slane %v2499, 0
        %v2552 = vadd.f32 %v2547, %v2550
        %v2553 = vadd.f32 %v2548, %v2550
        %v2554 = vld [vmem:[%s63] sm:$0xff]
        %v2555 = vld [vmem:[%s63 + $0x8] sm:$0xff]
        %v2556 = vld [vmem:[%s63 + $0x10] sm:$0xff]
        %v2557 = vld [vmem:[%s63 + $0x18] sm:$0xff]
        %v2558 = vld [vmem:[%s65] sm:$0xff]
        %v2559 = vld [vmem:[%s65 + $0x8] sm:$0xff]
        %v2560 = vld [vmem:[%s65 + $0x10] sm:$0xff]
        %v2561 = vld [vmem:[%s65 + $0x18] sm:$0xff]
        %2563 = vset.pattern.permute.xlu0 0
        %2564 = vperm.xlu0 %2563, %v2558
        %v2565 = vpop.permute.xlu0 %2564
        %2568 = vset.pattern.permute.xlu0 0
        %2569 = vperm.xlu0 %2568, %v2559
        %v2570 = vpop.permute.xlu0 %2569
        %2573 = vset.pattern.permute.xlu0 0
        %2574 = vperm.xlu0 %2573, %v2560
        %v2575 = vpop.permute.xlu0 %2574
        %2578 = vset.pattern.permute.xlu0 0
        %2579 = vperm.xlu0 %2578, %v2561
        %v2580 = vpop.permute.xlu0 %2579
        %v2583 = vsel %vm1433, %v2554, 0
        %v2586 = vsel %vm1433, %v2555, 0
        %v2589 = vsel %vm1433, %v2556, 0
        %v2592 = vsel %vm1433, %v2557, 0
        %v2595 = vsel %vm1433, %v2552, 0
        %v2598 = vsel %vm1433, %v2553, 0
        %2600 = vmatpush.xpose.msra.mxu0 0.0
        %2601 = vmatpush.xpose.msra.mxu0 0.0
        %2602 = vmatpush.xpose.msra.mxu0 0.0
        %2603 = vmatpush.xpose.msra.mxu0 0.0
        %2604 = vmatpush.xpose.msra.mxu0 0.0
        %2605 = vmatpush.xpose.msra.mxu0 0.0
        %2606 = vmatpush.xpose.msra.mxu0 0.0
        %2607 = vmatpush.xpose.msra.mxu0 0.0
        %2608 = vmatpush.xpose.msra.mxu0 0.0
        %2609 = vmatpush.xpose.msra.mxu0 0.0
        %2610 = vmatpush.xpose.msra.mxu0 0.0
        %2611 = vmatpush.xpose.msra.mxu0 0.0
        %2612 = vmatpush.xpose.msra.mxu0 0.0
        %2613 = vmatpush.xpose.msra.mxu0 0.0
        %2614 = vmatpush.xpose.msra.mxu0 %v2598
        %2615 = vmatpush.xpose.msra.mxu0 %v2595
        %2616 = vmatmul.f32.gmra.mxu0 %v2583
        %v2617 = vpop.f32.mrf.mxu0
        %v2618 = vadd.f32 %v2565, %v2617
        %2619 = vmatmul.f32.gmra.mxu0 %v2586
        %v2620 = vpop.f32.mrf.mxu0
        %v2621 = vadd.f32 %v2570, %v2620
        %2622 = vmatmul.f32.gmra.mxu0 %v2589
        %v2623 = vpop.f32.mrf.mxu0
        %v2624 = vadd.f32 %v2575, %v2623
        %2625 = vmatmul.f32.gmra.mxu0 %v2592
        %v2626 = vpop.f32.mrf.mxu0
        %v2627 = vadd.f32 %v2580, %v2626
        %2628 = vdwg.mxu0
        %v2629 = vmul.f32 %v2618, %v2618
        %v2630 = vmul.f32 %v2621, %v2621
        %v2631 = vmul.f32 %v2624, %v2624
        %v2632 = vmul.f32 %v2627, %v2627
        %v2633 = vsel %vm1129, %v2629, 0.0
        %2634 = vadd.xlane.f32.xlu0 %v2633
        %v2635 = vpop.xlane.xlu0 %2634
        %v2636 = vsel %vm1129, %v2630, 0.0
        %2637 = vadd.xlane.f32.xlu0 %v2636
        %v2638 = vpop.xlane.xlu0 %2637
        %v2639 = vsel %vm1129, %v2631, 0.0
        %2640 = vadd.xlane.f32.xlu0 %v2639
        %v2641 = vpop.xlane.xlu0 %2640
        %v2642 = vsel %vm1129, %v2632, 0.0
        %2643 = vadd.xlane.f32.xlu0 %v2642
        %v2644 = vpop.xlane.xlu0 %2643
        %v2645 = vadd.f32 %v2635, %v2638
        %v2646 = vadd.f32 %v2645, %v2641
        %v2647 = vadd.f32 %v2646, %v2644
        %v2648 = vrot.slane %v2647, 4
        %v2649 = vadd.f32 %v2647, %v2648
        %v2650 = vrot.slane %v2649, 2
        %v2651 = vadd.f32 %v2649, %v2650
        %v2652 = vrot.slane %v2651, 1
        %v2653 = vadd.f32 %v2651, %v2652
        %v2654 = vmul.f32 %v2653, 0.0625
        %v2655 = vrsqrt.pop %v2654
        %v2656 = vmul.f32 %v2655, %v2654
        %v2657 = vmul.f32 %v2656, %v2655
        %v2658 = vmul.f32 0.5, %v2657
        %v2659 = vsub.f32 1.5, %v2658
        %v2660 = vmul.f32 %v2655, %v2659
        %v2661 = vmul.f32 %v2654, %v2660
        %vm2662 = vcmp.eq.f32.partialorder %v2654, inf
        %v2663 = vsel %vm2662, %v2654, %v2661
        %vm2664 = vcmp.eq.f32.partialorder %v2654, 0.0
        %v2665 = vand.u32 %v2654, 2147483648
        %v2666 = vsel %vm2664, %v2665, %v2663
        %v2667 = vmax.f32 %v2666, 1e-05
        %v2668 = vrcp.pop %v2667
        %v2669 = vmul.f32 %v2667, %v2668
        %v2670 = vsub.f32 1.0, %v2669
        %v2671 = vmul.f32 %v2668, %v2670
        %v2672 = vadd.f32 %v2668, %v2671
        %vm2673 = vweird.f32 %v2667
        %vm2674 = vweird.f32 %v2668
        %vm2675 = vmor %vm2673, %vm2674
        %v2676 = vsel %vm2675, %v2668, %v2672
        %v2677 = vand.u32 2147483647, %v2667
        %vm2678 = vcmp.eq.f32.partialorder %v2677, 8.507059e+37
        %v2679 = vand.u32 %v2667, 2147483648
        %v2680 = vor.u32 1.1754944e-38, %v2679
        %v2681 = vsel %vm2678, %v2680, %v2676
        %v2682 = vmul.f32 %v2618, %v2681
        %v2683 = vmul.f32 %v2621, %v2681
        %v2684 = vmul.f32 %v2624, %v2681
        %v2685 = vmul.f32 %v2627, %v2681
        %s2686 = ssub.f32 1.0, %s1113
        %v2687 = vstv %s2686
        %v2688 = vmul.f32 %v2687, %v1114
        %v2689 = vmul.f32 %v2687, %v1115
        %v2690 = vmul.f32 %v2687, %v1116
        %v2691 = vmul.f32 %v2687, %v1117
        %v2692 = vstv %s1113
        %v2693 = vmul.f32 %v2692, %v2682
        %v2694 = vmul.f32 %v2692, %v2683
        %v2695 = vmul.f32 %v2692, %v2684
        %v2696 = vmul.f32 %v2692, %v2685
        %v2697 = vadd.f32 %v2688, %v2693
        %v2698 = vadd.f32 %v2689, %v2694
        %v2699 = vadd.f32 %v2690, %v2695
        %v2700 = vadd.f32 %v2691, %v2696
        %v2701 = vmul.f32 %v1114, %v1114
        %v2702 = vmul.f32 %v1115, %v1115
        %v2703 = vmul.f32 %v1116, %v1116
        %v2704 = vmul.f32 %v1117, %v1117
        %v2705 = vsel %vm1129, %v2701, 0.0
        %v2706 = vsel %vm1129, %v2702, 0.0
        %v2707 = vadd.f32 %v2705, %v2706
        %v2708 = vsel %vm1129, %v2703, 0.0
        %v2709 = vadd.f32 %v2707, %v2708
        %v2710 = vsel %vm1129, %v2704, 0.0
        %v2711 = vadd.f32 %v2709, %v2710
        %v2712 = vrot.slane %v2711, 4
        %v2713 = vadd.f32 %v2711, %v2712
        %v2714 = vrot.slane %v2713, 2
        %v2715 = vadd.f32 %v2713, %v2714
        %v2716 = vrot.slane %v2715, 1
        %v2717 = vadd.f32 %v2715, %v2716
        %v2718 = vrsqrt.pop %v2717
        %v2719 = vmul.f32 %v2718, %v2717
        %v2720 = vmul.f32 %v2719, %v2718
        %v2721 = vmul.f32 0.5, %v2720
        %v2722 = vsub.f32 1.5, %v2721
        %v2723 = vmul.f32 %v2718, %v2722
        %v2724 = vmul.f32 %v2717, %v2723
        %vm2725 = vcmp.eq.f32.partialorder %v2717, inf
        %v2726 = vsel %vm2725, %v2717, %v2724
        %vm2727 = vcmp.eq.f32.partialorder %v2717, 0.0
        %v2728 = vand.u32 %v2717, 2147483648
        %v2729 = vsel %vm2727, %v2728, %v2726
        %v2730 = vmul.f32 %v2697, %v2697
        %v2731 = vmul.f32 %v2698, %v2698
        %v2732 = vmul.f32 %v2699, %v2699
        %v2733 = vmul.f32 %v2700, %v2700
        %v2734 = vsel %vm1129, %v2730, 0.0
        %v2735 = vsel %vm1129, %v2731, 0.0
        %v2736 = vadd.f32 %v2734, %v2735
        %v2737 = vsel %vm1129, %v2732, 0.0
        %v2738 = vadd.f32 %v2736, %v2737
        %v2739 = vsel %vm1129, %v2733, 0.0
        %v2740 = vadd.f32 %v2738, %v2739
        %v2741 = vrot.slane %v2740, 4
        %v2742 = vadd.f32 %v2740, %v2741
        %v2743 = vrot.slane %v2742, 2
        %v2744 = vadd.f32 %v2742, %v2743
        %v2745 = vrot.slane %v2744, 1
        %v2746 = vadd.f32 %v2744, %v2745
        %v2747 = vrsqrt.pop %v2746
        %v2748 = vmul.f32 %v2747, %v2746
        %v2749 = vmul.f32 %v2748, %v2747
        %v2750 = vmul.f32 0.5, %v2749
        %v2751 = vsub.f32 1.5, %v2750
        %v2752 = vmul.f32 %v2747, %v2751
        %v2753 = vmul.f32 %v2746, %v2752
        %vm2754 = vcmp.eq.f32.partialorder %v2746, inf
        %v2755 = vsel %vm2754, %v2746, %v2753
        %vm2756 = vcmp.eq.f32.partialorder %v2746, 0.0
        %v2757 = vand.u32 %v2746, 2147483648
        %v2758 = vsel %vm2756, %v2757, %v2755
        %v2759 = vmax.f32 %v2758, 1e-08
        %v2760 = vrcp.pop %v2759
        %v2761 = vmul.f32 %v2759, %v2760
        %v2762 = vsub.f32 1.0, %v2761
        %v2763 = vmul.f32 %v2760, %v2762
        %v2764 = vadd.f32 %v2760, %v2763
        %vm2765 = vweird.f32 %v2759
        %vm2766 = vweird.f32 %v2760
        %vm2767 = vmor %vm2765, %vm2766
        %v2768 = vsel %vm2767, %v2760, %v2764
        %v2769 = vand.u32 2147483647, %v2759
        %vm2770 = vcmp.eq.f32.partialorder %v2769, 8.507059e+37
        %v2771 = vand.u32 %v2759, 2147483648
        %v2772 = vor.u32 1.1754944e-38, %v2771
        %v2773 = vsel %vm2770, %v2772, %v2768
        %v2774 = vmul.f32 %v2729, %v2773
        %v2775 = vmul.f32 %v2697, %v2774
        %v2776 = vmul.f32 %v2698, %v2774
        %v2777 = vmul.f32 %v2699, %v2774
        %v2778 = vmul.f32 %v2700, %v2774
        %2779 = vst.msk [vmem:[%s1110] sm:$0xff] %vm1129, %v2775
        %2780 = vst.msk [vmem:[%s1110 + $0x8] sm:$0xff] %vm1129, %v2776
        %2781 = vst.msk [vmem:[%s1110 + $0x10] sm:$0xff] %vm1129, %v2777
        %2782 = vst.msk [vmem:[%s1110 + $0x18] sm:$0xff] %vm1129, %v2778
        %p2783 = scmp.lt.s32.totalorder %s79, 1
        %s2784 = scalar_select %p2783, %s79, 1
        %s2785 = smul.addr %s2784, 4
        %s2786 = smul.addr %s2785, 8
        %s2787 = scalar_lea.vmem %s67, %s2786
        // Predicated region
        $region157: #{text_conditioner_forward.1} parent=151 // pred_check
          %p2788 = pneg %p820
        $region158: #{text_conditioner_forward.1} parent=151 // pred_check_branch
          %2790 = sbr.rel (%p2788) target = $region160
        $region159: #{text_conditioner_forward.1} parent=151 // pred_region
          _
        $region160: #{text_conditioner_forward.1} parent=151 // pred_fallthru
          _
      $region152: #{text_conditioner_forward.1} parent=5 // pred_fallthru
        _
      %p2791 = scmp.le.s32.totalorder 2, %s74
      // Predicated region
      $region161: #{text_conditioner_forward.1} parent=5 // pred_check
        %p2792 = pneg %p2791
      $region162: #{text_conditioner_forward.1} parent=5 // pred_check_branch
        %2794 = sbr.rel (%p2792) target = $region164
      $region163: #{text_conditioner_forward.1} parent=5 // pred_region
        %s2795 = ssub.s32 %s74, 2
        // Predicated region
        $region165: #{text_conditioner_forward.1} parent=163 // pred_check
          %p2796 = pneg %p826
        $region166: #{text_conditioner_forward.1} parent=163 // pred_check_branch
          %2798 = sbr.rel (%p2796) target = $region168
        $region167: #{text_conditioner_forward.1} parent=163 // pred_region
          %p2799 = scmp.lt.s32.totalorder %s80, 1
          %s2800 = scalar_select %p2799, %s80, 1
          %s2801 = smul.addr %s2800, 4
          %s2802 = smul.addr %s2801, 8
          %s2803 = scalar_lea.vmem %s67, %s2802
        $region168: #{text_conditioner_forward.1} parent=163 // pred_fallthru
          _
      $region164: #{text_conditioner_forward.1} parent=5 // pred_fallthru
        _
    $region6: #{text_conditioner_forward.1} parent=1 // loop_footer
      %s78 = sadd.s32 1, %s74
    $region7: #{text_conditioner_forward.1} parent=1 // loop_footer_branch
      %73 = sbr.rel target = $region3
    $region8: #{text_conditioner_forward.1} parent=1 // loop_exit
      _
    %2804 = vsyncpa [#allocation3], 1
    %s2805 = scalar_lea.sflag [#allocation3], 1
    %2806 = vsyncpa %s2805, 1

</llo_original>
